<compile_context>
chip_gen: v6e
topology: v6e:2x2x1
jax: 0.10.0
libtpu: 0.0.40
codegen_flags: <defaults>
</compile_context>

<pallas_src>
import functools

import jax
import jax.numpy as jnp
from jax.experimental import pallas as pl
from jax.experimental.pallas import tpu as pltpu


# ----------------------------- Pallas kernels --------------------------------
def _conv_bn_relu_kernel(x_ref, w_ref, shift_ref, o_ref, *, taps, ho, wo, cout):
    """Fused KxK stride-1 'valid' conv + folded-BN shift + ReLU for one image.

    x_ref:     (1, Hi, Wi, Cin)   padded input image (resident in VMEM)
    w_ref:     (T,  Cin, Cout)    BN-scale-folded weights, one matrix per tap
    shift_ref: (1, Cout)          folded BN shift
    o_ref:     (1, Ho, Wo, Cout)  post-ReLU output (pre-ReLU is never stored)
    """
    cin = x_ref.shape[3]
    acc = jnp.zeros((ho * wo, cout), jnp.float32)
    for t, (ky, kx) in enumerate(taps):
        xt = x_ref[0, ky:ky + ho, kx:kx + wo, :].reshape(ho * wo, cin)
        acc = acc + jnp.dot(xt, w_ref[t, :, :], preferred_element_type=jnp.float32)
    y = jnp.maximum(acc + shift_ref[...], 0.0)
    o_ref[0, :, :, :] = y.reshape(ho, wo, cout).astype(o_ref.dtype)


def _deconv_bn_relu_kernel(x_ref, w_ref, shift_ref, pre_ref, post_ref, *, k, cout):
    """Fused ConvTranspose2d(kernel=stride=k) + folded BN (+ ReLU) for one image.

    x_ref:     (1, H, W, Cin)
    w_ref:     (k, Cin, k*Cout)   per output-row-offset `a`; columns = (b, cout)
    shift_ref: (1, k*Cout)
    pre_ref / post_ref: (1, H, k, W, k*Cout)  (row-major == (1, H*k, W*k, Cout))
    """
    _, h, w, cin = x_ref.shape
    x2d = x_ref[0, :, :, :].reshape(h * w, cin)
    for a in range(k):
        y = jnp.dot(x2d, w_ref[a, :, :],
                    preferred_element_type=jnp.float32) + shift_ref[...]
        pre_ref[0, :, a, :, :] = y.reshape(h, w, k * cout).astype(pre_ref.dtype)
        post_ref[0, :, a, :, :] = jnp.maximum(y, 0.0).reshape(
            h, w, k * cout).astype(post_ref.dtype)


# ----------------------------- pallas_call wrappers --------------------------
def _conv_pallas(x_valid, w_taps, shift, ho, wo):
    """Generic KHxKW stride-1 'valid' conv + BN + ReLU over NHWC input."""
    n, hi, wi, cin = x_valid.shape
    t, cin2, cout = w_taps.shape
    kh, kw = hi - ho + 1, wi - wo + 1
    assert cin == cin2 and t == kh * kw
    taps = tuple((ky, kx) for ky in range(kh) for kx in range(kw))
    kernel = functools.partial(_conv_bn_relu_kernel,
                               taps=taps, ho=ho, wo=wo, cout=cout)
    return pl.pallas_call(
        kernel,
        out_shape=jax.ShapeDtypeStruct((n, ho, wo, cout), jnp.float32),
        grid=(n,),
        in_specs=[
            pl.BlockSpec((1, hi, wi, cin), lambda b: (b, 0, 0, 0)),  # image
            pl.BlockSpec((t, cin, cout), lambda b: (0, 0, 0)),       # weights (resident)
            pl.BlockSpec((1, cout), lambda b: (0, 0)),               # BN shift
        ],
        out_specs=pl.BlockSpec((1, ho, wo, cout), lambda b: (b, 0, 0, 0)),
        compiler_params=pltpu.CompilerParams(dimension_semantics=("parallel",)),
    )(x_valid, w_taps, shift.reshape(1, cout))


def conv3x3_bn_relu(x_nhwc, w, scale, shift, stride):
    """Conv2d(3x3, pad=1, bias=False) + BN + ReLU.  w: (3, 3, Cin, Cout) HWIO."""
    n, h, wdim, cin = x_nhwc.shape
    cout = w.shape[-1]
    ho = (h + 2 - 3) // stride + 1
    wo = (wdim + 2 - 3) // stride + 1
    wf = w * scale[None, None, None, :]                 # fold BN scale into W
    xp = jnp.pad(x_nhwc, ((0, 0), (1, 1), (1, 1), (0, 0)))
    if stride == 1:
        w_taps = wf.reshape(9, cin, cout)               # taps ordered (ky, kx)
        return _conv_pallas(xp, w_taps, shift, ho, wo)
    elif stride == 2:
        hp, wp = h + 2, wdim + 2
        assert hp % 2 == 0 and wp % 2 == 0, "stride-2 path expects even H, W"
        # space-to-depth by 2: xs[n,p,q,(a,b,c)] = xp[n, 2p+a, 2q+b, c]
        xs = xp.reshape(n, hp // 2, 2, wp // 2, 2, cin)
        xs = jnp.transpose(xs, (0, 1, 3, 2, 4, 5)).reshape(n, hp // 2, wp // 2, 4 * cin)
        # 3x3 stride-2 conv == 2x2 stride-1 conv over s2d channels (a, b, c)
        w2 = jnp.zeros((2, 2, 2, 2, cin, cout), jnp.float32)   # (dp,dq,a,b,ci,co)
        for ky in range(3):
            for kx in range(3):
                w2 = w2.at[ky // 2, kx // 2, ky % 2, kx % 2].set(wf[ky, kx])
        w_taps = w2.reshape(4, 4 * cin, cout)
        return _conv_pallas(xs, w_taps, shift, ho, wo)
    else:
        raise NotImplementedError(
            "TODO(synk): general LAYER_STRIDES other than {1, 2}")


def deconv_bn_relu(x_nhwc, w_t, scale, shift, k):
    """ConvTranspose2d(kernel=stride=k, bias=False) + BN (+ ReLU).
    w_t: PyTorch layout (Cin, Cout, k, k).  Returns (pre_relu, post_relu) NHWC."""
    n, h, w, cin = x_nhwc.shape
    cout = w_t.shape[1]
    wf = w_t * scale[None, :, None, None]                        # fold BN scale
    wk = jnp.transpose(wf, (2, 0, 3, 1)).reshape(k, cin, k * cout)  # (a, ci, (b,co))
    shift_k = jnp.tile(shift, k).reshape(1, k * cout)            # column (b, co)
    kernel = functools.partial(_deconv_bn_relu_kernel, k=k, cout=cout)
    out_sds = jax.ShapeDtypeStruct((n, h, k, w, k * cout), jnp.float32)
    pre, post = pl.pallas_call(
        kernel,
        out_shape=(out_sds, out_sds),
        grid=(n,),
        in_specs=[
            pl.BlockSpec((1, h, w, cin), lambda b: (b, 0, 0, 0)),
            pl.BlockSpec((k, cin, k * cout), lambda b: (0, 0, 0)),
            pl.BlockSpec((1, k * cout), lambda b: (0, 0)),
        ],
        out_specs=(pl.BlockSpec((1, h, k, w, k * cout), lambda b: (b, 0, 0, 0, 0)),
                   pl.BlockSpec((1, h, k, w, k * cout), lambda b: (b, 0, 0, 0, 0))),
        compiler_params=pltpu.CompilerParams(dimension_semantics=("parallel",)),
    )(x_nhwc, wk, shift_k)
    # (N, H, k, W, k*Cout) is row-major identical to (N, H*k, W*k, Cout) -> free.
    return (pre.reshape(n, h * k, w * k, cout),
            post.reshape(n, h * k, w * k, cout))


# ----------------------------- model setup -----------------------------------
MODEL_CFG = dict(
    LAYER_NUMS=[1, 1],
    LAYER_STRIDES=[1, 2],
    NUM_FILTERS=[8, 16],
    UPSAMPLE_STRIDES=[1, 2],
    NUM_UPSAMPLE_FILTERS=[8, 8],
)


def _bn_fold(key, c, eps=1e-3):
    k1, k2, k3, k4 = jax.random.split(key, 4)
    gamma = 1.0 + 0.1 * jax.random.normal(k1, (c,), jnp.float32)
    beta = 0.1 * jax.random.normal(k2, (c,), jnp.float32)
    mean = 0.1 * jax.random.normal(k3, (c,), jnp.float32)
    var = 1.0 + 0.1 * jax.random.uniform(k4, (c,), jnp.float32)
    scale = gamma / jnp.sqrt(var + eps)
    shift = beta - mean * scale
    return scale, shift


def init_params(key, input_channels, cfg):
    layer_nums = cfg['LAYER_NUMS']
    layer_strides = cfg['LAYER_STRIDES']
    num_filters = cfg['NUM_FILTERS']
    up_strides = cfg['UPSAMPLE_STRIDES']
    num_up_filters = cfg['NUM_UPSAMPLE_FILTERS']
    c_in_list = [input_channels, *num_filters[:-1]]

    blocks, deblocks = [], []
    for idx in range(len(layer_nums)):
        layers = []
        cin = c_in_list[idx]
        cout = num_filters[idx]
        strides = [layer_strides[idx]] + [1] * layer_nums[idx]
        cins = [cin] + [cout] * layer_nums[idx]
        for s, ci in zip(strides, cins):
            key, kw, kb = jax.random.split(key, 3)
            w = 0.1 * jax.random.normal(kw, (3, 3, ci, cout), jnp.float32)
            scale, shift = _bn_fold(kb, cout)
            layers.append(dict(w=w, scale=scale, shift=shift, stride=s))
        blocks.append(layers)

        k = up_strides[idx]
        cu = num_up_filters[idx]
        key, kw, kb = jax.random.split(key, 3)
        wd = 0.1 * jax.random.normal(kw, (cout, cu, k, k), jnp.float32)
        scale, shift = _bn_fold(kb, cu)
        deblocks.append(dict(w=wd, scale=scale, shift=shift, k=k))
    return dict(blocks=blocks, deblocks=deblocks)


def forward(params, data_dict):
    x = data_dict['spatial_features']                 # NCHW, like PyTorch
    x = jnp.transpose(x, (0, 2, 3, 1))                # -> NHWC for the kernels
    ups, intermediates = [], []
    for i, blk in enumerate(params['blocks']):
        for layer in blk:
            x = conv3x3_bn_relu(x, layer['w'], layer['scale'],
                                layer['shift'], layer['stride'])
        db = params['deblocks'][i]
        pre, post = deconv_bn_relu(x, db['w'], db['scale'], db['shift'], db['k'])
        intermediates.append(pre)                     # j == 1 (BatchNorm output)
        ups.append(post)

    out = jnp.concatenate(ups, axis=-1) if len(ups) > 1 else ups[0]
    data_dict['spatial_features_2d'] = jnp.transpose(out, (0, 3, 1, 2))
    if intermediates:
        inter = jnp.concatenate(intermediates, axis=-1)
        data_dict['spatial_features_2d_pre-relu'] = jnp.transpose(inter, (0, 3, 1, 2))
    return data_dict


# ----------------------------- main ------------------------------------------
if __name__ == "__main__":
    key = jax.random.PRNGKey(0)
    kx, kp = jax.random.split(key)
    x = jax.random.normal(kx, (2, 4, 16, 16), jnp.float32)   # NCHW input
    params = init_params(kp, input_channels=4, cfg=MODEL_CFG)

    out = forward(params, {'spatial_features': x})
    sf2d = jax.block_until_ready(out['spatial_features_2d'])
    pre = jax.block_until_ready(out['spatial_features_2d_pre-relu'])

    assert sf2d.shape == (2, 16, 16, 16), sf2d.shape      # 8 + 8 upsample filters
    assert pre.shape == (2, 16, 16, 16), pre.shape
    assert bool(jnp.all(jnp.isfinite(sf2d))) and bool(jnp.all(jnp.isfinite(pre)))

    # ---- spot-check fused kernels against plain-XLA references --------------
    def ref_conv(xh, w, scale, shift, stride):
        y = jax.lax.conv_general_dilated(
            xh, w, window_strides=(stride, stride), padding=((1, 1), (1, 1)),
            dimension_numbers=('NHWC', 'HWIO', 'NHWC'),
            precision=jax.lax.Precision.HIGHEST)
        return jnp.maximum(y * scale + shift, 0.0)

    kc1, kc2 = jax.random.split(jax.random.PRNGKey(1))
    l10 = params['blocks'][0][0]                       # stride-1 conv, Cin=4
    xt1 = jax.random.normal(kc1, (2, 16, 16, 4), jnp.float32)
    got = conv3x3_bn_relu(xt1, l10['w'], l10['scale'], l10['shift'], l10['stride'])
    want = ref_conv(xt1, l10['w'], l10['scale'], l10['shift'], l10['stride'])
    assert float(jnp.max(jnp.abs(got - want))) < 1e-3

    l20 = params['blocks'][1][0]                       # stride-2 conv, Cin=8
    xt2 = jax.random.normal(kc2, (2, 16, 16, 8), jnp.float32)
    got = conv3x3_bn_relu(xt2, l20['w'], l20['scale'], l20['shift'], l20['stride'])
    want = ref_conv(xt2, l20['w'], l20['scale'], l20['shift'], l20['stride'])
    assert float(jnp.max(jnp.abs(got - want))) < 1e-3

    db2 = params['deblocks'][1]                        # k=2 deconv, 16 -> 8
    xt3 = jax.random.normal(jax.random.PRNGKey(2), (2, 8, 8, 16), jnp.float32)
    pre_k, post_k = deconv_bn_relu(xt3, db2['w'], db2['scale'], db2['shift'], db2['k'])
    y = jnp.einsum('nhwc,cdab->nhawbd', xt3, db2['w'])
    y = y.reshape(2, 16, 16, 8) * db2['scale'] + db2['shift']
    assert float(jnp.max(jnp.abs(pre_k - y))) < 1e-3
    assert float(jnp.max(jnp.abs(post_k - jnp.maximum(y, 0.0)))) < 1e-3

    print("KERNEL_OK")
</pallas_src>

<mosaic_0001>
module attributes {stable_mosaic.version = 11 : i64} {
  func.func @_conv_bn_relu_kernel(%arg0: i32, %arg1: memref<1x18x18x4xf32, #tpu.memory_space<vmem>>, %arg2: memref<9x4x8xf32, #tpu.memory_space<vmem>>, %arg3: memref<1x8xf32, #tpu.memory_space<vmem>>, %arg4: memref<1x16x16x8xf32, #tpu.memory_space<vmem>>) attributes {dimension_semantics = [#tpu.dimension_semantics<parallel>], iteration_bounds = array<i64: 2>, scalar_prefetch = 0 : i64, scratch_operands = 0 : i64, tpu.core_type = #tpu.core_type<tc>, window_params = [{transform_indices = @transform_0, window_bounds = array<i64: 1, 18, 18, 4>}, {pipeline_mode = #tpu.pipeline_mode<synchronous>, transform_indices = @transform_1, window_bounds = array<i64: 9, 4, 8>}, {pipeline_mode = #tpu.pipeline_mode<synchronous>, transform_indices = @transform_2, window_bounds = array<i64: 1, 8>}, {transform_indices = @transform_3, window_bounds = array<i64: 1, 16, 16, 8>}]} {
    %cst = arith.constant 0.000000e+00 : f32
    %0 = vector.broadcast %cst : f32 to vector<256x8xf32>
    %c0 = arith.constant 0 : index
    %c0_0 = arith.constant 0 : index
    %c0_1 = arith.constant 0 : index
    %c0_2 = arith.constant 0 : index
    %1 = vector.load %arg1[%c0, %c0_0, %c0_1, %c0_2] : memref<1x18x18x4xf32, #tpu.memory_space<vmem>>, vector<1x16x16x4xf32>
    %2 = vector.shape_cast %1 : vector<1x16x16x4xf32> to vector<16x16x4xf32>
    %3 = vector.shape_cast %2 : vector<16x16x4xf32> to vector<256x4xf32>
    %c0_3 = arith.constant 0 : index
    %c0_4 = arith.constant 0 : index
    %c0_5 = arith.constant 0 : index
    %4 = vector.load %arg2[%c0_3, %c0_4, %c0_5] : memref<9x4x8xf32, #tpu.memory_space<vmem>>, vector<1x4x8xf32>
    %5 = vector.shape_cast %4 : vector<1x4x8xf32> to vector<4x8xf32>
    %cst_6 = arith.constant dense<0.000000e+00> : vector<256x8xf32>
    %6 = tpu.matmul %3, %5, %cst_6 {dimension_numbers = #tpu.dot_dimension_numbers<[1], [0], [0], [1], [0, 0, 1, 1], [], []>} : vector<256x4xf32>, vector<4x8xf32>, vector<256x8xf32> -> vector<256x8xf32>
    %7 = arith.addf %0, %6 : vector<256x8xf32>
    %c0_7 = arith.constant 0 : index
    %c0_8 = arith.constant 0 : index
    %c1 = arith.constant 1 : index
    %c0_9 = arith.constant 0 : index
    %8 = vector.load %arg1[%c0_7, %c0_8, %c1, %c0_9] : memref<1x18x18x4xf32, #tpu.memory_space<vmem>>, vector<1x16x16x4xf32>
    %9 = vector.shape_cast %8 : vector<1x16x16x4xf32> to vector<16x16x4xf32>
    %10 = vector.shape_cast %9 : vector<16x16x4xf32> to vector<256x4xf32>
    %c1_10 = arith.constant 1 : index
    %c0_11 = arith.constant 0 : index
    %c0_12 = arith.constant 0 : index
    %11 = vector.load %arg2[%c1_10, %c0_11, %c0_12] : memref<9x4x8xf32, #tpu.memory_space<vmem>>, vector<1x4x8xf32>
    %12 = vector.shape_cast %11 : vector<1x4x8xf32> to vector<4x8xf32>
    %cst_13 = arith.constant dense<0.000000e+00> : vector<256x8xf32>
    %13 = tpu.matmul %10, %12, %cst_13 {dimension_numbers = #tpu.dot_dimension_numbers<[1], [0], [0], [1], [0, 0, 1, 1], [], []>} : vector<256x4xf32>, vector<4x8xf32>, vector<256x8xf32> -> vector<256x8xf32>
    %14 = arith.addf %7, %13 : vector<256x8xf32>
    %c0_14 = arith.constant 0 : index
    %c0_15 = arith.constant 0 : index
    %c2 = arith.constant 2 : index
    %c0_16 = arith.constant 0 : index
    %15 = vector.load %arg1[%c0_14, %c0_15, %c2, %c0_16] : memref<1x18x18x4xf32, #tpu.memory_space<vmem>>, vector<1x16x16x4xf32>
    %16 = vector.shape_cast %15 : vector<1x16x16x4xf32> to vector<16x16x4xf32>
    %17 = vector.shape_cast %16 : vector<16x16x4xf32> to vector<256x4xf32>
    %c2_17 = arith.constant 2 : index
    %c0_18 = arith.constant 0 : index
    %c0_19 = arith.constant 0 : index
    %18 = vector.load %arg2[%c2_17, %c0_18, %c0_19] : memref<9x4x8xf32, #tpu.memory_space<vmem>>, vector<1x4x8xf32>
    %19 = vector.shape_cast %18 : vector<1x4x8xf32> to vector<4x8xf32>
    %cst_20 = arith.constant dense<0.000000e+00> : vector<256x8xf32>
    %20 = tpu.matmul %17, %19, %cst_20 {dimension_numbers = #tpu.dot_dimension_numbers<[1], [0], [0], [1], [0, 0, 1, 1], [], []>} : vector<256x4xf32>, vector<4x8xf32>, vector<256x8xf32> -> vector<256x8xf32>
    %21 = arith.addf %14, %20 : vector<256x8xf32>
    %c0_21 = arith.constant 0 : index
    %c1_22 = arith.constant 1 : index
    %c0_23 = arith.constant 0 : index
    %c0_24 = arith.constant 0 : index
    %22 = vector.load %arg1[%c0_21, %c1_22, %c0_23, %c0_24] : memref<1x18x18x4xf32, #tpu.memory_space<vmem>>, vector<1x16x16x4xf32>
    %23 = vector.shape_cast %22 : vector<1x16x16x4xf32> to vector<16x16x4xf32>
    %24 = vector.shape_cast %23 : vector<16x16x4xf32> to vector<256x4xf32>
    %c3 = arith.constant 3 : index
    %c0_25 = arith.constant 0 : index
    %c0_26 = arith.constant 0 : index
    %25 = vector.load %arg2[%c3, %c0_25, %c0_26] : memref<9x4x8xf32, #tpu.memory_space<vmem>>, vector<1x4x8xf32>
    %26 = vector.shape_cast %25 : vector<1x4x8xf32> to vector<4x8xf32>
    %cst_27 = arith.constant dense<0.000000e+00> : vector<256x8xf32>
    %27 = tpu.matmul %24, %26, %cst_27 {dimension_numbers = #tpu.dot_dimension_numbers<[1], [0], [0], [1], [0, 0, 1, 1], [], []>} : vector<256x4xf32>, vector<4x8xf32>, vector<256x8xf32> -> vector<256x8xf32>
    %28 = arith.addf %21, %27 : vector<256x8xf32>
    %c0_28 = arith.constant 0 : index
    %c1_29 = arith.constant 1 : index
    %c1_30 = arith.constant 1 : index
    %c0_31 = arith.constant 0 : index
    %29 = vector.load %arg1[%c0_28, %c1_29, %c1_30, %c0_31] : memref<1x18x18x4xf32, #tpu.memory_space<vmem>>, vector<1x16x16x4xf32>
    %30 = vector.shape_cast %29 : vector<1x16x16x4xf32> to vector<16x16x4xf32>
    %31 = vector.shape_cast %30 : vector<16x16x4xf32> to vector<256x4xf32>
    %c4 = arith.constant 4 : index
    %c0_32 = arith.constant 0 : index
    %c0_33 = arith.constant 0 : index
    %32 = vector.load %arg2[%c4, %c0_32, %c0_33] : memref<9x4x8xf32, #tpu.memory_space<vmem>>, vector<1x4x8xf32>
    %33 = vector.shape_cast %32 : vector<1x4x8xf32> to vector<4x8xf32>
    %cst_34 = arith.constant dense<0.000000e+00> : vector<256x8xf32>
    %34 = tpu.matmul %31, %33, %cst_34 {dimension_numbers = #tpu.dot_dimension_numbers<[1], [0], [0], [1], [0, 0, 1, 1], [], []>} : vector<256x4xf32>, vector<4x8xf32>, vector<256x8xf32> -> vector<256x8xf32>
    %35 = arith.addf %28, %34 : vector<256x8xf32>
    %c0_35 = arith.constant 0 : index
    %c1_36 = arith.constant 1 : index
    %c2_37 = arith.constant 2 : index
    %c0_38 = arith.constant 0 : index
    %36 = vector.load %arg1[%c0_35, %c1_36, %c2_37, %c0_38] : memref<1x18x18x4xf32, #tpu.memory_space<vmem>>, vector<1x16x16x4xf32>
    %37 = vector.shape_cast %36 : vector<1x16x16x4xf32> to vector<16x16x4xf32>
    %38 = vector.shape_cast %37 : vector<16x16x4xf32> to vector<256x4xf32>
    %c5 = arith.constant 5 : index
    %c0_39 = arith.constant 0 : index
    %c0_40 = arith.constant 0 : index
    %39 = vector.load %arg2[%c5, %c0_39, %c0_40] : memref<9x4x8xf32, #tpu.memory_space<vmem>>, vector<1x4x8xf32>
    %40 = vector.shape_cast %39 : vector<1x4x8xf32> to vector<4x8xf32>
    %cst_41 = arith.constant dense<0.000000e+00> : vector<256x8xf32>
    %41 = tpu.matmul %38, %40, %cst_41 {dimension_numbers = #tpu.dot_dimension_numbers<[1], [0], [0], [1], [0, 0, 1, 1], [], []>} : vector<256x4xf32>, vector<4x8xf32>, vector<256x8xf32> -> vector<256x8xf32>
    %42 = arith.addf %35, %41 : vector<256x8xf32>
    %c0_42 = arith.constant 0 : index
    %c2_43 = arith.constant 2 : index
    %c0_44 = arith.constant 0 : index
    %c0_45 = arith.constant 0 : index
    %43 = vector.load %arg1[%c0_42, %c2_43, %c0_44, %c0_45] : memref<1x18x18x4xf32, #tpu.memory_space<vmem>>, vector<1x16x16x4xf32>
    %44 = vector.shape_cast %43 : vector<1x16x16x4xf32> to vector<16x16x4xf32>
    %45 = vector.shape_cast %44 : vector<16x16x4xf32> to vector<256x4xf32>
    %c6 = arith.constant 6 : index
    %c0_46 = arith.constant 0 : index
    %c0_47 = arith.constant 0 : index
    %46 = vector.load %arg2[%c6, %c0_46, %c0_47] : memref<9x4x8xf32, #tpu.memory_space<vmem>>, vector<1x4x8xf32>
    %47 = vector.shape_cast %46 : vector<1x4x8xf32> to vector<4x8xf32>
    %cst_48 = arith.constant dense<0.000000e+00> : vector<256x8xf32>
    %48 = tpu.matmul %45, %47, %cst_48 {dimension_numbers = #tpu.dot_dimension_numbers<[1], [0], [0], [1], [0, 0, 1, 1], [], []>} : vector<256x4xf32>, vector<4x8xf32>, vector<256x8xf32> -> vector<256x8xf32>
    %49 = arith.addf %42, %48 : vector<256x8xf32>
    %c0_49 = arith.constant 0 : index
    %c2_50 = arith.constant 2 : index
    %c1_51 = arith.constant 1 : index
    %c0_52 = arith.constant 0 : index
    %50 = vector.load %arg1[%c0_49, %c2_50, %c1_51, %c0_52] : memref<1x18x18x4xf32, #tpu.memory_space<vmem>>, vector<1x16x16x4xf32>
    %51 = vector.shape_cast %50 : vector<1x16x16x4xf32> to vector<16x16x4xf32>
    %52 = vector.shape_cast %51 : vector<16x16x4xf32> to vector<256x4xf32>
    %c7 = arith.constant 7 : index
    %c0_53 = arith.constant 0 : index
    %c0_54 = arith.constant 0 : index
    %53 = vector.load %arg2[%c7, %c0_53, %c0_54] : memref<9x4x8xf32, #tpu.memory_space<vmem>>, vector<1x4x8xf32>
    %54 = vector.shape_cast %53 : vector<1x4x8xf32> to vector<4x8xf32>
    %cst_55 = arith.constant dense<0.000000e+00> : vector<256x8xf32>
    %55 = tpu.matmul %52, %54, %cst_55 {dimension_numbers = #tpu.dot_dimension_numbers<[1], [0], [0], [1], [0, 0, 1, 1], [], []>} : vector<256x4xf32>, vector<4x8xf32>, vector<256x8xf32> -> vector<256x8xf32>
    %56 = arith.addf %49, %55 : vector<256x8xf32>
    %c0_56 = arith.constant 0 : index
    %c2_57 = arith.constant 2 : index
    %c2_58 = arith.constant 2 : index
    %c0_59 = arith.constant 0 : index
    %57 = vector.load %arg1[%c0_56, %c2_57, %c2_58, %c0_59] : memref<1x18x18x4xf32, #tpu.memory_space<vmem>>, vector<1x16x16x4xf32>
    %58 = vector.shape_cast %57 : vector<1x16x16x4xf32> to vector<16x16x4xf32>
    %59 = vector.shape_cast %58 : vector<16x16x4xf32> to vector<256x4xf32>
    %c8 = arith.constant 8 : index
    %c0_60 = arith.constant 0 : index
    %c0_61 = arith.constant 0 : index
    %60 = vector.load %arg2[%c8, %c0_60, %c0_61] : memref<9x4x8xf32, #tpu.memory_space<vmem>>, vector<1x4x8xf32>
    %61 = vector.shape_cast %60 : vector<1x4x8xf32> to vector<4x8xf32>
    %cst_62 = arith.constant dense<0.000000e+00> : vector<256x8xf32>
    %62 = tpu.matmul %59, %61, %cst_62 {dimension_numbers = #tpu.dot_dimension_numbers<[1], [0], [0], [1], [0, 0, 1, 1], [], []>} : vector<256x4xf32>, vector<4x8xf32>, vector<256x8xf32> -> vector<256x8xf32>
    %63 = arith.addf %56, %62 : vector<256x8xf32>
    %c0_63 = arith.constant 0 : index
    %c0_64 = arith.constant 0 : index
    %64 = vector.load %arg3[%c0_63, %c0_64] : memref<1x8xf32, #tpu.memory_space<vmem>>, vector<1x8xf32>
    %65 = vector.broadcast %64 : vector<1x8xf32> to vector<256x8xf32>
    %66 = arith.addf %63, %65 : vector<256x8xf32>
    %cst_65 = arith.constant 0.000000e+00 : f32
    %67 = vector.broadcast %cst_65 : f32 to vector<256x8xf32>
    %68 = arith.maximumf %66, %67 : vector<256x8xf32>
    %69 = vector.shape_cast %68 : vector<256x8xf32> to vector<16x16x8xf32>
    %c0_66 = arith.constant 0 : index
    %c0_67 = arith.constant 0 : index
    %c0_68 = arith.constant 0 : index
    %c0_69 = arith.constant 0 : index
    %70 = vector.load %arg4[%c0_66, %c0_67, %c0_68, %c0_69] : memref<1x16x16x8xf32, #tpu.memory_space<vmem>>, vector<1x16x16x8xf32>
    %71 = vector.shape_cast %70 : vector<1x16x16x8xf32> to vector<16x16x8xf32>
    %72 = vector.shape_cast %69 : vector<16x16x8xf32> to vector<1x16x16x8xf32>
    tpu.vector_store %arg4[%c0_66, %c0_67, %c0_68, %c0_69], %72 {strides = array<i32>} : memref<1x16x16x8xf32, #tpu.memory_space<vmem>>, vector<1x16x16x8xf32>,
    return
  }
  func.func @transform_0(%arg0: i32) -> (i32, i32, i32, i32) {
    %c0_i32 = arith.constant 0 : i32
    %c0_i32_0 = arith.constant 0 : i32
    %c0_i32_1 = arith.constant 0 : i32
    %c0_i32_2 = arith.constant 0 : i32
    return %arg0, %c0_i32, %c0_i32_0, %c0_i32_1 : i32, i32, i32, i32
  }
  func.func @transform_1(%arg0: i32) -> (i32, i32, i32) {
    %c0_i32 = arith.constant 0 : i32
    %c0_i32_0 = arith.constant 0 : i32
    %c0_i32_1 = arith.constant 0 : i32
    %c0_i32_2 = arith.constant 0 : i32
    return %c0_i32, %c0_i32_0, %c0_i32_1 : i32, i32, i32
  }
  func.func @transform_2(%arg0: i32) -> (i32, i32) {
    %c0_i32 = arith.constant 0 : i32
    %c0_i32_0 = arith.constant 0 : i32
    %c0_i32_1 = arith.constant 0 : i32
    return %c0_i32, %c0_i32_0 : i32, i32
  }
  func.func @transform_3(%arg0: i32) -> (i32, i32, i32, i32) {
    %c0_i32 = arith.constant 0 : i32
    %c0_i32_0 = arith.constant 0 : i32
    %c0_i32_1 = arith.constant 0 : i32
    %c0_i32_2 = arith.constant 0 : i32
    return %arg0, %c0_i32, %c0_i32_0, %c0_i32_1 : i32, i32, i32, i32
  }
}

</mosaic_0001>

<llo_original>
// kernel: tpu_custom_call.1
$region0: #{tpu_custom_call.1}
  #allocation0 [shape = 'u32[]', space=smem, size = 0x4, offset = 0x4, fixed_abs, tag = 'smem constant byte address 0x4 - core index']
  #allocation1 [shape = 'u32[144,128]{1,0:T(1,128)}', space=vmem, size = 0x12000, scoped, tag = 'internal scratch']
  %s0 = inlined_call_operand.vmem [shape: f32[2,18,18,4], index: 0, kind: input, shape index: {}]
  %s1 = inlined_call_operand.vmem [shape: f32[9,4,8], index: 1, kind: input, shape index: {}]
  %s2 = inlined_call_operand.vmem [shape: f32[1,8], index: 2, kind: input, shape index: {}]
  %s3 = inlined_call_operand.vmem [shape: f32[2,16,16,8], index: 3, kind: output, shape index: {}]
  %s4 = sld [smem:[#allocation0]]
  $region45: #{tpu_custom_call.1} parent=0
    _
  %s6 = ssub.s32 1, %s4
  %s7 = scalar_select 0, %s6, %s4
  loop: start=0, step=1, limit=4
  $region2: #{tpu_custom_call.1} parent=0 // loop_pre_header
    _
  $region3: #{tpu_custom_call.1} parent=0 // loop_header
    %s9 = sphi 0, %s13
    %p10 = scmp.ge.s32.totalorder %s9, 4
    %s19 = sphi 0, %s21
    %s22 = sphi 0, %s19
    %s23 = sphi 0, %s22
    %s39 = sphi 0, %s23
    %s43 = sphi 0, %s43
    %s45 = sphi 0, %s43
    %s46 = sphi 0, %s45
    %s60 = sphi 0, %s46
    %s64 = sphi 0, %s64
    %s66 = sphi 0, %s64
    %s67 = sphi 0, %s66
    %s81 = sphi 0, %s67
    %s87 = sphi 0, %s89
    %s90 = sphi 0, %s87
    %s91 = sphi 0, %s90
    %s107 = sphi 0, %s91
  $region4: #{tpu_custom_call.1} parent=0 // loop_header_branch
    %12 = sbr.rel (%p10) target = $region8
  $region5: #{tpu_custom_call.1} parent=0 // loop_body
    %s14 = ssub.s32 %s9, 1
    %s15 = ssub.s32 %s9, 2
    %s16 = sadd.s32 %s9, 1
    %s17 = ssub.s32 %s9, %s16
    %p18 = scmp.eq.s32.totalorder %s17, 0
    %s20 = sadd.s32 %s19, 1
    %s21 = scalar_select %p18, %s19, %s20
    %p24 = pneg %p18
    %p25 = scmp.eq.s32.totalorder %s9, 1
    %p26 = por %p24, %p25
    %p27 = scmp.ne.s32.totalorder %s19, %s22
    %p28 = scmp.eq.s32.totalorder %s9, 0
    %p29 = por %p27, %p28
    %p30 = scmp.ne.s32.totalorder %s19, %s22
    %p31 = scmp.eq.s32.totalorder %s14, 1
    %p32 = por %p30, %p31
    %p33 = scmp.ne.s32.totalorder %s22, %s23
    %p34 = scmp.eq.s32.totalorder %s14, 0
    %p35 = por %p33, %p34
    %p36 = scmp.ne.s32.totalorder %s22, %s23
    %p37 = scmp.eq.s32.totalorder %s15, 1
    %p38 = por %p36, %p37
    %p40 = scmp.ne.s32.totalorder %s23, %s39
    %p41 = scmp.eq.s32.totalorder %s15, 0
    %p42 = por %p40, %p41
    %s44 = sadd.s32 %s43, 1
    %p47 = scmp.eq.s32.totalorder %s9, 1
    %p48 = scmp.ne.s32.totalorder %s43, %s45
    %p49 = scmp.eq.s32.totalorder %s9, 0
    %p50 = por %p48, %p49
    %p51 = scmp.ne.s32.totalorder %s43, %s45
    %p52 = scmp.eq.s32.totalorder %s14, 1
    %p53 = por %p51, %p52
    %p54 = scmp.ne.s32.totalorder %s45, %s46
    %p55 = scmp.eq.s32.totalorder %s14, 0
    %p56 = por %p54, %p55
    %p57 = scmp.ne.s32.totalorder %s45, %s46
    %p58 = scmp.eq.s32.totalorder %s15, 1
    %p59 = por %p57, %p58
    %p61 = scmp.ne.s32.totalorder %s46, %s60
    %p62 = scmp.eq.s32.totalorder %s15, 0
    %p63 = por %p61, %p62
    %s65 = sadd.s32 %s64, 1
    %p68 = scmp.eq.s32.totalorder %s9, 1
    %p69 = scmp.ne.s32.totalorder %s64, %s66
    %p70 = scmp.eq.s32.totalorder %s9, 0
    %p71 = por %p69, %p70
    %p72 = scmp.ne.s32.totalorder %s64, %s66
    %p73 = scmp.eq.s32.totalorder %s14, 1
    %p74 = por %p72, %p73
    %p75 = scmp.ne.s32.totalorder %s66, %s67
    %p76 = scmp.eq.s32.totalorder %s14, 0
    %p77 = por %p75, %p76
    %p78 = scmp.ne.s32.totalorder %s66, %s67
    %p79 = scmp.eq.s32.totalorder %s15, 1
    %p80 = por %p78, %p79
    %p82 = scmp.ne.s32.totalorder %s67, %s81
    %p83 = scmp.eq.s32.totalorder %s15, 0
    %p84 = por %p82, %p83
    %s85 = ssub.s32 %s9, %s16
    %p86 = scmp.eq.s32.totalorder %s85, 0
    %s88 = sadd.s32 %s87, 1
    %s89 = scalar_select %p86, %s87, %s88
    %p92 = pneg %p86
    %p93 = scmp.eq.s32.totalorder %s9, 1
    %p94 = por %p92, %p93
    %p95 = scmp.ne.s32.totalorder %s87, %s90
    %p96 = scmp.eq.s32.totalorder %s9, 0
    %p97 = por %p95, %p96
    %p98 = scmp.ne.s32.totalorder %s87, %s90
    %p99 = scmp.eq.s32.totalorder %s14, 1
    %p100 = por %p98, %p99
    %p101 = scmp.ne.s32.totalorder %s90, %s91
    %p102 = scmp.eq.s32.totalorder %s14, 0
    %p103 = por %p101, %p102
    %p104 = scmp.ne.s32.totalorder %s90, %s91
    %p105 = scmp.eq.s32.totalorder %s15, 1
    %p106 = por %p104, %p105
    %p108 = scmp.ne.s32.totalorder %s91, %s107
    %p109 = scmp.eq.s32.totalorder %s15, 0
    %p110 = por %p108, %p109
    %p111 = scmp.le.s32.totalorder 1, %s9
    %p112 = scmp.lt.s32.totalorder %s9, 3
    %p113 = pnand %p111, %p112
    %p114 = pneg %p113
    // Predicated region
    $region9: #{tpu_custom_call.1} parent=5 // pred_check
      _
    $region10: #{tpu_custom_call.1} parent=5 // pred_check_branch
      %116 = sbr.rel (%p113) target = $region12
    $region11: #{tpu_custom_call.1} parent=5 // pred_region
      %s117 = ssub.s32 %s9, 1
      // Predicated region
      $region13: #{tpu_custom_call.1} parent=11 // pred_check
        %p118 = pneg %p56
      $region14: #{tpu_custom_call.1} parent=11 // pred_check_branch
        %120 = sbr.rel (%p118) target = $region16
      $region15: #{tpu_custom_call.1} parent=11 // pred_region
        _
      $region16: #{tpu_custom_call.1} parent=11 // pred_fallthru
        _
      // Predicated region
      $region17: #{tpu_custom_call.1} parent=11 // pred_check
        %p121 = pneg %p77
      $region18: #{tpu_custom_call.1} parent=11 // pred_check_branch
        %123 = sbr.rel (%p121) target = $region20
      $region19: #{tpu_custom_call.1} parent=11 // pred_region
        _
      $region20: #{tpu_custom_call.1} parent=11 // pred_fallthru
        _
    $region12: #{tpu_custom_call.1} parent=5 // pred_fallthru
      _
    %p124 = scmp.lt.s32.totalorder %s9, 2
    // Predicated region
    $region21: #{tpu_custom_call.1} parent=5 // pred_check
      %p125 = pneg %p124
    $region22: #{tpu_custom_call.1} parent=5 // pred_check_branch
      %127 = sbr.rel (%p125) target = $region24
    $region23: #{tpu_custom_call.1} parent=5 // pred_region
      // Predicated region
      $region25: #{tpu_custom_call.1} parent=23 // pred_check
        %p128 = pneg %p29
      $region26: #{tpu_custom_call.1} parent=23 // pred_check_branch
        %130 = sbr.rel (%p128) target = $region28
      $region27: #{tpu_custom_call.1} parent=23 // pred_region
        %p131 = scmp.lt.s32.totalorder %s9, 1
        %s132 = scalar_select %p131, %s9, 1
        %s133 = smul.addr %s132, 54
        %s134 = smul.addr %s133, 8
        %s135 = scalar_lea.vmem %s0, %s134
      $region28: #{tpu_custom_call.1} parent=23 // pred_fallthru
        _
    $region24: #{tpu_custom_call.1} parent=5 // pred_fallthru
      _
    %p136 = scmp.le.s32.totalorder 1, %s9
    %p137 = scmp.lt.s32.totalorder %s9, 3
    %p138 = pnand %p136, %p137
    %p139 = pneg %p138
    // Predicated region
    $region29: #{tpu_custom_call.1} parent=5 // pred_check
      _
    $region30: #{tpu_custom_call.1} parent=5 // pred_check_branch
      %141 = sbr.rel (%p138) target = $region32
    $region31: #{tpu_custom_call.1} parent=5 // pred_region
      %s142 = ssub.s32 %s9, 1
      %p143 = scmp.lt.s32.totalorder %s14, 1
      %s144 = scalar_select %p143, %s14, 1
      %s145 = smul.addr %s144, 54
      %s146 = smul.addr %s145, 8
      %s147 = scalar_lea.vmem %s0, %s146
      %p148 = pneg %p35
      %p149 = pneg %p32
      %p150 = pneg %p56
      %p151 = pneg %p53
      %p152 = pneg %p77
      %p153 = pneg %p74
      %p154 = pneg %p103
      %p155 = pneg %p100
      %p156 = scmp.lt.s32.totalorder %s14, 1
      %s157 = scalar_select %p156, %s14, 1
      %s158 = smul.addr %s157, 32
      %s159 = smul.addr %s158, 8
      %s160 = scalar_lea.vmem %s3, %s159
      %p161 = scmp.lt.s32.totalorder %s14, 1
      %s162 = scalar_select %p161, %s14, 1
      %s163 = smul.addr %s162, 54
      %s164 = smul.addr %s163, 8
      %s165 = scalar_lea.vmem %s0, %s164
      %p166 = scmp.lt.s32.totalorder %s14, 1
      %s167 = scalar_select %p166, %s14, 1
      %s168 = smul.addr %s167, 32
      %s169 = smul.addr %s168, 8
      %s170 = scalar_lea.vmem %s3, %s169
      %v171 = vld [vmem:[%s165] sm:$0xff]
      %v172 = vld [vmem:[%s165 + $0x8] sm:$0xff]
      %v173 = vld [vmem:[%s165 + $0x18] sm:$0xff]
      %v174 = vld [vmem:[%s165 + $0x20] sm:$0xff]
      %v175 = vld [vmem:[%s165 + $0x30] sm:$0xff]
      %v176 = vld [vmem:[%s165 + $0x38] sm:$0xff]
      %v177 = vld [vmem:[%s165 + $0x48] sm:$0xff]
      %v178 = vld [vmem:[%s165 + $0x50] sm:$0xff]
      %v179 = vld [vmem:[%s165 + $0x60] sm:$0xff]
      %v180 = vld [vmem:[%s165 + $0x68] sm:$0xff]
      %v181 = vld [vmem:[%s165 + $0x78] sm:$0xff]
      %v182 = vld [vmem:[%s165 + $0x80] sm:$0xff]
      %v183 = vld [vmem:[%s165 + $0x90] sm:$0xff]
      %v184 = vld [vmem:[%s165 + $0x98] sm:$0xff]
      %v185 = vld [vmem:[%s165 + $0xa8] sm:$0xff]
      %v186 = vld [vmem:[%s165 + $0xb0] sm:$0xff]
      %v187 = vld [vmem:[%s165 + $0xc0] sm:$0xff]
      %v188 = vld [vmem:[%s165 + $0xc8] sm:$0xff]
      %v189 = vld [vmem:[%s165 + $0xd8] sm:$0xff]
      %v190 = vld [vmem:[%s165 + $0xe0] sm:$0xff]
      %v191 = vld [vmem:[%s165 + $0xf0] sm:$0xff]
      %v192 = vld [vmem:[%s165 + $0xf8] sm:$0xff]
      %v193 = vld [vmem:[%s165 + $0x108] sm:$0xff]
      %v194 = vld [vmem:[%s165 + $0x110] sm:$0xff]
      %v195 = vld [vmem:[%s165 + $0x120] sm:$0xff]
      %v196 = vld [vmem:[%s165 + $0x128] sm:$0xff]
      %v197 = vld [vmem:[%s165 + $0x138] sm:$0xff]
      %v198 = vld [vmem:[%s165 + $0x140] sm:$0xff]
      %v199 = vld [vmem:[%s165 + $0x150] sm:$0xff]
      %v200 = vld [vmem:[%s165 + $0x158] sm:$0xff]
      %v201 = vld [vmem:[%s165 + $0x168] sm:$0xff]
      %v202 = vld [vmem:[%s165 + $0x170] sm:$0xff]
      %v203 = vld [vmem:[%s1] sm:$0xf]
      %v204 = vld [vmem:[%s165 + $0x1] sm:$0xff]
      %v205 = vld [vmem:[%s165 + $0x9] sm:$0xff]
      %v206 = vld [vmem:[%s165 + $0x19] sm:$0xff]
      %v207 = vld [vmem:[%s165 + $0x21] sm:$0xff]
      %v208 = vld [vmem:[%s165 + $0x31] sm:$0xff]
      %v209 = vld [vmem:[%s165 + $0x39] sm:$0xff]
      %v210 = vld [vmem:[%s165 + $0x49] sm:$0xff]
      %v211 = vld [vmem:[%s165 + $0x51] sm:$0xff]
      %v212 = vld [vmem:[%s165 + $0x61] sm:$0xff]
      %v213 = vld [vmem:[%s165 + $0x69] sm:$0xff]
      %v214 = vld [vmem:[%s165 + $0x79] sm:$0xff]
      %v215 = vld [vmem:[%s165 + $0x81] sm:$0xff]
      %v216 = vld [vmem:[%s165 + $0x91] sm:$0xff]
      %v217 = vld [vmem:[%s165 + $0x99] sm:$0xff]
      %v218 = vld [vmem:[%s165 + $0xa9] sm:$0xff]
      %v219 = vld [vmem:[%s165 + $0xb1] sm:$0xff]
      %v220 = vld [vmem:[%s165 + $0xc1] sm:$0xff]
      %v221 = vld [vmem:[%s165 + $0xc9] sm:$0xff]
      %v222 = vld [vmem:[%s165 + $0xd9] sm:$0xff]
      %v223 = vld [vmem:[%s165 + $0xe1] sm:$0xff]
      %v224 = vld [vmem:[%s165 + $0xf1] sm:$0xff]
      %v225 = vld [vmem:[%s165 + $0xf9] sm:$0xff]
      %v226 = vld [vmem:[%s165 + $0x109] sm:$0xff]
      %v227 = vld [vmem:[%s165 + $0x111] sm:$0xff]
      %v228 = vld [vmem:[%s165 + $0x121] sm:$0xff]
      %v229 = vld [vmem:[%s165 + $0x129] sm:$0xff]
      %v230 = vld [vmem:[%s165 + $0x139] sm:$0xff]
      %v231 = vld [vmem:[%s165 + $0x141] sm:$0xff]
      %v232 = vld [vmem:[%s165 + $0x151] sm:$0xff]
      %v233 = vld [vmem:[%s165 + $0x159] sm:$0xff]
      %v234 = vld [vmem:[%s165 + $0x169] sm:$0xff]
      %v235 = vld [vmem:[%s165 + $0x171] sm:$0xff]
      %s236 = scalar_lea.vmem %s1, 4
      %v237 = vld [vmem:[%s236] sm:$0xf]
      %vm238 = vcmask 31744
      %v240 = vsel %vm238, %v204, 0
      %v243 = vsel %vm238, %v205, 0
      %v246 = vsel %vm238, %v206, 0
      %v249 = vsel %vm238, %v207, 0
      %v252 = vsel %vm238, %v208, 0
      %v255 = vsel %vm238, %v209, 0
      %v258 = vsel %vm238, %v210, 0
      %v261 = vsel %vm238, %v211, 0
      %v264 = vsel %vm238, %v212, 0
      %v267 = vsel %vm238, %v213, 0
      %v270 = vsel %vm238, %v214, 0
      %v273 = vsel %vm238, %v215, 0
      %v276 = vsel %vm238, %v216, 0
      %v279 = vsel %vm238, %v217, 0
      %v282 = vsel %vm238, %v218, 0
      %v285 = vsel %vm238, %v219, 0
      %v288 = vsel %vm238, %v220, 0
      %v291 = vsel %vm238, %v221, 0
      %v294 = vsel %vm238, %v222, 0
      %v297 = vsel %vm238, %v223, 0
      %v300 = vsel %vm238, %v224, 0
      %v303 = vsel %vm238, %v225, 0
      %v306 = vsel %vm238, %v226, 0
      %v309 = vsel %vm238, %v227, 0
      %v312 = vsel %vm238, %v228, 0
      %v315 = vsel %vm238, %v229, 0
      %v318 = vsel %vm238, %v230, 0
      %v321 = vsel %vm238, %v231, 0
      %v324 = vsel %vm238, %v232, 0
      %v327 = vsel %vm238, %v233, 0
      %v330 = vsel %vm238, %v234, 0
      %v333 = vsel %vm238, %v235, 0
      %vm335 = vcmask 1043456
      %v337 = vsel %vm335, %v237, 0
      %339 = vmatprep.subr.mxu0 0.0
      %340 = vmatpush1.msra.mxu0 0.0
      %341 = vmatprep.subr.mxu0 0.0
      %342 = vmatpush1.msra.mxu0 0.0
      %343 = vmatprep.subr.mxu0 0.0
      %344 = vmatpush1.msra.mxu0 0.0
      %345 = vmatprep.subr.mxu0 0.0
      %346 = vmatpush1.msra.mxu0 0.0
      %347 = vmatprep.subr.mxu0 0.0
      %348 = vmatpush1.msra.mxu0 0.0
      %349 = vmatprep.subr.mxu0 0.0
      %350 = vmatpush1.msra.mxu0 0.0
      %351 = vmatprep.subr.mxu0 0.0
      %352 = vmatpush1.msra.mxu0 0.0
      %353 = vmatprep.subr.mxu0 0.0
      %354 = vmatpush1.msra.mxu0 0.0
      %355 = vmatprep.subr.mxu0 0.0
      %356 = vmatpush1.msra.mxu0 0.0
      %357 = vmatprep.subr.mxu0 0.0
      %358 = vmatpush1.msra.mxu0 0.0
      %359 = vmatprep.subr.mxu0 0.0
      %360 = vmatpush1.msra.mxu0 0.0
      %361 = vmatprep.subr.mxu0 0.0
      %362 = vmatpush1.msra.mxu0 0.0
      %363 = vmatprep.subr.mxu0 0.0
      %364 = vmatpush1.msra.mxu0 0.0
      %365 = vmatprep.subr.mxu0 0.0
      %366 = vmatpush1.msra.mxu0 0.0
      %367 = vmatprep.subr.mxu0 0.0
      %368 = vmatpush1.msra.mxu0 0.0
      %369 = vmatprep.subr.mxu0 0.0
      %370 = vmatpush1.msra.mxu0 %v337
      %371 = vmatprep.subr.mxu0 0.0
      %372 = vmatpush2.msra.mxu0 0.0
      %373 = vmatprep.subr.mxu0 0.0
      %374 = vmatpush2.msra.mxu0 0.0
      %375 = vmatprep.subr.mxu0 0.0
      %376 = vmatpush2.msra.mxu0 0.0
      %377 = vmatprep.subr.mxu0 0.0
      %378 = vmatpush2.msra.mxu0 0.0
      %379 = vmatprep.subr.mxu0 0.0
      %380 = vmatpush2.msra.mxu0 0.0
      %381 = vmatprep.subr.mxu0 0.0
      %382 = vmatpush2.msra.mxu0 0.0
      %383 = vmatprep.subr.mxu0 0.0
      %384 = vmatpush2.msra.mxu0 0.0
      %385 = vmatprep.subr.mxu0 0.0
      %386 = vmatpush2.msra.mxu0 0.0
      %387 = vmatprep.subr.mxu0 0.0
      %388 = vmatpush2.msra.mxu0 0.0
      %389 = vmatprep.subr.mxu0 0.0
      %390 = vmatpush2.msra.mxu0 0.0
      %391 = vmatprep.subr.mxu0 0.0
      %392 = vmatpush2.msra.mxu0 0.0
      %393 = vmatprep.subr.mxu0 0.0
      %394 = vmatpush2.msra.mxu0 0.0
      %395 = vmatprep.subr.mxu0 0.0
      %396 = vmatpush2.msra.mxu0 0.0
      %397 = vmatprep.subr.mxu0 0.0
      %398 = vmatpush2.msra.mxu0 0.0
      %399 = vmatprep.subr.mxu0 0.0
      %400 = vmatpush2.msra.mxu0 0.0
      %401 = vmatprep.subr.mxu0 0.0
      %402 = vmatpush2.msra.mxu0 0.0
      %403 = vmatprep.mubr.f32.mxu0 0.0
      %404 = vmatmul.mubr.f32.gmra.mxu0 %v240
      %v405 = vpop.f32.mrf.mxu0
      %v406 = vadd.f32 0.0, %v405
      %v407 = vpop.f32.mrf.mxu0
      %408 = vmatprep.mubr.f32.mxu0 0.0
      %409 = vmatmul.mubr.f32.gmra.mxu0 %v243
      %v410 = vpop.f32.mrf.mxu0
      %v411 = vadd.f32 0.0, %v410
      %v412 = vpop.f32.mrf.mxu0
      %413 = vmatprep.mubr.f32.mxu0 0.0
      %414 = vmatmul.mubr.f32.gmra.mxu0 %v246
      %v415 = vpop.f32.mrf.mxu0
      %v416 = vadd.f32 0.0, %v415
      %v417 = vpop.f32.mrf.mxu0
      %418 = vmatprep.mubr.f32.mxu0 0.0
      %419 = vmatmul.mubr.f32.gmra.mxu0 %v249
      %v420 = vpop.f32.mrf.mxu0
      %v421 = vadd.f32 0.0, %v420
      %v422 = vpop.f32.mrf.mxu0
      %423 = vmatprep.mubr.f32.mxu0 0.0
      %424 = vmatmul.mubr.f32.gmra.mxu0 %v252
      %v425 = vpop.f32.mrf.mxu0
      %v426 = vadd.f32 0.0, %v425
      %v427 = vpop.f32.mrf.mxu0
      %428 = vmatprep.mubr.f32.mxu0 0.0
      %429 = vmatmul.mubr.f32.gmra.mxu0 %v255
      %v430 = vpop.f32.mrf.mxu0
      %v431 = vadd.f32 0.0, %v430
      %v432 = vpop.f32.mrf.mxu0
      %433 = vmatprep.mubr.f32.mxu0 0.0
      %434 = vmatmul.mubr.f32.gmra.mxu0 %v258
      %v435 = vpop.f32.mrf.mxu0
      %v436 = vadd.f32 0.0, %v435
      %v437 = vpop.f32.mrf.mxu0
      %438 = vmatprep.mubr.f32.mxu0 0.0
      %439 = vmatmul.mubr.f32.gmra.mxu0 %v261
      %v440 = vpop.f32.mrf.mxu0
      %v441 = vadd.f32 0.0, %v440
      %v442 = vpop.f32.mrf.mxu0
      %443 = vmatprep.mubr.f32.mxu0 0.0
      %444 = vmatmul.mubr.f32.gmra.mxu0 %v264
      %v445 = vpop.f32.mrf.mxu0
      %v446 = vadd.f32 0.0, %v445
      %v447 = vpop.f32.mrf.mxu0
      %448 = vmatprep.mubr.f32.mxu0 0.0
      %449 = vmatmul.mubr.f32.gmra.mxu0 %v267
      %v450 = vpop.f32.mrf.mxu0
      %v451 = vadd.f32 0.0, %v450
      %v452 = vpop.f32.mrf.mxu0
      %453 = vmatprep.mubr.f32.mxu0 0.0
      %454 = vmatmul.mubr.f32.gmra.mxu0 %v270
      %v455 = vpop.f32.mrf.mxu0
      %v456 = vadd.f32 0.0, %v455
      %v457 = vpop.f32.mrf.mxu0
      %458 = vmatprep.mubr.f32.mxu0 0.0
      %459 = vmatmul.mubr.f32.gmra.mxu0 %v273
      %v460 = vpop.f32.mrf.mxu0
      %v461 = vadd.f32 0.0, %v460
      %v462 = vpop.f32.mrf.mxu0
      %463 = vmatprep.mubr.f32.mxu0 0.0
      %464 = vmatmul.mubr.f32.gmra.mxu0 %v276
      %v465 = vpop.f32.mrf.mxu0
      %v466 = vadd.f32 0.0, %v465
      %v467 = vpop.f32.mrf.mxu0
      %468 = vmatprep.mubr.f32.mxu0 0.0
      %469 = vmatmul.mubr.f32.gmra.mxu0 %v279
      %v470 = vpop.f32.mrf.mxu0
      %v471 = vadd.f32 0.0, %v470
      %v472 = vpop.f32.mrf.mxu0
      %473 = vmatprep.mubr.f32.mxu0 0.0
      %474 = vmatmul.mubr.f32.gmra.mxu0 %v282
      %v475 = vpop.f32.mrf.mxu0
      %v476 = vadd.f32 0.0, %v475
      %v477 = vpop.f32.mrf.mxu0
      %478 = vmatprep.mubr.f32.mxu0 0.0
      %479 = vmatmul.mubr.f32.gmra.mxu0 %v285
      %v480 = vpop.f32.mrf.mxu0
      %v481 = vadd.f32 0.0, %v480
      %v482 = vpop.f32.mrf.mxu0
      %483 = vmatprep.mubr.f32.mxu0 0.0
      %484 = vmatmul.mubr.f32.gmra.mxu0 %v288
      %v485 = vpop.f32.mrf.mxu0
      %v486 = vadd.f32 0.0, %v485
      %v487 = vpop.f32.mrf.mxu0
      %488 = vmatprep.mubr.f32.mxu0 0.0
      %489 = vmatmul.mubr.f32.gmra.mxu0 %v291
      %v490 = vpop.f32.mrf.mxu0
      %v491 = vadd.f32 0.0, %v490
      %v492 = vpop.f32.mrf.mxu0
      %493 = vmatprep.mubr.f32.mxu0 0.0
      %494 = vmatmul.mubr.f32.gmra.mxu0 %v294
      %v495 = vpop.f32.mrf.mxu0
      %v496 = vadd.f32 0.0, %v495
      %v497 = vpop.f32.mrf.mxu0
      %498 = vmatprep.mubr.f32.mxu0 0.0
      %499 = vmatmul.mubr.f32.gmra.mxu0 %v297
      %v500 = vpop.f32.mrf.mxu0
      %v501 = vadd.f32 0.0, %v500
      %v502 = vpop.f32.mrf.mxu0
      %503 = vmatprep.mubr.f32.mxu0 0.0
      %504 = vmatmul.mubr.f32.gmra.mxu0 %v300
      %v505 = vpop.f32.mrf.mxu0
      %v506 = vadd.f32 0.0, %v505
      %v507 = vpop.f32.mrf.mxu0
      %508 = vmatprep.mubr.f32.mxu0 0.0
      %509 = vmatmul.mubr.f32.gmra.mxu0 %v303
      %v510 = vpop.f32.mrf.mxu0
      %v511 = vadd.f32 0.0, %v510
      %v512 = vpop.f32.mrf.mxu0
      %513 = vmatprep.mubr.f32.mxu0 0.0
      %514 = vmatmul.mubr.f32.gmra.mxu0 %v306
      %v515 = vpop.f32.mrf.mxu0
      %v516 = vadd.f32 0.0, %v515
      %v517 = vpop.f32.mrf.mxu0
      %518 = vmatprep.mubr.f32.mxu0 0.0
      %519 = vmatmul.mubr.f32.gmra.mxu0 %v309
      %v520 = vpop.f32.mrf.mxu0
      %v521 = vadd.f32 0.0, %v520
      %v522 = vpop.f32.mrf.mxu0
      %523 = vmatprep.mubr.f32.mxu0 0.0
      %524 = vmatmul.mubr.f32.gmra.mxu0 %v312
      %v525 = vpop.f32.mrf.mxu0
      %v526 = vadd.f32 0.0, %v525
      %v527 = vpop.f32.mrf.mxu0
      %528 = vmatprep.mubr.f32.mxu0 0.0
      %529 = vmatmul.mubr.f32.gmra.mxu0 %v315
      %v530 = vpop.f32.mrf.mxu0
      %v531 = vadd.f32 0.0, %v530
      %v532 = vpop.f32.mrf.mxu0
      %533 = vmatprep.mubr.f32.mxu0 0.0
      %534 = vmatmul.mubr.f32.gmra.mxu0 %v318
      %v535 = vpop.f32.mrf.mxu0
      %v536 = vadd.f32 0.0, %v535
      %v537 = vpop.f32.mrf.mxu0
      %538 = vmatprep.mubr.f32.mxu0 0.0
      %539 = vmatmul.mubr.f32.gmra.mxu0 %v321
      %v540 = vpop.f32.mrf.mxu0
      %v541 = vadd.f32 0.0, %v540
      %v542 = vpop.f32.mrf.mxu0
      %543 = vmatprep.mubr.f32.mxu0 0.0
      %544 = vmatmul.mubr.f32.gmra.mxu0 %v324
      %v545 = vpop.f32.mrf.mxu0
      %v546 = vadd.f32 0.0, %v545
      %v547 = vpop.f32.mrf.mxu0
      %548 = vmatprep.mubr.f32.mxu0 0.0
      %549 = vmatmul.mubr.f32.gmra.mxu0 %v327
      %v550 = vpop.f32.mrf.mxu0
      %v551 = vadd.f32 0.0, %v550
      %v552 = vpop.f32.mrf.mxu0
      %553 = vmatprep.mubr.f32.mxu0 0.0
      %554 = vmatmul.mubr.f32.gmra.mxu0 %v330
      %v555 = vpop.f32.mrf.mxu0
      %v556 = vadd.f32 0.0, %v555
      %v557 = vpop.f32.mrf.mxu0
      %558 = vmatprep.mubr.f32.mxu0 0.0
      %559 = vmatmul.mubr.f32.gmra.mxu0 %v333
      %v560 = vpop.f32.mrf.mxu0
      %v561 = vadd.f32 0.0, %v560
      %v562 = vpop.f32.mrf.mxu0
      %563 = vdwg.mxu0
      %v565 = vsel %vm238, %v171, 0
      %v568 = vsel %vm238, %v172, 0
      %v571 = vsel %vm238, %v173, 0
      %v574 = vsel %vm238, %v174, 0
      %v577 = vsel %vm238, %v175, 0
      %v580 = vsel %vm238, %v176, 0
      %v583 = vsel %vm238, %v177, 0
      %v586 = vsel %vm238, %v178, 0
      %v589 = vsel %vm238, %v179, 0
      %v592 = vsel %vm238, %v180, 0
      %v595 = vsel %vm238, %v181, 0
      %v598 = vsel %vm238, %v182, 0
      %v601 = vsel %vm238, %v183, 0
      %v604 = vsel %vm238, %v184, 0
      %v607 = vsel %vm238, %v185, 0
      %v610 = vsel %vm238, %v186, 0
      %v613 = vsel %vm238, %v187, 0
      %v616 = vsel %vm238, %v188, 0
      %v619 = vsel %vm238, %v189, 0
      %v622 = vsel %vm238, %v190, 0
      %v625 = vsel %vm238, %v191, 0
      %v628 = vsel %vm238, %v192, 0
      %v631 = vsel %vm238, %v193, 0
      %v634 = vsel %vm238, %v194, 0
      %v637 = vsel %vm238, %v195, 0
      %v640 = vsel %vm238, %v196, 0
      %v643 = vsel %vm238, %v197, 0
      %v646 = vsel %vm238, %v198, 0
      %v649 = vsel %vm238, %v199, 0
      %v652 = vsel %vm238, %v200, 0
      %v655 = vsel %vm238, %v201, 0
      %v658 = vsel %vm238, %v202, 0
      %v661 = vsel %vm335, %v203, 0
      %663 = vmatprep.subr.mxu0 0.0
      %664 = vmatpush1.msra.mxu0 0.0
      %665 = vmatprep.subr.mxu0 0.0
      %666 = vmatpush1.msra.mxu0 0.0
      %667 = vmatprep.subr.mxu0 0.0
      %668 = vmatpush1.msra.mxu0 0.0
      %669 = vmatprep.subr.mxu0 0.0
      %670 = vmatpush1.msra.mxu0 0.0
      %671 = vmatprep.subr.mxu0 0.0
      %672 = vmatpush1.msra.mxu0 0.0
      %673 = vmatprep.subr.mxu0 0.0
      %674 = vmatpush1.msra.mxu0 0.0
      %675 = vmatprep.subr.mxu0 0.0
      %676 = vmatpush1.msra.mxu0 0.0
      %677 = vmatprep.subr.mxu0 0.0
      %678 = vmatpush1.msra.mxu0 0.0
      %679 = vmatprep.subr.mxu0 0.0
      %680 = vmatpush1.msra.mxu0 0.0
      %681 = vmatprep.subr.mxu0 0.0
      %682 = vmatpush1.msra.mxu0 0.0
      %683 = vmatprep.subr.mxu0 0.0
      %684 = vmatpush1.msra.mxu0 0.0
      %685 = vmatprep.subr.mxu0 0.0
      %686 = vmatpush1.msra.mxu0 0.0
      %687 = vmatprep.subr.mxu0 0.0
      %688 = vmatpush1.msra.mxu0 0.0
      %689 = vmatprep.subr.mxu0 0.0
      %690 = vmatpush1.msra.mxu0 0.0
      %691 = vmatprep.subr.mxu0 0.0
      %692 = vmatpush1.msra.mxu0 0.0
      %693 = vmatprep.subr.mxu0 0.0
      %694 = vmatpush1.msra.mxu0 %v661
      %695 = vmatprep.subr.mxu0 0.0
      %696 = vmatpush2.msra.mxu0 0.0
      %697 = vmatprep.subr.mxu0 0.0
      %698 = vmatpush2.msra.mxu0 0.0
      %699 = vmatprep.subr.mxu0 0.0
      %700 = vmatpush2.msra.mxu0 0.0
      %701 = vmatprep.subr.mxu0 0.0
      %702 = vmatpush2.msra.mxu0 0.0
      %703 = vmatprep.subr.mxu0 0.0
      %704 = vmatpush2.msra.mxu0 0.0
      %705 = vmatprep.subr.mxu0 0.0
      %706 = vmatpush2.msra.mxu0 0.0
      %707 = vmatprep.subr.mxu0 0.0
      %708 = vmatpush2.msra.mxu0 0.0
      %709 = vmatprep.subr.mxu0 0.0
      %710 = vmatpush2.msra.mxu0 0.0
      %711 = vmatprep.subr.mxu0 0.0
      %712 = vmatpush2.msra.mxu0 0.0
      %713 = vmatprep.subr.mxu0 0.0
      %714 = vmatpush2.msra.mxu0 0.0
      %715 = vmatprep.subr.mxu0 0.0
      %716 = vmatpush2.msra.mxu0 0.0
      %717 = vmatprep.subr.mxu0 0.0
      %718 = vmatpush2.msra.mxu0 0.0
      %719 = vmatprep.subr.mxu0 0.0
      %720 = vmatpush2.msra.mxu0 0.0
      %721 = vmatprep.subr.mxu0 0.0
      %722 = vmatpush2.msra.mxu0 0.0
      %723 = vmatprep.subr.mxu0 0.0
      %724 = vmatpush2.msra.mxu0 0.0
      %725 = vmatprep.subr.mxu0 0.0
      %726 = vmatpush2.msra.mxu0 0.0
      %727 = vmatprep.mubr.f32.mxu0 0.0
      %728 = vmatmul.mubr.f32.gmra.mxu0 %v565
      %v729 = vpop.f32.mrf.mxu0
      %v730 = vadd.f32 %v406, %v729
      %v731 = vpop.f32.mrf.mxu0
      %732 = vmatprep.mubr.f32.mxu0 0.0
      %733 = vmatmul.mubr.f32.gmra.mxu0 %v568
      %v734 = vpop.f32.mrf.mxu0
      %v735 = vadd.f32 %v411, %v734
      %v736 = vpop.f32.mrf.mxu0
      %737 = vmatprep.mubr.f32.mxu0 0.0
      %738 = vmatmul.mubr.f32.gmra.mxu0 %v571
      %v739 = vpop.f32.mrf.mxu0
      %v740 = vadd.f32 %v416, %v739
      %v741 = vpop.f32.mrf.mxu0
      %742 = vmatprep.mubr.f32.mxu0 0.0
      %743 = vmatmul.mubr.f32.gmra.mxu0 %v574
      %v744 = vpop.f32.mrf.mxu0
      %v745 = vadd.f32 %v421, %v744
      %v746 = vpop.f32.mrf.mxu0
      %747 = vmatprep.mubr.f32.mxu0 0.0
      %748 = vmatmul.mubr.f32.gmra.mxu0 %v577
      %v749 = vpop.f32.mrf.mxu0
      %v750 = vadd.f32 %v426, %v749
      %v751 = vpop.f32.mrf.mxu0
      %752 = vmatprep.mubr.f32.mxu0 0.0
      %753 = vmatmul.mubr.f32.gmra.mxu0 %v580
      %v754 = vpop.f32.mrf.mxu0
      %v755 = vadd.f32 %v431, %v754
      %v756 = vpop.f32.mrf.mxu0
      %757 = vmatprep.mubr.f32.mxu0 0.0
      %758 = vmatmul.mubr.f32.gmra.mxu0 %v583
      %v759 = vpop.f32.mrf.mxu0
      %v760 = vadd.f32 %v436, %v759
      %v761 = vpop.f32.mrf.mxu0
      %762 = vmatprep.mubr.f32.mxu0 0.0
      %763 = vmatmul.mubr.f32.gmra.mxu0 %v586
      %v764 = vpop.f32.mrf.mxu0
      %v765 = vadd.f32 %v441, %v764
      %v766 = vpop.f32.mrf.mxu0
      %767 = vmatprep.mubr.f32.mxu0 0.0
      %768 = vmatmul.mubr.f32.gmra.mxu0 %v589
      %v769 = vpop.f32.mrf.mxu0
      %v770 = vadd.f32 %v446, %v769
      %v771 = vpop.f32.mrf.mxu0
      %772 = vmatprep.mubr.f32.mxu0 0.0
      %773 = vmatmul.mubr.f32.gmra.mxu0 %v592
      %v774 = vpop.f32.mrf.mxu0
      %v775 = vadd.f32 %v451, %v774
      %v776 = vpop.f32.mrf.mxu0
      %777 = vmatprep.mubr.f32.mxu0 0.0
      %778 = vmatmul.mubr.f32.gmra.mxu0 %v595
      %v779 = vpop.f32.mrf.mxu0
      %v780 = vadd.f32 %v456, %v779
      %v781 = vpop.f32.mrf.mxu0
      %782 = vmatprep.mubr.f32.mxu0 0.0
      %783 = vmatmul.mubr.f32.gmra.mxu0 %v598
      %v784 = vpop.f32.mrf.mxu0
      %v785 = vadd.f32 %v461, %v784
      %v786 = vpop.f32.mrf.mxu0
      %787 = vmatprep.mubr.f32.mxu0 0.0
      %788 = vmatmul.mubr.f32.gmra.mxu0 %v601
      %v789 = vpop.f32.mrf.mxu0
      %v790 = vadd.f32 %v466, %v789
      %v791 = vpop.f32.mrf.mxu0
      %792 = vmatprep.mubr.f32.mxu0 0.0
      %793 = vmatmul.mubr.f32.gmra.mxu0 %v604
      %v794 = vpop.f32.mrf.mxu0
      %v795 = vadd.f32 %v471, %v794
      %v796 = vpop.f32.mrf.mxu0
      %797 = vmatprep.mubr.f32.mxu0 0.0
      %798 = vmatmul.mubr.f32.gmra.mxu0 %v607
      %v799 = vpop.f32.mrf.mxu0
      %v800 = vadd.f32 %v476, %v799
      %v801 = vpop.f32.mrf.mxu0
      %802 = vmatprep.mubr.f32.mxu0 0.0
      %803 = vmatmul.mubr.f32.gmra.mxu0 %v610
      %v804 = vpop.f32.mrf.mxu0
      %v805 = vadd.f32 %v481, %v804
      %v806 = vpop.f32.mrf.mxu0
      %807 = vmatprep.mubr.f32.mxu0 0.0
      %808 = vmatmul.mubr.f32.gmra.mxu0 %v613
      %v809 = vpop.f32.mrf.mxu0
      %v810 = vadd.f32 %v486, %v809
      %v811 = vpop.f32.mrf.mxu0
      %812 = vmatprep.mubr.f32.mxu0 0.0
      %813 = vmatmul.mubr.f32.gmra.mxu0 %v616
      %v814 = vpop.f32.mrf.mxu0
      %v815 = vadd.f32 %v491, %v814
      %v816 = vpop.f32.mrf.mxu0
      %817 = vmatprep.mubr.f32.mxu0 0.0
      %818 = vmatmul.mubr.f32.gmra.mxu0 %v619
      %v819 = vpop.f32.mrf.mxu0
      %v820 = vadd.f32 %v496, %v819
      %v821 = vpop.f32.mrf.mxu0
      %822 = vmatprep.mubr.f32.mxu0 0.0
      %823 = vmatmul.mubr.f32.gmra.mxu0 %v622
      %v824 = vpop.f32.mrf.mxu0
      %v825 = vadd.f32 %v501, %v824
      %v826 = vpop.f32.mrf.mxu0
      %827 = vmatprep.mubr.f32.mxu0 0.0
      %828 = vmatmul.mubr.f32.gmra.mxu0 %v625
      %v829 = vpop.f32.mrf.mxu0
      %v830 = vadd.f32 %v506, %v829
      %v831 = vpop.f32.mrf.mxu0
      %832 = vmatprep.mubr.f32.mxu0 0.0
      %833 = vmatmul.mubr.f32.gmra.mxu0 %v628
      %v834 = vpop.f32.mrf.mxu0
      %v835 = vadd.f32 %v511, %v834
      %v836 = vpop.f32.mrf.mxu0
      %837 = vmatprep.mubr.f32.mxu0 0.0
      %838 = vmatmul.mubr.f32.gmra.mxu0 %v631
      %v839 = vpop.f32.mrf.mxu0
      %v840 = vadd.f32 %v516, %v839
      %v841 = vpop.f32.mrf.mxu0
      %842 = vmatprep.mubr.f32.mxu0 0.0
      %843 = vmatmul.mubr.f32.gmra.mxu0 %v634
      %v844 = vpop.f32.mrf.mxu0
      %v845 = vadd.f32 %v521, %v844
      %v846 = vpop.f32.mrf.mxu0
      %847 = vmatprep.mubr.f32.mxu0 0.0
      %848 = vmatmul.mubr.f32.gmra.mxu0 %v637
      %v849 = vpop.f32.mrf.mxu0
      %v850 = vadd.f32 %v526, %v849
      %v851 = vpop.f32.mrf.mxu0
      %852 = vmatprep.mubr.f32.mxu0 0.0
      %853 = vmatmul.mubr.f32.gmra.mxu0 %v640
      %v854 = vpop.f32.mrf.mxu0
      %v855 = vadd.f32 %v531, %v854
      %v856 = vpop.f32.mrf.mxu0
      %857 = vmatprep.mubr.f32.mxu0 0.0
      %858 = vmatmul.mubr.f32.gmra.mxu0 %v643
      %v859 = vpop.f32.mrf.mxu0
      %v860 = vadd.f32 %v536, %v859
      %v861 = vpop.f32.mrf.mxu0
      %862 = vmatprep.mubr.f32.mxu0 0.0
      %863 = vmatmul.mubr.f32.gmra.mxu0 %v646
      %v864 = vpop.f32.mrf.mxu0
      %v865 = vadd.f32 %v541, %v864
      %v866 = vpop.f32.mrf.mxu0
      %867 = vmatprep.mubr.f32.mxu0 0.0
      %868 = vmatmul.mubr.f32.gmra.mxu0 %v649
      %v869 = vpop.f32.mrf.mxu0
      %v870 = vadd.f32 %v546, %v869
      %v871 = vpop.f32.mrf.mxu0
      %872 = vmatprep.mubr.f32.mxu0 0.0
      %873 = vmatmul.mubr.f32.gmra.mxu0 %v652
      %v874 = vpop.f32.mrf.mxu0
      %v875 = vadd.f32 %v551, %v874
      %v876 = vpop.f32.mrf.mxu0
      %877 = vmatprep.mubr.f32.mxu0 0.0
      %878 = vmatmul.mubr.f32.gmra.mxu0 %v655
      %v879 = vpop.f32.mrf.mxu0
      %v880 = vadd.f32 %v556, %v879
      %v881 = vpop.f32.mrf.mxu0
      %882 = vmatprep.mubr.f32.mxu0 0.0
      %883 = vmatmul.mubr.f32.gmra.mxu0 %v658
      %v884 = vpop.f32.mrf.mxu0
      %v885 = vadd.f32 %v561, %v884
      %v886 = vpop.f32.mrf.mxu0
      %887 = vdwg.mxu0
      %v888 = vld [vmem:[%s165 + $0x2] sm:$0xff]
      %v889 = vld [vmem:[%s165 + $0xa] sm:$0xff]
      %v890 = vld [vmem:[%s165 + $0x1a] sm:$0xff]
      %v891 = vld [vmem:[%s165 + $0x22] sm:$0xff]
      %v892 = vld [vmem:[%s165 + $0x32] sm:$0xff]
      %v893 = vld [vmem:[%s165 + $0x3a] sm:$0xff]
      %v894 = vld [vmem:[%s165 + $0x4a] sm:$0xff]
      %v895 = vld [vmem:[%s165 + $0x52] sm:$0xff]
      %v896 = vld [vmem:[%s165 + $0x62] sm:$0xff]
      %v897 = vld [vmem:[%s165 + $0x6a] sm:$0xff]
      %v898 = vld [vmem:[%s165 + $0x7a] sm:$0xff]
      %v899 = vld [vmem:[%s165 + $0x82] sm:$0xff]
      %v900 = vld [vmem:[%s165 + $0x92] sm:$0xff]
      %v901 = vld [vmem:[%s165 + $0x9a] sm:$0xff]
      %v902 = vld [vmem:[%s165 + $0xaa] sm:$0xff]
      %v903 = vld [vmem:[%s165 + $0xb2] sm:$0xff]
      %v904 = vld [vmem:[%s165 + $0xc2] sm:$0xff]
      %v905 = vld [vmem:[%s165 + $0xca] sm:$0xff]
      %v906 = vld [vmem:[%s165 + $0xda] sm:$0xff]
      %v907 = vld [vmem:[%s165 + $0xe2] sm:$0xff]
      %v908 = vld [vmem:[%s165 + $0xf2] sm:$0xff]
      %v909 = vld [vmem:[%s165 + $0xfa] sm:$0xff]
      %v910 = vld [vmem:[%s165 + $0x10a] sm:$0xff]
      %v911 = vld [vmem:[%s165 + $0x112] sm:$0xff]
      %v912 = vld [vmem:[%s165 + $0x122] sm:$0xff]
      %v913 = vld [vmem:[%s165 + $0x12a] sm:$0xff]
      %v914 = vld [vmem:[%s165 + $0x13a] sm:$0xff]
      %v915 = vld [vmem:[%s165 + $0x142] sm:$0xff]
      %v916 = vld [vmem:[%s165 + $0x152] sm:$0xff]
      %v917 = vld [vmem:[%s165 + $0x15a] sm:$0xff]
      %v918 = vld [vmem:[%s165 + $0x16a] sm:$0xff]
      %v919 = vld [vmem:[%s165 + $0x172] sm:$0xff]
      %s920 = scalar_lea.vmem %s1, 8
      %v921 = vld [vmem:[%s920] sm:$0xf]
      %v923 = vsel %vm238, %v888, 0
      %v926 = vsel %vm238, %v889, 0
      %v929 = vsel %vm238, %v890, 0
      %v932 = vsel %vm238, %v891, 0
      %v935 = vsel %vm238, %v892, 0
      %v938 = vsel %vm238, %v893, 0
      %v941 = vsel %vm238, %v894, 0
      %v944 = vsel %vm238, %v895, 0
      %v947 = vsel %vm238, %v896, 0
      %v950 = vsel %vm238, %v897, 0
      %v953 = vsel %vm238, %v898, 0
      %v956 = vsel %vm238, %v899, 0
      %v959 = vsel %vm238, %v900, 0
      %v962 = vsel %vm238, %v901, 0
      %v965 = vsel %vm238, %v902, 0
      %v968 = vsel %vm238, %v903, 0
      %v971 = vsel %vm238, %v904, 0
      %v974 = vsel %vm238, %v905, 0
      %v977 = vsel %vm238, %v906, 0
      %v980 = vsel %vm238, %v907, 0
      %v983 = vsel %vm238, %v908, 0
      %v986 = vsel %vm238, %v909, 0
      %v989 = vsel %vm238, %v910, 0
      %v992 = vsel %vm238, %v911, 0
      %v995 = vsel %vm238, %v912, 0
      %v998 = vsel %vm238, %v913, 0
      %v1001 = vsel %vm238, %v914, 0
      %v1004 = vsel %vm238, %v915, 0
      %v1007 = vsel %vm238, %v916, 0
      %v1010 = vsel %vm238, %v917, 0
      %v1013 = vsel %vm238, %v918, 0
      %v1016 = vsel %vm238, %v919, 0
      %v1019 = vsel %vm335, %v921, 0
      %1021 = vmatprep.subr.mxu0 0.0
      %1022 = vmatpush1.msra.mxu0 0.0
      %1023 = vmatprep.subr.mxu0 0.0
      %1024 = vmatpush1.msra.mxu0 0.0
      %1025 = vmatprep.subr.mxu0 0.0
      %1026 = vmatpush1.msra.mxu0 0.0
      %1027 = vmatprep.subr.mxu0 0.0
      %1028 = vmatpush1.msra.mxu0 0.0
      %1029 = vmatprep.subr.mxu0 0.0
      %1030 = vmatpush1.msra.mxu0 0.0
      %1031 = vmatprep.subr.mxu0 0.0
      %1032 = vmatpush1.msra.mxu0 0.0
      %1033 = vmatprep.subr.mxu0 0.0
      %1034 = vmatpush1.msra.mxu0 0.0
      %1035 = vmatprep.subr.mxu0 0.0
      %1036 = vmatpush1.msra.mxu0 0.0
      %1037 = vmatprep.subr.mxu0 0.0
      %1038 = vmatpush1.msra.mxu0 0.0
      %1039 = vmatprep.subr.mxu0 0.0
      %1040 = vmatpush1.msra.mxu0 0.0
      %1041 = vmatprep.subr.mxu0 0.0
      %1042 = vmatpush1.msra.mxu0 0.0
      %1043 = vmatprep.subr.mxu0 0.0
      %1044 = vmatpush1.msra.mxu0 0.0
      %1045 = vmatprep.subr.mxu0 0.0
      %1046 = vmatpush1.msra.mxu0 0.0
      %1047 = vmatprep.subr.mxu0 0.0
      %1048 = vmatpush1.msra.mxu0 0.0
      %1049 = vmatprep.subr.mxu0 0.0
      %1050 = vmatpush1.msra.mxu0 0.0
      %1051 = vmatprep.subr.mxu0 0.0
      %1052 = vmatpush1.msra.mxu0 %v1019
      %1053 = vmatprep.subr.mxu0 0.0
      %1054 = vmatpush2.msra.mxu0 0.0
      %1055 = vmatprep.subr.mxu0 0.0
      %1056 = vmatpush2.msra.mxu0 0.0
      %1057 = vmatprep.subr.mxu0 0.0
      %1058 = vmatpush2.msra.mxu0 0.0
      %1059 = vmatprep.subr.mxu0 0.0
      %1060 = vmatpush2.msra.mxu0 0.0
      %1061 = vmatprep.subr.mxu0 0.0
      %1062 = vmatpush2.msra.mxu0 0.0
      %1063 = vmatprep.subr.mxu0 0.0
      %1064 = vmatpush2.msra.mxu0 0.0
      %1065 = vmatprep.subr.mxu0 0.0
      %1066 = vmatpush2.msra.mxu0 0.0
      %1067 = vmatprep.subr.mxu0 0.0
      %1068 = vmatpush2.msra.mxu0 0.0
      %1069 = vmatprep.subr.mxu0 0.0
      %1070 = vmatpush2.msra.mxu0 0.0
      %1071 = vmatprep.subr.mxu0 0.0
      %1072 = vmatpush2.msra.mxu0 0.0
      %1073 = vmatprep.subr.mxu0 0.0
      %1074 = vmatpush2.msra.mxu0 0.0
      %1075 = vmatprep.subr.mxu0 0.0
      %1076 = vmatpush2.msra.mxu0 0.0
      %1077 = vmatprep.subr.mxu0 0.0
      %1078 = vmatpush2.msra.mxu0 0.0
      %1079 = vmatprep.subr.mxu0 0.0
      %1080 = vmatpush2.msra.mxu0 0.0
      %1081 = vmatprep.subr.mxu0 0.0
      %1082 = vmatpush2.msra.mxu0 0.0
      %1083 = vmatprep.subr.mxu0 0.0
      %1084 = vmatpush2.msra.mxu0 0.0
      %1085 = vmatprep.mubr.f32.mxu0 0.0
      %1086 = vmatmul.mubr.f32.gmra.mxu0 %v923
      %v1087 = vpop.f32.mrf.mxu0
      %v1088 = vadd.f32 0.0, %v1087
      %v1089 = vpop.f32.mrf.mxu0
      %1090 = vmatprep.mubr.f32.mxu0 0.0
      %1091 = vmatmul.mubr.f32.gmra.mxu0 %v926
      %v1092 = vpop.f32.mrf.mxu0
      %v1093 = vadd.f32 0.0, %v1092
      %v1094 = vpop.f32.mrf.mxu0
      %1095 = vmatprep.mubr.f32.mxu0 0.0
      %1096 = vmatmul.mubr.f32.gmra.mxu0 %v929
      %v1097 = vpop.f32.mrf.mxu0
      %v1098 = vadd.f32 0.0, %v1097
      %v1099 = vpop.f32.mrf.mxu0
      %1100 = vmatprep.mubr.f32.mxu0 0.0
      %1101 = vmatmul.mubr.f32.gmra.mxu0 %v932
      %v1102 = vpop.f32.mrf.mxu0
      %v1103 = vadd.f32 0.0, %v1102
      %v1104 = vpop.f32.mrf.mxu0
      %1105 = vmatprep.mubr.f32.mxu0 0.0
      %1106 = vmatmul.mubr.f32.gmra.mxu0 %v935
      %v1107 = vpop.f32.mrf.mxu0
      %v1108 = vadd.f32 0.0, %v1107
      %v1109 = vpop.f32.mrf.mxu0
      %1110 = vmatprep.mubr.f32.mxu0 0.0
      %1111 = vmatmul.mubr.f32.gmra.mxu0 %v938
      %v1112 = vpop.f32.mrf.mxu0
      %v1113 = vadd.f32 0.0, %v1112
      %v1114 = vpop.f32.mrf.mxu0
      %1115 = vmatprep.mubr.f32.mxu0 0.0
      %1116 = vmatmul.mubr.f32.gmra.mxu0 %v941
      %v1117 = vpop.f32.mrf.mxu0
      %v1118 = vadd.f32 0.0, %v1117
      %v1119 = vpop.f32.mrf.mxu0
      %1120 = vmatprep.mubr.f32.mxu0 0.0
      %1121 = vmatmul.mubr.f32.gmra.mxu0 %v944
      %v1122 = vpop.f32.mrf.mxu0
      %v1123 = vadd.f32 0.0, %v1122
      %v1124 = vpop.f32.mrf.mxu0
      %1125 = vmatprep.mubr.f32.mxu0 0.0
      %1126 = vmatmul.mubr.f32.gmra.mxu0 %v947
      %v1127 = vpop.f32.mrf.mxu0
      %v1128 = vadd.f32 0.0, %v1127
      %v1129 = vpop.f32.mrf.mxu0
      %1130 = vmatprep.mubr.f32.mxu0 0.0
      %1131 = vmatmul.mubr.f32.gmra.mxu0 %v950
      %v1132 = vpop.f32.mrf.mxu0
      %v1133 = vadd.f32 0.0, %v1132
      %v1134 = vpop.f32.mrf.mxu0
      %1135 = vmatprep.mubr.f32.mxu0 0.0
      %1136 = vmatmul.mubr.f32.gmra.mxu0 %v953
      %v1137 = vpop.f32.mrf.mxu0
      %v1138 = vadd.f32 0.0, %v1137
      %v1139 = vpop.f32.mrf.mxu0
      %1140 = vmatprep.mubr.f32.mxu0 0.0
      %1141 = vmatmul.mubr.f32.gmra.mxu0 %v956
      %v1142 = vpop.f32.mrf.mxu0
      %v1143 = vadd.f32 0.0, %v1142
      %v1144 = vpop.f32.mrf.mxu0
      %1145 = vmatprep.mubr.f32.mxu0 0.0
      %1146 = vmatmul.mubr.f32.gmra.mxu0 %v959
      %v1147 = vpop.f32.mrf.mxu0
      %v1148 = vadd.f32 0.0, %v1147
      %v1149 = vpop.f32.mrf.mxu0
      %1150 = vmatprep.mubr.f32.mxu0 0.0
      %1151 = vmatmul.mubr.f32.gmra.mxu0 %v962
      %v1152 = vpop.f32.mrf.mxu0
      %v1153 = vadd.f32 0.0, %v1152
      %v1154 = vpop.f32.mrf.mxu0
      %1155 = vmatprep.mubr.f32.mxu0 0.0
      %1156 = vmatmul.mubr.f32.gmra.mxu0 %v965
      %v1157 = vpop.f32.mrf.mxu0
      %v1158 = vadd.f32 0.0, %v1157
      %v1159 = vpop.f32.mrf.mxu0
      %1160 = vmatprep.mubr.f32.mxu0 0.0
      %1161 = vmatmul.mubr.f32.gmra.mxu0 %v968
      %v1162 = vpop.f32.mrf.mxu0
      %v1163 = vadd.f32 0.0, %v1162
      %v1164 = vpop.f32.mrf.mxu0
      %1165 = vmatprep.mubr.f32.mxu0 0.0
      %1166 = vmatmul.mubr.f32.gmra.mxu0 %v971
      %v1167 = vpop.f32.mrf.mxu0
      %v1168 = vadd.f32 0.0, %v1167
      %v1169 = vpop.f32.mrf.mxu0
      %1170 = vmatprep.mubr.f32.mxu0 0.0
      %1171 = vmatmul.mubr.f32.gmra.mxu0 %v974
      %v1172 = vpop.f32.mrf.mxu0
      %v1173 = vadd.f32 0.0, %v1172
      %v1174 = vpop.f32.mrf.mxu0
      %1175 = vmatprep.mubr.f32.mxu0 0.0
      %1176 = vmatmul.mubr.f32.gmra.mxu0 %v977
      %v1177 = vpop.f32.mrf.mxu0
      %v1178 = vadd.f32 0.0, %v1177
      %v1179 = vpop.f32.mrf.mxu0
      %1180 = vmatprep.mubr.f32.mxu0 0.0
      %1181 = vmatmul.mubr.f32.gmra.mxu0 %v980
      %v1182 = vpop.f32.mrf.mxu0
      %v1183 = vadd.f32 0.0, %v1182
      %v1184 = vpop.f32.mrf.mxu0
      %1185 = vmatprep.mubr.f32.mxu0 0.0
      %1186 = vmatmul.mubr.f32.gmra.mxu0 %v983
      %v1187 = vpop.f32.mrf.mxu0
      %v1188 = vadd.f32 0.0, %v1187
      %v1189 = vpop.f32.mrf.mxu0
      %1190 = vmatprep.mubr.f32.mxu0 0.0
      %1191 = vmatmul.mubr.f32.gmra.mxu0 %v986
      %v1192 = vpop.f32.mrf.mxu0
      %v1193 = vadd.f32 0.0, %v1192
      %v1194 = vpop.f32.mrf.mxu0
      %1195 = vmatprep.mubr.f32.mxu0 0.0
      %1196 = vmatmul.mubr.f32.gmra.mxu0 %v989
      %v1197 = vpop.f32.mrf.mxu0
      %v1198 = vadd.f32 0.0, %v1197
      %v1199 = vpop.f32.mrf.mxu0
      %1200 = vmatprep.mubr.f32.mxu0 0.0
      %1201 = vmatmul.mubr.f32.gmra.mxu0 %v992
      %v1202 = vpop.f32.mrf.mxu0
      %v1203 = vadd.f32 0.0, %v1202
      %v1204 = vpop.f32.mrf.mxu0
      %1205 = vmatprep.mubr.f32.mxu0 0.0
      %1206 = vmatmul.mubr.f32.gmra.mxu0 %v995
      %v1207 = vpop.f32.mrf.mxu0
      %v1208 = vadd.f32 0.0, %v1207
      %v1209 = vpop.f32.mrf.mxu0
      %1210 = vmatprep.mubr.f32.mxu0 0.0
      %1211 = vmatmul.mubr.f32.gmra.mxu0 %v998
      %v1212 = vpop.f32.mrf.mxu0
      %v1213 = vadd.f32 0.0, %v1212
      %v1214 = vpop.f32.mrf.mxu0
      %1215 = vmatprep.mubr.f32.mxu0 0.0
      %1216 = vmatmul.mubr.f32.gmra.mxu0 %v1001
      %v1217 = vpop.f32.mrf.mxu0
      %v1218 = vadd.f32 0.0, %v1217
      %v1219 = vpop.f32.mrf.mxu0
      %1220 = vmatprep.mubr.f32.mxu0 0.0
      %1221 = vmatmul.mubr.f32.gmra.mxu0 %v1004
      %v1222 = vpop.f32.mrf.mxu0
      %v1223 = vadd.f32 0.0, %v1222
      %v1224 = vpop.f32.mrf.mxu0
      %1225 = vmatprep.mubr.f32.mxu0 0.0
      %1226 = vmatmul.mubr.f32.gmra.mxu0 %v1007
      %v1227 = vpop.f32.mrf.mxu0
      %v1228 = vadd.f32 0.0, %v1227
      %v1229 = vpop.f32.mrf.mxu0
      %1230 = vmatprep.mubr.f32.mxu0 0.0
      %1231 = vmatmul.mubr.f32.gmra.mxu0 %v1010
      %v1232 = vpop.f32.mrf.mxu0
      %v1233 = vadd.f32 0.0, %v1232
      %v1234 = vpop.f32.mrf.mxu0
      %1235 = vmatprep.mubr.f32.mxu0 0.0
      %1236 = vmatmul.mubr.f32.gmra.mxu0 %v1013
      %v1237 = vpop.f32.mrf.mxu0
      %v1238 = vadd.f32 0.0, %v1237
      %v1239 = vpop.f32.mrf.mxu0
      %1240 = vmatprep.mubr.f32.mxu0 0.0
      %1241 = vmatmul.mubr.f32.gmra.mxu0 %v1016
      %v1242 = vpop.f32.mrf.mxu0
      %v1243 = vadd.f32 0.0, %v1242
      %v1244 = vpop.f32.mrf.mxu0
      %1245 = vdwg.mxu0
      %v1246 = vadd.f32 %v730, %v1088
      %v1247 = vadd.f32 %v735, %v1093
      %v1248 = vadd.f32 %v740, %v1098
      %v1249 = vadd.f32 %v745, %v1103
      %v1250 = vadd.f32 %v750, %v1108
      %v1251 = vadd.f32 %v755, %v1113
      %v1252 = vadd.f32 %v760, %v1118
      %v1253 = vadd.f32 %v765, %v1123
      %v1254 = vadd.f32 %v770, %v1128
      %v1255 = vadd.f32 %v775, %v1133
      %v1256 = vadd.f32 %v780, %v1138
      %v1257 = vadd.f32 %v785, %v1143
      %v1258 = vadd.f32 %v790, %v1148
      %v1259 = vadd.f32 %v795, %v1153
      %v1260 = vadd.f32 %v800, %v1158
      %v1261 = vadd.f32 %v805, %v1163
      %v1262 = vadd.f32 %v810, %v1168
      %v1263 = vadd.f32 %v815, %v1173
      %v1264 = vadd.f32 %v820, %v1178
      %v1265 = vadd.f32 %v825, %v1183
      %v1266 = vadd.f32 %v830, %v1188
      %v1267 = vadd.f32 %v835, %v1193
      %v1268 = vadd.f32 %v840, %v1198
      %v1269 = vadd.f32 %v845, %v1203
      %v1270 = vadd.f32 %v850, %v1208
      %v1271 = vadd.f32 %v855, %v1213
      %v1272 = vadd.f32 %v860, %v1218
      %v1273 = vadd.f32 %v865, %v1223
      %v1274 = vadd.f32 %v870, %v1228
      %v1275 = vadd.f32 %v875, %v1233
      %v1276 = vadd.f32 %v880, %v1238
      %v1277 = vadd.f32 %v885, %v1243
      %s1278 = scalar_lea.vmem %s165, 24
      %v1279 = vld [vmem:[%s1278] sm:$0xff]
      %v1280 = vld [vmem:[%s1278 + $0x8] sm:$0xff]
      %v1281 = vld [vmem:[%s1278 + $0x18] sm:$0xff]
      %v1282 = vld [vmem:[%s1278 + $0x20] sm:$0xff]
      %v1283 = vld [vmem:[%s1278 + $0x30] sm:$0xff]
      %v1284 = vld [vmem:[%s1278 + $0x38] sm:$0xff]
      %v1285 = vld [vmem:[%s1278 + $0x48] sm:$0xff]
      %v1286 = vld [vmem:[%s1278 + $0x50] sm:$0xff]
      %v1287 = vld [vmem:[%s1278 + $0x60] sm:$0xff]
      %v1288 = vld [vmem:[%s1278 + $0x68] sm:$0xff]
      %v1289 = vld [vmem:[%s1278 + $0x78] sm:$0xff]
      %v1290 = vld [vmem:[%s1278 + $0x80] sm:$0xff]
      %v1291 = vld [vmem:[%s1278 + $0x90] sm:$0xff]
      %v1292 = vld [vmem:[%s1278 + $0x98] sm:$0xff]
      %v1293 = vld [vmem:[%s1278 + $0xa8] sm:$0xff]
      %v1294 = vld [vmem:[%s1278 + $0xb0] sm:$0xff]
      %v1295 = vld [vmem:[%s1278 + $0xc0] sm:$0xff]
      %v1296 = vld [vmem:[%s1278 + $0xc8] sm:$0xff]
      %v1297 = vld [vmem:[%s1278 + $0xd8] sm:$0xff]
      %v1298 = vld [vmem:[%s1278 + $0xe0] sm:$0xff]
      %v1299 = vld [vmem:[%s1278 + $0xf0] sm:$0xff]
      %v1300 = vld [vmem:[%s1278 + $0xf8] sm:$0xff]
      %v1301 = vld [vmem:[%s1278 + $0x108] sm:$0xff]
      %v1302 = vld [vmem:[%s1278 + $0x110] sm:$0xff]
      %v1303 = vld [vmem:[%s1278 + $0x120] sm:$0xff]
      %v1304 = vld [vmem:[%s1278 + $0x128] sm:$0xff]
      %v1305 = vld [vmem:[%s1278 + $0x138] sm:$0xff]
      %v1306 = vld [vmem:[%s1278 + $0x140] sm:$0xff]
      %v1307 = vld [vmem:[%s1278 + $0x150] sm:$0xff]
      %v1308 = vld [vmem:[%s1278 + $0x158] sm:$0xff]
      %v1309 = vld [vmem:[%s1278 + $0x168] sm:$0xff]
      %v1310 = vld [vmem:[%s1278 + $0x170] sm:$0xff]
      %s1311 = scalar_lea.vmem %s1, 12
      %v1312 = vld [vmem:[%s1311] sm:$0xf]
      %v1314 = vsel %vm238, %v1279, 0
      %v1317 = vsel %vm238, %v1280, 0
      %v1320 = vsel %vm238, %v1281, 0
      %v1323 = vsel %vm238, %v1282, 0
      %v1326 = vsel %vm238, %v1283, 0
      %v1329 = vsel %vm238, %v1284, 0
      %v1332 = vsel %vm238, %v1285, 0
      %v1335 = vsel %vm238, %v1286, 0
      %v1338 = vsel %vm238, %v1287, 0
      %v1341 = vsel %vm238, %v1288, 0
      %v1344 = vsel %vm238, %v1289, 0
      %v1347 = vsel %vm238, %v1290, 0
      %v1350 = vsel %vm238, %v1291, 0
      %v1353 = vsel %vm238, %v1292, 0
      %v1356 = vsel %vm238, %v1293, 0
      %v1359 = vsel %vm238, %v1294, 0
      %v1362 = vsel %vm238, %v1295, 0
      %v1365 = vsel %vm238, %v1296, 0
      %v1368 = vsel %vm238, %v1297, 0
      %v1371 = vsel %vm238, %v1298, 0
      %v1374 = vsel %vm238, %v1299, 0
      %v1377 = vsel %vm238, %v1300, 0
      %v1380 = vsel %vm238, %v1301, 0
      %v1383 = vsel %vm238, %v1302, 0
      %v1386 = vsel %vm238, %v1303, 0
      %v1389 = vsel %vm238, %v1304, 0
      %v1392 = vsel %vm238, %v1305, 0
      %v1395 = vsel %vm238, %v1306, 0
      %v1398 = vsel %vm238, %v1307, 0
      %v1401 = vsel %vm238, %v1308, 0
      %v1404 = vsel %vm238, %v1309, 0
      %v1407 = vsel %vm238, %v1310, 0
      %v1410 = vsel %vm335, %v1312, 0
      %1412 = vmatprep.subr.mxu0 0.0
      %1413 = vmatpush1.msra.mxu0 0.0
      %1414 = vmatprep.subr.mxu0 0.0
      %1415 = vmatpush1.msra.mxu0 0.0
      %1416 = vmatprep.subr.mxu0 0.0
      %1417 = vmatpush1.msra.mxu0 0.0
      %1418 = vmatprep.subr.mxu0 0.0
      %1419 = vmatpush1.msra.mxu0 0.0
      %1420 = vmatprep.subr.mxu0 0.0
      %1421 = vmatpush1.msra.mxu0 0.0
      %1422 = vmatprep.subr.mxu0 0.0
      %1423 = vmatpush1.msra.mxu0 0.0
      %1424 = vmatprep.subr.mxu0 0.0
      %1425 = vmatpush1.msra.mxu0 0.0
      %1426 = vmatprep.subr.mxu0 0.0
      %1427 = vmatpush1.msra.mxu0 0.0
      %1428 = vmatprep.subr.mxu0 0.0
      %1429 = vmatpush1.msra.mxu0 0.0
      %1430 = vmatprep.subr.mxu0 0.0
      %1431 = vmatpush1.msra.mxu0 0.0
      %1432 = vmatprep.subr.mxu0 0.0
      %1433 = vmatpush1.msra.mxu0 0.0
      %1434 = vmatprep.subr.mxu0 0.0
      %1435 = vmatpush1.msra.mxu0 0.0
      %1436 = vmatprep.subr.mxu0 0.0
      %1437 = vmatpush1.msra.mxu0 0.0
      %1438 = vmatprep.subr.mxu0 0.0
      %1439 = vmatpush1.msra.mxu0 0.0
      %1440 = vmatprep.subr.mxu0 0.0
      %1441 = vmatpush1.msra.mxu0 0.0
      %1442 = vmatprep.subr.mxu0 0.0
      %1443 = vmatpush1.msra.mxu0 %v1410
      %1444 = vmatprep.subr.mxu0 0.0
      %1445 = vmatpush2.msra.mxu0 0.0
      %1446 = vmatprep.subr.mxu0 0.0
      %1447 = vmatpush2.msra.mxu0 0.0
      %1448 = vmatprep.subr.mxu0 0.0
      %1449 = vmatpush2.msra.mxu0 0.0
      %1450 = vmatprep.subr.mxu0 0.0
      %1451 = vmatpush2.msra.mxu0 0.0
      %1452 = vmatprep.subr.mxu0 0.0
      %1453 = vmatpush2.msra.mxu0 0.0
      %1454 = vmatprep.subr.mxu0 0.0
      %1455 = vmatpush2.msra.mxu0 0.0
      %1456 = vmatprep.subr.mxu0 0.0
      %1457 = vmatpush2.msra.mxu0 0.0
      %1458 = vmatprep.subr.mxu0 0.0
      %1459 = vmatpush2.msra.mxu0 0.0
      %1460 = vmatprep.subr.mxu0 0.0
      %1461 = vmatpush2.msra.mxu0 0.0
      %1462 = vmatprep.subr.mxu0 0.0
      %1463 = vmatpush2.msra.mxu0 0.0
      %1464 = vmatprep.subr.mxu0 0.0
      %1465 = vmatpush2.msra.mxu0 0.0
      %1466 = vmatprep.subr.mxu0 0.0
      %1467 = vmatpush2.msra.mxu0 0.0
      %1468 = vmatprep.subr.mxu0 0.0
      %1469 = vmatpush2.msra.mxu0 0.0
      %1470 = vmatprep.subr.mxu0 0.0
      %1471 = vmatpush2.msra.mxu0 0.0
      %1472 = vmatprep.subr.mxu0 0.0
      %1473 = vmatpush2.msra.mxu0 0.0
      %1474 = vmatprep.subr.mxu0 0.0
      %1475 = vmatpush2.msra.mxu0 0.0
      %1476 = vmatprep.mubr.f32.mxu0 0.0
      %1477 = vmatmul.mubr.f32.gmra.mxu0 %v1314
      %v1478 = vpop.f32.mrf.mxu0
      %v1479 = vadd.f32 0.0, %v1478
      %v1480 = vpop.f32.mrf.mxu0
      %1481 = vmatprep.mubr.f32.mxu0 0.0
      %1482 = vmatmul.mubr.f32.gmra.mxu0 %v1317
      %v1483 = vpop.f32.mrf.mxu0
      %v1484 = vadd.f32 0.0, %v1483
      %v1485 = vpop.f32.mrf.mxu0
      %1486 = vmatprep.mubr.f32.mxu0 0.0
      %1487 = vmatmul.mubr.f32.gmra.mxu0 %v1320
      %v1488 = vpop.f32.mrf.mxu0
      %v1489 = vadd.f32 0.0, %v1488
      %v1490 = vpop.f32.mrf.mxu0
      %1491 = vmatprep.mubr.f32.mxu0 0.0
      %1492 = vmatmul.mubr.f32.gmra.mxu0 %v1323
      %v1493 = vpop.f32.mrf.mxu0
      %v1494 = vadd.f32 0.0, %v1493
      %v1495 = vpop.f32.mrf.mxu0
      %1496 = vmatprep.mubr.f32.mxu0 0.0
      %1497 = vmatmul.mubr.f32.gmra.mxu0 %v1326
      %v1498 = vpop.f32.mrf.mxu0
      %v1499 = vadd.f32 0.0, %v1498
      %v1500 = vpop.f32.mrf.mxu0
      %1501 = vmatprep.mubr.f32.mxu0 0.0
      %1502 = vmatmul.mubr.f32.gmra.mxu0 %v1329
      %v1503 = vpop.f32.mrf.mxu0
      %v1504 = vadd.f32 0.0, %v1503
      %v1505 = vpop.f32.mrf.mxu0
      %1506 = vmatprep.mubr.f32.mxu0 0.0
      %1507 = vmatmul.mubr.f32.gmra.mxu0 %v1332
      %v1508 = vpop.f32.mrf.mxu0
      %v1509 = vadd.f32 0.0, %v1508
      %v1510 = vpop.f32.mrf.mxu0
      %1511 = vmatprep.mubr.f32.mxu0 0.0
      %1512 = vmatmul.mubr.f32.gmra.mxu0 %v1335
      %v1513 = vpop.f32.mrf.mxu0
      %v1514 = vadd.f32 0.0, %v1513
      %v1515 = vpop.f32.mrf.mxu0
      %1516 = vmatprep.mubr.f32.mxu0 0.0
      %1517 = vmatmul.mubr.f32.gmra.mxu0 %v1338
      %v1518 = vpop.f32.mrf.mxu0
      %v1519 = vadd.f32 0.0, %v1518
      %v1520 = vpop.f32.mrf.mxu0
      %1521 = vmatprep.mubr.f32.mxu0 0.0
      %1522 = vmatmul.mubr.f32.gmra.mxu0 %v1341
      %v1523 = vpop.f32.mrf.mxu0
      %v1524 = vadd.f32 0.0, %v1523
      %v1525 = vpop.f32.mrf.mxu0
      %1526 = vmatprep.mubr.f32.mxu0 0.0
      %1527 = vmatmul.mubr.f32.gmra.mxu0 %v1344
      %v1528 = vpop.f32.mrf.mxu0
      %v1529 = vadd.f32 0.0, %v1528
      %v1530 = vpop.f32.mrf.mxu0
      %1531 = vmatprep.mubr.f32.mxu0 0.0
      %1532 = vmatmul.mubr.f32.gmra.mxu0 %v1347
      %v1533 = vpop.f32.mrf.mxu0
      %v1534 = vadd.f32 0.0, %v1533
      %v1535 = vpop.f32.mrf.mxu0
      %1536 = vmatprep.mubr.f32.mxu0 0.0
      %1537 = vmatmul.mubr.f32.gmra.mxu0 %v1350
      %v1538 = vpop.f32.mrf.mxu0
      %v1539 = vadd.f32 0.0, %v1538
      %v1540 = vpop.f32.mrf.mxu0
      %1541 = vmatprep.mubr.f32.mxu0 0.0
      %1542 = vmatmul.mubr.f32.gmra.mxu0 %v1353
      %v1543 = vpop.f32.mrf.mxu0
      %v1544 = vadd.f32 0.0, %v1543
      %v1545 = vpop.f32.mrf.mxu0
      %1546 = vmatprep.mubr.f32.mxu0 0.0
      %1547 = vmatmul.mubr.f32.gmra.mxu0 %v1356
      %v1548 = vpop.f32.mrf.mxu0
      %v1549 = vadd.f32 0.0, %v1548
      %v1550 = vpop.f32.mrf.mxu0
      %1551 = vmatprep.mubr.f32.mxu0 0.0
      %1552 = vmatmul.mubr.f32.gmra.mxu0 %v1359
      %v1553 = vpop.f32.mrf.mxu0
      %v1554 = vadd.f32 0.0, %v1553
      %v1555 = vpop.f32.mrf.mxu0
      %1556 = vmatprep.mubr.f32.mxu0 0.0
      %1557 = vmatmul.mubr.f32.gmra.mxu0 %v1362
      %v1558 = vpop.f32.mrf.mxu0
      %v1559 = vadd.f32 0.0, %v1558
      %v1560 = vpop.f32.mrf.mxu0
      %1561 = vmatprep.mubr.f32.mxu0 0.0
      %1562 = vmatmul.mubr.f32.gmra.mxu0 %v1365
      %v1563 = vpop.f32.mrf.mxu0
      %v1564 = vadd.f32 0.0, %v1563
      %v1565 = vpop.f32.mrf.mxu0
      %1566 = vmatprep.mubr.f32.mxu0 0.0
      %1567 = vmatmul.mubr.f32.gmra.mxu0 %v1368
      %v1568 = vpop.f32.mrf.mxu0
      %v1569 = vadd.f32 0.0, %v1568
      %v1570 = vpop.f32.mrf.mxu0
      %1571 = vmatprep.mubr.f32.mxu0 0.0
      %1572 = vmatmul.mubr.f32.gmra.mxu0 %v1371
      %v1573 = vpop.f32.mrf.mxu0
      %v1574 = vadd.f32 0.0, %v1573
      %v1575 = vpop.f32.mrf.mxu0
      %1576 = vmatprep.mubr.f32.mxu0 0.0
      %1577 = vmatmul.mubr.f32.gmra.mxu0 %v1374
      %v1578 = vpop.f32.mrf.mxu0
      %v1579 = vadd.f32 0.0, %v1578
      %v1580 = vpop.f32.mrf.mxu0
      %1581 = vmatprep.mubr.f32.mxu0 0.0
      %1582 = vmatmul.mubr.f32.gmra.mxu0 %v1377
      %v1583 = vpop.f32.mrf.mxu0
      %v1584 = vadd.f32 0.0, %v1583
      %v1585 = vpop.f32.mrf.mxu0
      %1586 = vmatprep.mubr.f32.mxu0 0.0
      %1587 = vmatmul.mubr.f32.gmra.mxu0 %v1380
      %v1588 = vpop.f32.mrf.mxu0
      %v1589 = vadd.f32 0.0, %v1588
      %v1590 = vpop.f32.mrf.mxu0
      %1591 = vmatprep.mubr.f32.mxu0 0.0
      %1592 = vmatmul.mubr.f32.gmra.mxu0 %v1383
      %v1593 = vpop.f32.mrf.mxu0
      %v1594 = vadd.f32 0.0, %v1593
      %v1595 = vpop.f32.mrf.mxu0
      %1596 = vmatprep.mubr.f32.mxu0 0.0
      %1597 = vmatmul.mubr.f32.gmra.mxu0 %v1386
      %v1598 = vpop.f32.mrf.mxu0
      %v1599 = vadd.f32 0.0, %v1598
      %v1600 = vpop.f32.mrf.mxu0
      %1601 = vmatprep.mubr.f32.mxu0 0.0
      %1602 = vmatmul.mubr.f32.gmra.mxu0 %v1389
      %v1603 = vpop.f32.mrf.mxu0
      %v1604 = vadd.f32 0.0, %v1603
      %v1605 = vpop.f32.mrf.mxu0
      %1606 = vmatprep.mubr.f32.mxu0 0.0
      %1607 = vmatmul.mubr.f32.gmra.mxu0 %v1392
      %v1608 = vpop.f32.mrf.mxu0
      %v1609 = vadd.f32 0.0, %v1608
      %v1610 = vpop.f32.mrf.mxu0
      %1611 = vmatprep.mubr.f32.mxu0 0.0
      %1612 = vmatmul.mubr.f32.gmra.mxu0 %v1395
      %v1613 = vpop.f32.mrf.mxu0
      %v1614 = vadd.f32 0.0, %v1613
      %v1615 = vpop.f32.mrf.mxu0
      %1616 = vmatprep.mubr.f32.mxu0 0.0
      %1617 = vmatmul.mubr.f32.gmra.mxu0 %v1398
      %v1618 = vpop.f32.mrf.mxu0
      %v1619 = vadd.f32 0.0, %v1618
      %v1620 = vpop.f32.mrf.mxu0
      %1621 = vmatprep.mubr.f32.mxu0 0.0
      %1622 = vmatmul.mubr.f32.gmra.mxu0 %v1401
      %v1623 = vpop.f32.mrf.mxu0
      %v1624 = vadd.f32 0.0, %v1623
      %v1625 = vpop.f32.mrf.mxu0
      %1626 = vmatprep.mubr.f32.mxu0 0.0
      %1627 = vmatmul.mubr.f32.gmra.mxu0 %v1404
      %v1628 = vpop.f32.mrf.mxu0
      %v1629 = vadd.f32 0.0, %v1628
      %v1630 = vpop.f32.mrf.mxu0
      %1631 = vmatprep.mubr.f32.mxu0 0.0
      %1632 = vmatmul.mubr.f32.gmra.mxu0 %v1407
      %v1633 = vpop.f32.mrf.mxu0
      %v1634 = vadd.f32 0.0, %v1633
      %v1635 = vpop.f32.mrf.mxu0
      %1636 = vdwg.mxu0
      %v1637 = vadd.f32 %v1246, %v1479
      %v1638 = vadd.f32 %v1247, %v1484
      %v1639 = vadd.f32 %v1248, %v1489
      %v1640 = vadd.f32 %v1249, %v1494
      %v1641 = vadd.f32 %v1250, %v1499
      %v1642 = vadd.f32 %v1251, %v1504
      %v1643 = vadd.f32 %v1252, %v1509
      %v1644 = vadd.f32 %v1253, %v1514
      %v1645 = vadd.f32 %v1254, %v1519
      %v1646 = vadd.f32 %v1255, %v1524
      %v1647 = vadd.f32 %v1256, %v1529
      %v1648 = vadd.f32 %v1257, %v1534
      %v1649 = vadd.f32 %v1258, %v1539
      %v1650 = vadd.f32 %v1259, %v1544
      %v1651 = vadd.f32 %v1260, %v1549
      %v1652 = vadd.f32 %v1261, %v1554
      %v1653 = vadd.f32 %v1262, %v1559
      %v1654 = vadd.f32 %v1263, %v1564
      %v1655 = vadd.f32 %v1264, %v1569
      %v1656 = vadd.f32 %v1265, %v1574
      %v1657 = vadd.f32 %v1266, %v1579
      %v1658 = vadd.f32 %v1267, %v1584
      %v1659 = vadd.f32 %v1268, %v1589
      %v1660 = vadd.f32 %v1269, %v1594
      %v1661 = vadd.f32 %v1270, %v1599
      %v1662 = vadd.f32 %v1271, %v1604
      %v1663 = vadd.f32 %v1272, %v1609
      %v1664 = vadd.f32 %v1273, %v1614
      %v1665 = vadd.f32 %v1274, %v1619
      %v1666 = vadd.f32 %v1275, %v1624
      %v1667 = vadd.f32 %v1276, %v1629
      %v1668 = vadd.f32 %v1277, %v1634
      %v1669 = vld [vmem:[%s1278 + $0x1] sm:$0xff]
      %v1670 = vld [vmem:[%s1278 + $0x9] sm:$0xff]
      %v1671 = vld [vmem:[%s1278 + $0x19] sm:$0xff]
      %v1672 = vld [vmem:[%s1278 + $0x21] sm:$0xff]
      %v1673 = vld [vmem:[%s1278 + $0x31] sm:$0xff]
      %v1674 = vld [vmem:[%s1278 + $0x39] sm:$0xff]
      %v1675 = vld [vmem:[%s1278 + $0x49] sm:$0xff]
      %v1676 = vld [vmem:[%s1278 + $0x51] sm:$0xff]
      %v1677 = vld [vmem:[%s1278 + $0x61] sm:$0xff]
      %v1678 = vld [vmem:[%s1278 + $0x69] sm:$0xff]
      %v1679 = vld [vmem:[%s1278 + $0x79] sm:$0xff]
      %v1680 = vld [vmem:[%s1278 + $0x81] sm:$0xff]
      %v1681 = vld [vmem:[%s1278 + $0x91] sm:$0xff]
      %v1682 = vld [vmem:[%s1278 + $0x99] sm:$0xff]
      %v1683 = vld [vmem:[%s1278 + $0xa9] sm:$0xff]
      %v1684 = vld [vmem:[%s1278 + $0xb1] sm:$0xff]
      %v1685 = vld [vmem:[%s1278 + $0xc1] sm:$0xff]
      %v1686 = vld [vmem:[%s1278 + $0xc9] sm:$0xff]
      %v1687 = vld [vmem:[%s1278 + $0xd9] sm:$0xff]
      %v1688 = vld [vmem:[%s1278 + $0xe1] sm:$0xff]
      %v1689 = vld [vmem:[%s1278 + $0xf1] sm:$0xff]
      %v1690 = vld [vmem:[%s1278 + $0xf9] sm:$0xff]
      %v1691 = vld [vmem:[%s1278 + $0x109] sm:$0xff]
      %v1692 = vld [vmem:[%s1278 + $0x111] sm:$0xff]
      %v1693 = vld [vmem:[%s1278 + $0x121] sm:$0xff]
      %v1694 = vld [vmem:[%s1278 + $0x129] sm:$0xff]
      %v1695 = vld [vmem:[%s1278 + $0x139] sm:$0xff]
      %v1696 = vld [vmem:[%s1278 + $0x141] sm:$0xff]
      %v1697 = vld [vmem:[%s1278 + $0x151] sm:$0xff]
      %v1698 = vld [vmem:[%s1278 + $0x159] sm:$0xff]
      %v1699 = vld [vmem:[%s1278 + $0x169] sm:$0xff]
      %v1700 = vld [vmem:[%s1278 + $0x171] sm:$0xff]
      %s1701 = scalar_lea.vmem %s1, 16
      %v1702 = vld [vmem:[%s1701] sm:$0xf]
      %v1704 = vsel %vm238, %v1669, 0
      %v1707 = vsel %vm238, %v1670, 0
      %v1710 = vsel %vm238, %v1671, 0
      %v1713 = vsel %vm238, %v1672, 0
      %v1716 = vsel %vm238, %v1673, 0
      %v1719 = vsel %vm238, %v1674, 0
      %v1722 = vsel %vm238, %v1675, 0
      %v1725 = vsel %vm238, %v1676, 0
      %v1728 = vsel %vm238, %v1677, 0
      %v1731 = vsel %vm238, %v1678, 0
      %v1734 = vsel %vm238, %v1679, 0
      %v1737 = vsel %vm238, %v1680, 0
      %v1740 = vsel %vm238, %v1681, 0
      %v1743 = vsel %vm238, %v1682, 0
      %v1746 = vsel %vm238, %v1683, 0
      %v1749 = vsel %vm238, %v1684, 0
      %v1752 = vsel %vm238, %v1685, 0
      %v1755 = vsel %vm238, %v1686, 0
      %v1758 = vsel %vm238, %v1687, 0
      %v1761 = vsel %vm238, %v1688, 0
      %v1764 = vsel %vm238, %v1689, 0
      %v1767 = vsel %vm238, %v1690, 0
      %v1770 = vsel %vm238, %v1691, 0
      %v1773 = vsel %vm238, %v1692, 0
      %v1776 = vsel %vm238, %v1693, 0
      %v1779 = vsel %vm238, %v1694, 0
      %v1782 = vsel %vm238, %v1695, 0
      %v1785 = vsel %vm238, %v1696, 0
      %v1788 = vsel %vm238, %v1697, 0
      %v1791 = vsel %vm238, %v1698, 0
      %v1794 = vsel %vm238, %v1699, 0
      %v1797 = vsel %vm238, %v1700, 0
      %v1800 = vsel %vm335, %v1702, 0
      %1802 = vmatprep.subr.mxu0 0.0
      %1803 = vmatpush1.msra.mxu0 0.0
      %1804 = vmatprep.subr.mxu0 0.0
      %1805 = vmatpush1.msra.mxu0 0.0
      %1806 = vmatprep.subr.mxu0 0.0
      %1807 = vmatpush1.msra.mxu0 0.0
      %1808 = vmatprep.subr.mxu0 0.0
      %1809 = vmatpush1.msra.mxu0 0.0
      %1810 = vmatprep.subr.mxu0 0.0
      %1811 = vmatpush1.msra.mxu0 0.0
      %1812 = vmatprep.subr.mxu0 0.0
      %1813 = vmatpush1.msra.mxu0 0.0
      %1814 = vmatprep.subr.mxu0 0.0
      %1815 = vmatpush1.msra.mxu0 0.0
      %1816 = vmatprep.subr.mxu0 0.0
      %1817 = vmatpush1.msra.mxu0 0.0
      %1818 = vmatprep.subr.mxu0 0.0
      %1819 = vmatpush1.msra.mxu0 0.0
      %1820 = vmatprep.subr.mxu0 0.0
      %1821 = vmatpush1.msra.mxu0 0.0
      %1822 = vmatprep.subr.mxu0 0.0
      %1823 = vmatpush1.msra.mxu0 0.0
      %1824 = vmatprep.subr.mxu0 0.0
      %1825 = vmatpush1.msra.mxu0 0.0
      %1826 = vmatprep.subr.mxu0 0.0
      %1827 = vmatpush1.msra.mxu0 0.0
      %1828 = vmatprep.subr.mxu0 0.0
      %1829 = vmatpush1.msra.mxu0 0.0
      %1830 = vmatprep.subr.mxu0 0.0
      %1831 = vmatpush1.msra.mxu0 0.0
      %1832 = vmatprep.subr.mxu0 0.0
      %1833 = vmatpush1.msra.mxu0 %v1800
      %1834 = vmatprep.subr.mxu0 0.0
      %1835 = vmatpush2.msra.mxu0 0.0
      %1836 = vmatprep.subr.mxu0 0.0
      %1837 = vmatpush2.msra.mxu0 0.0
      %1838 = vmatprep.subr.mxu0 0.0
      %1839 = vmatpush2.msra.mxu0 0.0
      %1840 = vmatprep.subr.mxu0 0.0
      %1841 = vmatpush2.msra.mxu0 0.0
      %1842 = vmatprep.subr.mxu0 0.0
      %1843 = vmatpush2.msra.mxu0 0.0
      %1844 = vmatprep.subr.mxu0 0.0
      %1845 = vmatpush2.msra.mxu0 0.0
      %1846 = vmatprep.subr.mxu0 0.0
      %1847 = vmatpush2.msra.mxu0 0.0
      %1848 = vmatprep.subr.mxu0 0.0
      %1849 = vmatpush2.msra.mxu0 0.0
      %1850 = vmatprep.subr.mxu0 0.0
      %1851 = vmatpush2.msra.mxu0 0.0
      %1852 = vmatprep.subr.mxu0 0.0
      %1853 = vmatpush2.msra.mxu0 0.0
      %1854 = vmatprep.subr.mxu0 0.0
      %1855 = vmatpush2.msra.mxu0 0.0
      %1856 = vmatprep.subr.mxu0 0.0
      %1857 = vmatpush2.msra.mxu0 0.0
      %1858 = vmatprep.subr.mxu0 0.0
      %1859 = vmatpush2.msra.mxu0 0.0
      %1860 = vmatprep.subr.mxu0 0.0
      %1861 = vmatpush2.msra.mxu0 0.0
      %1862 = vmatprep.subr.mxu0 0.0
      %1863 = vmatpush2.msra.mxu0 0.0
      %1864 = vmatprep.subr.mxu0 0.0
      %1865 = vmatpush2.msra.mxu0 0.0
      %1866 = vmatprep.mubr.f32.mxu0 0.0
      %1867 = vmatmul.mubr.f32.gmra.mxu0 %v1704
      %v1868 = vpop.f32.mrf.mxu0
      %v1869 = vadd.f32 0.0, %v1868
      %v1870 = vpop.f32.mrf.mxu0
      %1871 = vmatprep.mubr.f32.mxu0 0.0
      %1872 = vmatmul.mubr.f32.gmra.mxu0 %v1707
      %v1873 = vpop.f32.mrf.mxu0
      %v1874 = vadd.f32 0.0, %v1873
      %v1875 = vpop.f32.mrf.mxu0
      %1876 = vmatprep.mubr.f32.mxu0 0.0
      %1877 = vmatmul.mubr.f32.gmra.mxu0 %v1710
      %v1878 = vpop.f32.mrf.mxu0
      %v1879 = vadd.f32 0.0, %v1878
      %v1880 = vpop.f32.mrf.mxu0
      %1881 = vmatprep.mubr.f32.mxu0 0.0
      %1882 = vmatmul.mubr.f32.gmra.mxu0 %v1713
      %v1883 = vpop.f32.mrf.mxu0
      %v1884 = vadd.f32 0.0, %v1883
      %v1885 = vpop.f32.mrf.mxu0
      %1886 = vmatprep.mubr.f32.mxu0 0.0
      %1887 = vmatmul.mubr.f32.gmra.mxu0 %v1716
      %v1888 = vpop.f32.mrf.mxu0
      %v1889 = vadd.f32 0.0, %v1888
      %v1890 = vpop.f32.mrf.mxu0
      %1891 = vmatprep.mubr.f32.mxu0 0.0
      %1892 = vmatmul.mubr.f32.gmra.mxu0 %v1719
      %v1893 = vpop.f32.mrf.mxu0
      %v1894 = vadd.f32 0.0, %v1893
      %v1895 = vpop.f32.mrf.mxu0
      %1896 = vmatprep.mubr.f32.mxu0 0.0
      %1897 = vmatmul.mubr.f32.gmra.mxu0 %v1722
      %v1898 = vpop.f32.mrf.mxu0
      %v1899 = vadd.f32 0.0, %v1898
      %v1900 = vpop.f32.mrf.mxu0
      %1901 = vmatprep.mubr.f32.mxu0 0.0
      %1902 = vmatmul.mubr.f32.gmra.mxu0 %v1725
      %v1903 = vpop.f32.mrf.mxu0
      %v1904 = vadd.f32 0.0, %v1903
      %v1905 = vpop.f32.mrf.mxu0
      %1906 = vmatprep.mubr.f32.mxu0 0.0
      %1907 = vmatmul.mubr.f32.gmra.mxu0 %v1728
      %v1908 = vpop.f32.mrf.mxu0
      %v1909 = vadd.f32 0.0, %v1908
      %v1910 = vpop.f32.mrf.mxu0
      %1911 = vmatprep.mubr.f32.mxu0 0.0
      %1912 = vmatmul.mubr.f32.gmra.mxu0 %v1731
      %v1913 = vpop.f32.mrf.mxu0
      %v1914 = vadd.f32 0.0, %v1913
      %v1915 = vpop.f32.mrf.mxu0
      %1916 = vmatprep.mubr.f32.mxu0 0.0
      %1917 = vmatmul.mubr.f32.gmra.mxu0 %v1734
      %v1918 = vpop.f32.mrf.mxu0
      %v1919 = vadd.f32 0.0, %v1918
      %v1920 = vpop.f32.mrf.mxu0
      %1921 = vmatprep.mubr.f32.mxu0 0.0
      %1922 = vmatmul.mubr.f32.gmra.mxu0 %v1737
      %v1923 = vpop.f32.mrf.mxu0
      %v1924 = vadd.f32 0.0, %v1923
      %v1925 = vpop.f32.mrf.mxu0
      %1926 = vmatprep.mubr.f32.mxu0 0.0
      %1927 = vmatmul.mubr.f32.gmra.mxu0 %v1740
      %v1928 = vpop.f32.mrf.mxu0
      %v1929 = vadd.f32 0.0, %v1928
      %v1930 = vpop.f32.mrf.mxu0
      %1931 = vmatprep.mubr.f32.mxu0 0.0
      %1932 = vmatmul.mubr.f32.gmra.mxu0 %v1743
      %v1933 = vpop.f32.mrf.mxu0
      %v1934 = vadd.f32 0.0, %v1933
      %v1935 = vpop.f32.mrf.mxu0
      %1936 = vmatprep.mubr.f32.mxu0 0.0
      %1937 = vmatmul.mubr.f32.gmra.mxu0 %v1746
      %v1938 = vpop.f32.mrf.mxu0
      %v1939 = vadd.f32 0.0, %v1938
      %v1940 = vpop.f32.mrf.mxu0
      %1941 = vmatprep.mubr.f32.mxu0 0.0
      %1942 = vmatmul.mubr.f32.gmra.mxu0 %v1749
      %v1943 = vpop.f32.mrf.mxu0
      %v1944 = vadd.f32 0.0, %v1943
      %v1945 = vpop.f32.mrf.mxu0
      %1946 = vmatprep.mubr.f32.mxu0 0.0
      %1947 = vmatmul.mubr.f32.gmra.mxu0 %v1752
      %v1948 = vpop.f32.mrf.mxu0
      %v1949 = vadd.f32 0.0, %v1948
      %v1950 = vpop.f32.mrf.mxu0
      %1951 = vmatprep.mubr.f32.mxu0 0.0
      %1952 = vmatmul.mubr.f32.gmra.mxu0 %v1755
      %v1953 = vpop.f32.mrf.mxu0
      %v1954 = vadd.f32 0.0, %v1953
      %v1955 = vpop.f32.mrf.mxu0
      %1956 = vmatprep.mubr.f32.mxu0 0.0
      %1957 = vmatmul.mubr.f32.gmra.mxu0 %v1758
      %v1958 = vpop.f32.mrf.mxu0
      %v1959 = vadd.f32 0.0, %v1958
      %v1960 = vpop.f32.mrf.mxu0
      %1961 = vmatprep.mubr.f32.mxu0 0.0
      %1962 = vmatmul.mubr.f32.gmra.mxu0 %v1761
      %v1963 = vpop.f32.mrf.mxu0
      %v1964 = vadd.f32 0.0, %v1963
      %v1965 = vpop.f32.mrf.mxu0
      %1966 = vmatprep.mubr.f32.mxu0 0.0
      %1967 = vmatmul.mubr.f32.gmra.mxu0 %v1764
      %v1968 = vpop.f32.mrf.mxu0
      %v1969 = vadd.f32 0.0, %v1968
      %v1970 = vpop.f32.mrf.mxu0
      %1971 = vmatprep.mubr.f32.mxu0 0.0
      %1972 = vmatmul.mubr.f32.gmra.mxu0 %v1767
      %v1973 = vpop.f32.mrf.mxu0
      %v1974 = vadd.f32 0.0, %v1973
      %v1975 = vpop.f32.mrf.mxu0
      %1976 = vmatprep.mubr.f32.mxu0 0.0
      %1977 = vmatmul.mubr.f32.gmra.mxu0 %v1770
      %v1978 = vpop.f32.mrf.mxu0
      %v1979 = vadd.f32 0.0, %v1978
      %v1980 = vpop.f32.mrf.mxu0
      %1981 = vmatprep.mubr.f32.mxu0 0.0
      %1982 = vmatmul.mubr.f32.gmra.mxu0 %v1773
      %v1983 = vpop.f32.mrf.mxu0
      %v1984 = vadd.f32 0.0, %v1983
      %v1985 = vpop.f32.mrf.mxu0
      %1986 = vmatprep.mubr.f32.mxu0 0.0
      %1987 = vmatmul.mubr.f32.gmra.mxu0 %v1776
      %v1988 = vpop.f32.mrf.mxu0
      %v1989 = vadd.f32 0.0, %v1988
      %v1990 = vpop.f32.mrf.mxu0
      %1991 = vmatprep.mubr.f32.mxu0 0.0
      %1992 = vmatmul.mubr.f32.gmra.mxu0 %v1779
      %v1993 = vpop.f32.mrf.mxu0
      %v1994 = vadd.f32 0.0, %v1993
      %v1995 = vpop.f32.mrf.mxu0
      %1996 = vmatprep.mubr.f32.mxu0 0.0
      %1997 = vmatmul.mubr.f32.gmra.mxu0 %v1782
      %v1998 = vpop.f32.mrf.mxu0
      %v1999 = vadd.f32 0.0, %v1998
      %v2000 = vpop.f32.mrf.mxu0
      %2001 = vmatprep.mubr.f32.mxu0 0.0
      %2002 = vmatmul.mubr.f32.gmra.mxu0 %v1785
      %v2003 = vpop.f32.mrf.mxu0
      %v2004 = vadd.f32 0.0, %v2003
      %v2005 = vpop.f32.mrf.mxu0
      %2006 = vmatprep.mubr.f32.mxu0 0.0
      %2007 = vmatmul.mubr.f32.gmra.mxu0 %v1788
      %v2008 = vpop.f32.mrf.mxu0
      %v2009 = vadd.f32 0.0, %v2008
      %v2010 = vpop.f32.mrf.mxu0
      %2011 = vmatprep.mubr.f32.mxu0 0.0
      %2012 = vmatmul.mubr.f32.gmra.mxu0 %v1791
      %v2013 = vpop.f32.mrf.mxu0
      %v2014 = vadd.f32 0.0, %v2013
      %v2015 = vpop.f32.mrf.mxu0
      %2016 = vmatprep.mubr.f32.mxu0 0.0
      %2017 = vmatmul.mubr.f32.gmra.mxu0 %v1794
      %v2018 = vpop.f32.mrf.mxu0
      %v2019 = vadd.f32 0.0, %v2018
      %v2020 = vpop.f32.mrf.mxu0
      %2021 = vmatprep.mubr.f32.mxu0 0.0
      %2022 = vmatmul.mubr.f32.gmra.mxu0 %v1797
      %v2023 = vpop.f32.mrf.mxu0
      %v2024 = vadd.f32 0.0, %v2023
      %v2025 = vpop.f32.mrf.mxu0
      %2026 = vdwg.mxu0
      %v2027 = vadd.f32 %v1637, %v1869
      %v2028 = vadd.f32 %v1638, %v1874
      %v2029 = vadd.f32 %v1639, %v1879
      %v2030 = vadd.f32 %v1640, %v1884
      %v2031 = vadd.f32 %v1641, %v1889
      %v2032 = vadd.f32 %v1642, %v1894
      %v2033 = vadd.f32 %v1643, %v1899
      %v2034 = vadd.f32 %v1644, %v1904
      %v2035 = vadd.f32 %v1645, %v1909
      %v2036 = vadd.f32 %v1646, %v1914
      %v2037 = vadd.f32 %v1647, %v1919
      %v2038 = vadd.f32 %v1648, %v1924
      %v2039 = vadd.f32 %v1649, %v1929
      %v2040 = vadd.f32 %v1650, %v1934
      %v2041 = vadd.f32 %v1651, %v1939
      %v2042 = vadd.f32 %v1652, %v1944
      %v2043 = vadd.f32 %v1653, %v1949
      %v2044 = vadd.f32 %v1654, %v1954
      %v2045 = vadd.f32 %v1655, %v1959
      %v2046 = vadd.f32 %v1656, %v1964
      %v2047 = vadd.f32 %v1657, %v1969
      %v2048 = vadd.f32 %v1658, %v1974
      %v2049 = vadd.f32 %v1659, %v1979
      %v2050 = vadd.f32 %v1660, %v1984
      %v2051 = vadd.f32 %v1661, %v1989
      %v2052 = vadd.f32 %v1662, %v1994
      %v2053 = vadd.f32 %v1663, %v1999
      %v2054 = vadd.f32 %v1664, %v2004
      %v2055 = vadd.f32 %v1665, %v2009
      %v2056 = vadd.f32 %v1666, %v2014
      %v2057 = vadd.f32 %v1667, %v2019
      %v2058 = vadd.f32 %v1668, %v2024
      %v2059 = vld [vmem:[%s1278 + $0x2] sm:$0xff]
      %v2060 = vld [vmem:[%s1278 + $0xa] sm:$0xff]
      %v2061 = vld [vmem:[%s1278 + $0x1a] sm:$0xff]
      %v2062 = vld [vmem:[%s1278 + $0x22] sm:$0xff]
      %v2063 = vld [vmem:[%s1278 + $0x32] sm:$0xff]
      %v2064 = vld [vmem:[%s1278 + $0x3a] sm:$0xff]
      %v2065 = vld [vmem:[%s1278 + $0x4a] sm:$0xff]
      %v2066 = vld [vmem:[%s1278 + $0x52] sm:$0xff]
      %v2067 = vld [vmem:[%s1278 + $0x62] sm:$0xff]
      %v2068 = vld [vmem:[%s1278 + $0x6a] sm:$0xff]
      %v2069 = vld [vmem:[%s1278 + $0x7a] sm:$0xff]
      %v2070 = vld [vmem:[%s1278 + $0x82] sm:$0xff]
      %v2071 = vld [vmem:[%s1278 + $0x92] sm:$0xff]
      %v2072 = vld [vmem:[%s1278 + $0x9a] sm:$0xff]
      %v2073 = vld [vmem:[%s1278 + $0xaa] sm:$0xff]
      %v2074 = vld [vmem:[%s1278 + $0xb2] sm:$0xff]
      %v2075 = vld [vmem:[%s1278 + $0xc2] sm:$0xff]
      %v2076 = vld [vmem:[%s1278 + $0xca] sm:$0xff]
      %v2077 = vld [vmem:[%s1278 + $0xda] sm:$0xff]
      %v2078 = vld [vmem:[%s1278 + $0xe2] sm:$0xff]
      %v2079 = vld [vmem:[%s1278 + $0xf2] sm:$0xff]
      %v2080 = vld [vmem:[%s1278 + $0xfa] sm:$0xff]
      %v2081 = vld [vmem:[%s1278 + $0x10a] sm:$0xff]
      %v2082 = vld [vmem:[%s1278 + $0x112] sm:$0xff]
      %v2083 = vld [vmem:[%s1278 + $0x122] sm:$0xff]
      %v2084 = vld [vmem:[%s1278 + $0x12a] sm:$0xff]
      %v2085 = vld [vmem:[%s1278 + $0x13a] sm:$0xff]
      %v2086 = vld [vmem:[%s1278 + $0x142] sm:$0xff]
      %v2087 = vld [vmem:[%s1278 + $0x152] sm:$0xff]
      %v2088 = vld [vmem:[%s1278 + $0x15a] sm:$0xff]
      %v2089 = vld [vmem:[%s1278 + $0x16a] sm:$0xff]
      %v2090 = vld [vmem:[%s1278 + $0x172] sm:$0xff]
      %s2091 = scalar_lea.vmem %s1, 20
      %v2092 = vld [vmem:[%s2091] sm:$0xf]
      %v2094 = vsel %vm238, %v2059, 0
      %v2097 = vsel %vm238, %v2060, 0
      %v2100 = vsel %vm238, %v2061, 0
      %v2103 = vsel %vm238, %v2062, 0
      %v2106 = vsel %vm238, %v2063, 0
      %v2109 = vsel %vm238, %v2064, 0
      %v2112 = vsel %vm238, %v2065, 0
      %v2115 = vsel %vm238, %v2066, 0
      %v2118 = vsel %vm238, %v2067, 0
      %v2121 = vsel %vm238, %v2068, 0
      %v2124 = vsel %vm238, %v2069, 0
      %v2127 = vsel %vm238, %v2070, 0
      %v2130 = vsel %vm238, %v2071, 0
      %v2133 = vsel %vm238, %v2072, 0
      %v2136 = vsel %vm238, %v2073, 0
      %v2139 = vsel %vm238, %v2074, 0
      %v2142 = vsel %vm238, %v2075, 0
      %v2145 = vsel %vm238, %v2076, 0
      %v2148 = vsel %vm238, %v2077, 0
      %v2151 = vsel %vm238, %v2078, 0
      %v2154 = vsel %vm238, %v2079, 0
      %v2157 = vsel %vm238, %v2080, 0
      %v2160 = vsel %vm238, %v2081, 0
      %v2163 = vsel %vm238, %v2082, 0
      %v2166 = vsel %vm238, %v2083, 0
      %v2169 = vsel %vm238, %v2084, 0
      %v2172 = vsel %vm238, %v2085, 0
      %v2175 = vsel %vm238, %v2086, 0
      %v2178 = vsel %vm238, %v2087, 0
      %v2181 = vsel %vm238, %v2088, 0
      %v2184 = vsel %vm238, %v2089, 0
      %v2187 = vsel %vm238, %v2090, 0
      %v2190 = vsel %vm335, %v2092, 0
      %2192 = vmatprep.subr.mxu0 0.0
      %2193 = vmatpush1.msra.mxu0 0.0
      %2194 = vmatprep.subr.mxu0 0.0
      %2195 = vmatpush1.msra.mxu0 0.0
      %2196 = vmatprep.subr.mxu0 0.0
      %2197 = vmatpush1.msra.mxu0 0.0
      %2198 = vmatprep.subr.mxu0 0.0
      %2199 = vmatpush1.msra.mxu0 0.0
      %2200 = vmatprep.subr.mxu0 0.0
      %2201 = vmatpush1.msra.mxu0 0.0
      %2202 = vmatprep.subr.mxu0 0.0
      %2203 = vmatpush1.msra.mxu0 0.0
      %2204 = vmatprep.subr.mxu0 0.0
      %2205 = vmatpush1.msra.mxu0 0.0
      %2206 = vmatprep.subr.mxu0 0.0
      %2207 = vmatpush1.msra.mxu0 0.0
      %2208 = vmatprep.subr.mxu0 0.0
      %2209 = vmatpush1.msra.mxu0 0.0
      %2210 = vmatprep.subr.mxu0 0.0
      %2211 = vmatpush1.msra.mxu0 0.0
      %2212 = vmatprep.subr.mxu0 0.0
      %2213 = vmatpush1.msra.mxu0 0.0
      %2214 = vmatprep.subr.mxu0 0.0
      %2215 = vmatpush1.msra.mxu0 0.0
      %2216 = vmatprep.subr.mxu0 0.0
      %2217 = vmatpush1.msra.mxu0 0.0
      %2218 = vmatprep.subr.mxu0 0.0
      %2219 = vmatpush1.msra.mxu0 0.0
      %2220 = vmatprep.subr.mxu0 0.0
      %2221 = vmatpush1.msra.mxu0 0.0
      %2222 = vmatprep.subr.mxu0 0.0
      %2223 = vmatpush1.msra.mxu0 %v2190
      %2224 = vmatprep.subr.mxu0 0.0
      %2225 = vmatpush2.msra.mxu0 0.0
      %2226 = vmatprep.subr.mxu0 0.0
      %2227 = vmatpush2.msra.mxu0 0.0
      %2228 = vmatprep.subr.mxu0 0.0
      %2229 = vmatpush2.msra.mxu0 0.0
      %2230 = vmatprep.subr.mxu0 0.0
      %2231 = vmatpush2.msra.mxu0 0.0
      %2232 = vmatprep.subr.mxu0 0.0
      %2233 = vmatpush2.msra.mxu0 0.0
      %2234 = vmatprep.subr.mxu0 0.0
      %2235 = vmatpush2.msra.mxu0 0.0
      %2236 = vmatprep.subr.mxu0 0.0
      %2237 = vmatpush2.msra.mxu0 0.0
      %2238 = vmatprep.subr.mxu0 0.0
      %2239 = vmatpush2.msra.mxu0 0.0
      %2240 = vmatprep.subr.mxu0 0.0
      %2241 = vmatpush2.msra.mxu0 0.0
      %2242 = vmatprep.subr.mxu0 0.0
      %2243 = vmatpush2.msra.mxu0 0.0
      %2244 = vmatprep.subr.mxu0 0.0
      %2245 = vmatpush2.msra.mxu0 0.0
      %2246 = vmatprep.subr.mxu0 0.0
      %2247 = vmatpush2.msra.mxu0 0.0
      %2248 = vmatprep.subr.mxu0 0.0
      %2249 = vmatpush2.msra.mxu0 0.0
      %2250 = vmatprep.subr.mxu0 0.0
      %2251 = vmatpush2.msra.mxu0 0.0
      %2252 = vmatprep.subr.mxu0 0.0
      %2253 = vmatpush2.msra.mxu0 0.0
      %2254 = vmatprep.subr.mxu0 0.0
      %2255 = vmatpush2.msra.mxu0 0.0
      %2256 = vmatprep.mubr.f32.mxu0 0.0
      %2257 = vmatmul.mubr.f32.gmra.mxu0 %v2094
      %v2258 = vpop.f32.mrf.mxu0
      %v2259 = vadd.f32 0.0, %v2258
      %v2260 = vpop.f32.mrf.mxu0
      %2261 = vmatprep.mubr.f32.mxu0 0.0
      %2262 = vmatmul.mubr.f32.gmra.mxu0 %v2097
      %v2263 = vpop.f32.mrf.mxu0
      %v2264 = vadd.f32 0.0, %v2263
      %v2265 = vpop.f32.mrf.mxu0
      %2266 = vmatprep.mubr.f32.mxu0 0.0
      %2267 = vmatmul.mubr.f32.gmra.mxu0 %v2100
      %v2268 = vpop.f32.mrf.mxu0
      %v2269 = vadd.f32 0.0, %v2268
      %v2270 = vpop.f32.mrf.mxu0
      %2271 = vmatprep.mubr.f32.mxu0 0.0
      %2272 = vmatmul.mubr.f32.gmra.mxu0 %v2103
      %v2273 = vpop.f32.mrf.mxu0
      %v2274 = vadd.f32 0.0, %v2273
      %v2275 = vpop.f32.mrf.mxu0
      %2276 = vmatprep.mubr.f32.mxu0 0.0
      %2277 = vmatmul.mubr.f32.gmra.mxu0 %v2106
      %v2278 = vpop.f32.mrf.mxu0
      %v2279 = vadd.f32 0.0, %v2278
      %v2280 = vpop.f32.mrf.mxu0
      %2281 = vmatprep.mubr.f32.mxu0 0.0
      %2282 = vmatmul.mubr.f32.gmra.mxu0 %v2109
      %v2283 = vpop.f32.mrf.mxu0
      %v2284 = vadd.f32 0.0, %v2283
      %v2285 = vpop.f32.mrf.mxu0
      %2286 = vmatprep.mubr.f32.mxu0 0.0
      %2287 = vmatmul.mubr.f32.gmra.mxu0 %v2112
      %v2288 = vpop.f32.mrf.mxu0
      %v2289 = vadd.f32 0.0, %v2288
      %v2290 = vpop.f32.mrf.mxu0
      %2291 = vmatprep.mubr.f32.mxu0 0.0
      %2292 = vmatmul.mubr.f32.gmra.mxu0 %v2115
      %v2293 = vpop.f32.mrf.mxu0
      %v2294 = vadd.f32 0.0, %v2293
      %v2295 = vpop.f32.mrf.mxu0
      %2296 = vmatprep.mubr.f32.mxu0 0.0
      %2297 = vmatmul.mubr.f32.gmra.mxu0 %v2118
      %v2298 = vpop.f32.mrf.mxu0
      %v2299 = vadd.f32 0.0, %v2298
      %v2300 = vpop.f32.mrf.mxu0
      %2301 = vmatprep.mubr.f32.mxu0 0.0
      %2302 = vmatmul.mubr.f32.gmra.mxu0 %v2121
      %v2303 = vpop.f32.mrf.mxu0
      %v2304 = vadd.f32 0.0, %v2303
      %v2305 = vpop.f32.mrf.mxu0
      %2306 = vmatprep.mubr.f32.mxu0 0.0
      %2307 = vmatmul.mubr.f32.gmra.mxu0 %v2124
      %v2308 = vpop.f32.mrf.mxu0
      %v2309 = vadd.f32 0.0, %v2308
      %v2310 = vpop.f32.mrf.mxu0
      %2311 = vmatprep.mubr.f32.mxu0 0.0
      %2312 = vmatmul.mubr.f32.gmra.mxu0 %v2127
      %v2313 = vpop.f32.mrf.mxu0
      %v2314 = vadd.f32 0.0, %v2313
      %v2315 = vpop.f32.mrf.mxu0
      %2316 = vmatprep.mubr.f32.mxu0 0.0
      %2317 = vmatmul.mubr.f32.gmra.mxu0 %v2130
      %v2318 = vpop.f32.mrf.mxu0
      %v2319 = vadd.f32 0.0, %v2318
      %v2320 = vpop.f32.mrf.mxu0
      %2321 = vmatprep.mubr.f32.mxu0 0.0
      %2322 = vmatmul.mubr.f32.gmra.mxu0 %v2133
      %v2323 = vpop.f32.mrf.mxu0
      %v2324 = vadd.f32 0.0, %v2323
      %v2325 = vpop.f32.mrf.mxu0
      %2326 = vmatprep.mubr.f32.mxu0 0.0
      %2327 = vmatmul.mubr.f32.gmra.mxu0 %v2136
      %v2328 = vpop.f32.mrf.mxu0
      %v2329 = vadd.f32 0.0, %v2328
      %v2330 = vpop.f32.mrf.mxu0
      %2331 = vmatprep.mubr.f32.mxu0 0.0
      %2332 = vmatmul.mubr.f32.gmra.mxu0 %v2139
      %v2333 = vpop.f32.mrf.mxu0
      %v2334 = vadd.f32 0.0, %v2333
      %v2335 = vpop.f32.mrf.mxu0
      %2336 = vmatprep.mubr.f32.mxu0 0.0
      %2337 = vmatmul.mubr.f32.gmra.mxu0 %v2142
      %v2338 = vpop.f32.mrf.mxu0
      %v2339 = vadd.f32 0.0, %v2338
      %v2340 = vpop.f32.mrf.mxu0
      %2341 = vmatprep.mubr.f32.mxu0 0.0
      %2342 = vmatmul.mubr.f32.gmra.mxu0 %v2145
      %v2343 = vpop.f32.mrf.mxu0
      %v2344 = vadd.f32 0.0, %v2343
      %v2345 = vpop.f32.mrf.mxu0
      %2346 = vmatprep.mubr.f32.mxu0 0.0
      %2347 = vmatmul.mubr.f32.gmra.mxu0 %v2148
      %v2348 = vpop.f32.mrf.mxu0
      %v2349 = vadd.f32 0.0, %v2348
      %v2350 = vpop.f32.mrf.mxu0
      %2351 = vmatprep.mubr.f32.mxu0 0.0
      %2352 = vmatmul.mubr.f32.gmra.mxu0 %v2151
      %v2353 = vpop.f32.mrf.mxu0
      %v2354 = vadd.f32 0.0, %v2353
      %v2355 = vpop.f32.mrf.mxu0
      %2356 = vmatprep.mubr.f32.mxu0 0.0
      %2357 = vmatmul.mubr.f32.gmra.mxu0 %v2154
      %v2358 = vpop.f32.mrf.mxu0
      %v2359 = vadd.f32 0.0, %v2358
      %v2360 = vpop.f32.mrf.mxu0
      %2361 = vmatprep.mubr.f32.mxu0 0.0
      %2362 = vmatmul.mubr.f32.gmra.mxu0 %v2157
      %v2363 = vpop.f32.mrf.mxu0
      %v2364 = vadd.f32 0.0, %v2363
      %v2365 = vpop.f32.mrf.mxu0
      %2366 = vmatprep.mubr.f32.mxu0 0.0
      %2367 = vmatmul.mubr.f32.gmra.mxu0 %v2160
      %v2368 = vpop.f32.mrf.mxu0
      %v2369 = vadd.f32 0.0, %v2368
      %v2370 = vpop.f32.mrf.mxu0
      %2371 = vmatprep.mubr.f32.mxu0 0.0
      %2372 = vmatmul.mubr.f32.gmra.mxu0 %v2163
      %v2373 = vpop.f32.mrf.mxu0
      %v2374 = vadd.f32 0.0, %v2373
      %v2375 = vpop.f32.mrf.mxu0
      %2376 = vmatprep.mubr.f32.mxu0 0.0
      %2377 = vmatmul.mubr.f32.gmra.mxu0 %v2166
      %v2378 = vpop.f32.mrf.mxu0
      %v2379 = vadd.f32 0.0, %v2378
      %v2380 = vpop.f32.mrf.mxu0
      %2381 = vmatprep.mubr.f32.mxu0 0.0
      %2382 = vmatmul.mubr.f32.gmra.mxu0 %v2169
      %v2383 = vpop.f32.mrf.mxu0
      %v2384 = vadd.f32 0.0, %v2383
      %v2385 = vpop.f32.mrf.mxu0
      %2386 = vmatprep.mubr.f32.mxu0 0.0
      %2387 = vmatmul.mubr.f32.gmra.mxu0 %v2172
      %v2388 = vpop.f32.mrf.mxu0
      %v2389 = vadd.f32 0.0, %v2388
      %v2390 = vpop.f32.mrf.mxu0
      %2391 = vmatprep.mubr.f32.mxu0 0.0
      %2392 = vmatmul.mubr.f32.gmra.mxu0 %v2175
      %v2393 = vpop.f32.mrf.mxu0
      %v2394 = vadd.f32 0.0, %v2393
      %v2395 = vpop.f32.mrf.mxu0
      %2396 = vmatprep.mubr.f32.mxu0 0.0
      %2397 = vmatmul.mubr.f32.gmra.mxu0 %v2178
      %v2398 = vpop.f32.mrf.mxu0
      %v2399 = vadd.f32 0.0, %v2398
      %v2400 = vpop.f32.mrf.mxu0
      %2401 = vmatprep.mubr.f32.mxu0 0.0
      %2402 = vmatmul.mubr.f32.gmra.mxu0 %v2181
      %v2403 = vpop.f32.mrf.mxu0
      %v2404 = vadd.f32 0.0, %v2403
      %v2405 = vpop.f32.mrf.mxu0
      %2406 = vmatprep.mubr.f32.mxu0 0.0
      %2407 = vmatmul.mubr.f32.gmra.mxu0 %v2184
      %v2408 = vpop.f32.mrf.mxu0
      %v2409 = vadd.f32 0.0, %v2408
      %v2410 = vpop.f32.mrf.mxu0
      %2411 = vmatprep.mubr.f32.mxu0 0.0
      %2412 = vmatmul.mubr.f32.gmra.mxu0 %v2187
      %v2413 = vpop.f32.mrf.mxu0
      %v2414 = vadd.f32 0.0, %v2413
      %v2415 = vpop.f32.mrf.mxu0
      %2416 = vdwg.mxu0
      %v2417 = vadd.f32 %v2027, %v2259
      %v2418 = vadd.f32 %v2028, %v2264
      %v2419 = vadd.f32 %v2029, %v2269
      %v2420 = vadd.f32 %v2030, %v2274
      %v2421 = vadd.f32 %v2031, %v2279
      %v2422 = vadd.f32 %v2032, %v2284
      %v2423 = vadd.f32 %v2033, %v2289
      %v2424 = vadd.f32 %v2034, %v2294
      %v2425 = vadd.f32 %v2035, %v2299
      %v2426 = vadd.f32 %v2036, %v2304
      %v2427 = vadd.f32 %v2037, %v2309
      %v2428 = vadd.f32 %v2038, %v2314
      %v2429 = vadd.f32 %v2039, %v2319
      %v2430 = vadd.f32 %v2040, %v2324
      %v2431 = vadd.f32 %v2041, %v2329
      %v2432 = vadd.f32 %v2042, %v2334
      %v2433 = vadd.f32 %v2043, %v2339
      %v2434 = vadd.f32 %v2044, %v2344
      %v2435 = vadd.f32 %v2045, %v2349
      %v2436 = vadd.f32 %v2046, %v2354
      %v2437 = vadd.f32 %v2047, %v2359
      %v2438 = vadd.f32 %v2048, %v2364
      %v2439 = vadd.f32 %v2049, %v2369
      %v2440 = vadd.f32 %v2050, %v2374
      %v2441 = vadd.f32 %v2051, %v2379
      %v2442 = vadd.f32 %v2052, %v2384
      %v2443 = vadd.f32 %v2053, %v2389
      %v2444 = vadd.f32 %v2054, %v2394
      %v2445 = vadd.f32 %v2055, %v2399
      %v2446 = vadd.f32 %v2056, %v2404
      %v2447 = vadd.f32 %v2057, %v2409
      %v2448 = vadd.f32 %v2058, %v2414
      %s2449 = scalar_lea.vmem %s165, 48
      %v2450 = vld [vmem:[%s2449] sm:$0xff]
      %v2451 = vld [vmem:[%s2449 + $0x8] sm:$0xff]
      %v2452 = vld [vmem:[%s2449 + $0x18] sm:$0xff]
      %v2453 = vld [vmem:[%s2449 + $0x20] sm:$0xff]
      %v2454 = vld [vmem:[%s2449 + $0x30] sm:$0xff]
      %v2455 = vld [vmem:[%s2449 + $0x38] sm:$0xff]
      %v2456 = vld [vmem:[%s2449 + $0x48] sm:$0xff]
      %v2457 = vld [vmem:[%s2449 + $0x50] sm:$0xff]
      %v2458 = vld [vmem:[%s2449 + $0x60] sm:$0xff]
      %v2459 = vld [vmem:[%s2449 + $0x68] sm:$0xff]
      %v2460 = vld [vmem:[%s2449 + $0x78] sm:$0xff]
      %v2461 = vld [vmem:[%s2449 + $0x80] sm:$0xff]
      %v2462 = vld [vmem:[%s2449 + $0x90] sm:$0xff]
      %v2463 = vld [vmem:[%s2449 + $0x98] sm:$0xff]
      %v2464 = vld [vmem:[%s2449 + $0xa8] sm:$0xff]
      %v2465 = vld [vmem:[%s2449 + $0xb0] sm:$0xff]
      %v2466 = vld [vmem:[%s2449 + $0xc0] sm:$0xff]
      %v2467 = vld [vmem:[%s2449 + $0xc8] sm:$0xff]
      %v2468 = vld [vmem:[%s2449 + $0xd8] sm:$0xff]
      %v2469 = vld [vmem:[%s2449 + $0xe0] sm:$0xff]
      %v2470 = vld [vmem:[%s2449 + $0xf0] sm:$0xff]
      %v2471 = vld [vmem:[%s2449 + $0xf8] sm:$0xff]
      %v2472 = vld [vmem:[%s2449 + $0x108] sm:$0xff]
      %v2473 = vld [vmem:[%s2449 + $0x110] sm:$0xff]
      %v2474 = vld [vmem:[%s2449 + $0x120] sm:$0xff]
      %v2475 = vld [vmem:[%s2449 + $0x128] sm:$0xff]
      %v2476 = vld [vmem:[%s2449 + $0x138] sm:$0xff]
      %v2477 = vld [vmem:[%s2449 + $0x140] sm:$0xff]
      %v2478 = vld [vmem:[%s2449 + $0x150] sm:$0xff]
      %v2479 = vld [vmem:[%s2449 + $0x158] sm:$0xff]
      %v2480 = vld [vmem:[%s2449 + $0x168] sm:$0xff]
      %v2481 = vld [vmem:[%s2449 + $0x170] sm:$0xff]
      %s2482 = scalar_lea.vmem %s1, 24
      %v2483 = vld [vmem:[%s2482] sm:$0xf]
      %v2485 = vsel %vm238, %v2450, 0
      %v2488 = vsel %vm238, %v2451, 0
      %v2491 = vsel %vm238, %v2452, 0
      %v2494 = vsel %vm238, %v2453, 0
      %v2497 = vsel %vm238, %v2454, 0
      %v2500 = vsel %vm238, %v2455, 0
      %v2503 = vsel %vm238, %v2456, 0
      %v2506 = vsel %vm238, %v2457, 0
      %v2509 = vsel %vm238, %v2458, 0
      %v2512 = vsel %vm238, %v2459, 0
      %v2515 = vsel %vm238, %v2460, 0
      %v2518 = vsel %vm238, %v2461, 0
      %v2521 = vsel %vm238, %v2462, 0
      %v2524 = vsel %vm238, %v2463, 0
      %v2527 = vsel %vm238, %v2464, 0
      %v2530 = vsel %vm238, %v2465, 0
      %v2533 = vsel %vm238, %v2466, 0
      %v2536 = vsel %vm238, %v2467, 0
      %v2539 = vsel %vm238, %v2468, 0
      %v2542 = vsel %vm238, %v2469, 0
      %v2545 = vsel %vm238, %v2470, 0
      %v2548 = vsel %vm238, %v2471, 0
      %v2551 = vsel %vm238, %v2472, 0
      %v2554 = vsel %vm238, %v2473, 0
      %v2557 = vsel %vm238, %v2474, 0
      %v2560 = vsel %vm238, %v2475, 0
      %v2563 = vsel %vm238, %v2476, 0
      %v2566 = vsel %vm238, %v2477, 0
      %v2569 = vsel %vm238, %v2478, 0
      %v2572 = vsel %vm238, %v2479, 0
      %v2575 = vsel %vm238, %v2480, 0
      %v2578 = vsel %vm238, %v2481, 0
      %v2581 = vsel %vm335, %v2483, 0
      %2583 = vmatprep.subr.mxu0 0.0
      %2584 = vmatpush1.msra.mxu0 0.0
      %2585 = vmatprep.subr.mxu0 0.0
      %2586 = vmatpush1.msra.mxu0 0.0
      %2587 = vmatprep.subr.mxu0 0.0
      %2588 = vmatpush1.msra.mxu0 0.0
      %2589 = vmatprep.subr.mxu0 0.0
      %2590 = vmatpush1.msra.mxu0 0.0
      %2591 = vmatprep.subr.mxu0 0.0
      %2592 = vmatpush1.msra.mxu0 0.0
      %2593 = vmatprep.subr.mxu0 0.0
      %2594 = vmatpush1.msra.mxu0 0.0
      %2595 = vmatprep.subr.mxu0 0.0
      %2596 = vmatpush1.msra.mxu0 0.0
      %2597 = vmatprep.subr.mxu0 0.0
      %2598 = vmatpush1.msra.mxu0 0.0
      %2599 = vmatprep.subr.mxu0 0.0
      %2600 = vmatpush1.msra.mxu0 0.0
      %2601 = vmatprep.subr.mxu0 0.0
      %2602 = vmatpush1.msra.mxu0 0.0
      %2603 = vmatprep.subr.mxu0 0.0
      %2604 = vmatpush1.msra.mxu0 0.0
      %2605 = vmatprep.subr.mxu0 0.0
      %2606 = vmatpush1.msra.mxu0 0.0
      %2607 = vmatprep.subr.mxu0 0.0
      %2608 = vmatpush1.msra.mxu0 0.0
      %2609 = vmatprep.subr.mxu0 0.0
      %2610 = vmatpush1.msra.mxu0 0.0
      %2611 = vmatprep.subr.mxu0 0.0
      %2612 = vmatpush1.msra.mxu0 0.0
      %2613 = vmatprep.subr.mxu0 0.0
      %2614 = vmatpush1.msra.mxu0 %v2581
      %2615 = vmatprep.subr.mxu0 0.0
      %2616 = vmatpush2.msra.mxu0 0.0
      %2617 = vmatprep.subr.mxu0 0.0
      %2618 = vmatpush2.msra.mxu0 0.0
      %2619 = vmatprep.subr.mxu0 0.0
      %2620 = vmatpush2.msra.mxu0 0.0
      %2621 = vmatprep.subr.mxu0 0.0
      %2622 = vmatpush2.msra.mxu0 0.0
      %2623 = vmatprep.subr.mxu0 0.0
      %2624 = vmatpush2.msra.mxu0 0.0
      %2625 = vmatprep.subr.mxu0 0.0
      %2626 = vmatpush2.msra.mxu0 0.0
      %2627 = vmatprep.subr.mxu0 0.0
      %2628 = vmatpush2.msra.mxu0 0.0
      %2629 = vmatprep.subr.mxu0 0.0
      %2630 = vmatpush2.msra.mxu0 0.0
      %2631 = vmatprep.subr.mxu0 0.0
      %2632 = vmatpush2.msra.mxu0 0.0
      %2633 = vmatprep.subr.mxu0 0.0
      %2634 = vmatpush2.msra.mxu0 0.0
      %2635 = vmatprep.subr.mxu0 0.0
      %2636 = vmatpush2.msra.mxu0 0.0
      %2637 = vmatprep.subr.mxu0 0.0
      %2638 = vmatpush2.msra.mxu0 0.0
      %2639 = vmatprep.subr.mxu0 0.0
      %2640 = vmatpush2.msra.mxu0 0.0
      %2641 = vmatprep.subr.mxu0 0.0
      %2642 = vmatpush2.msra.mxu0 0.0
      %2643 = vmatprep.subr.mxu0 0.0
      %2644 = vmatpush2.msra.mxu0 0.0
      %2645 = vmatprep.subr.mxu0 0.0
      %2646 = vmatpush2.msra.mxu0 0.0
      %2647 = vmatprep.mubr.f32.mxu0 0.0
      %2648 = vmatmul.mubr.f32.gmra.mxu0 %v2485
      %v2649 = vpop.f32.mrf.mxu0
      %v2650 = vadd.f32 0.0, %v2649
      %v2651 = vpop.f32.mrf.mxu0
      %2652 = vmatprep.mubr.f32.mxu0 0.0
      %2653 = vmatmul.mubr.f32.gmra.mxu0 %v2488
      %v2654 = vpop.f32.mrf.mxu0
      %v2655 = vadd.f32 0.0, %v2654
      %v2656 = vpop.f32.mrf.mxu0
      %2657 = vmatprep.mubr.f32.mxu0 0.0
      %2658 = vmatmul.mubr.f32.gmra.mxu0 %v2491
      %v2659 = vpop.f32.mrf.mxu0
      %v2660 = vadd.f32 0.0, %v2659
      %v2661 = vpop.f32.mrf.mxu0
      %2662 = vmatprep.mubr.f32.mxu0 0.0
      %2663 = vmatmul.mubr.f32.gmra.mxu0 %v2494
      %v2664 = vpop.f32.mrf.mxu0
      %v2665 = vadd.f32 0.0, %v2664
      %v2666 = vpop.f32.mrf.mxu0
      %2667 = vmatprep.mubr.f32.mxu0 0.0
      %2668 = vmatmul.mubr.f32.gmra.mxu0 %v2497
      %v2669 = vpop.f32.mrf.mxu0
      %v2670 = vadd.f32 0.0, %v2669
      %v2671 = vpop.f32.mrf.mxu0
      %2672 = vmatprep.mubr.f32.mxu0 0.0
      %2673 = vmatmul.mubr.f32.gmra.mxu0 %v2500
      %v2674 = vpop.f32.mrf.mxu0
      %v2675 = vadd.f32 0.0, %v2674
      %v2676 = vpop.f32.mrf.mxu0
      %2677 = vmatprep.mubr.f32.mxu0 0.0
      %2678 = vmatmul.mubr.f32.gmra.mxu0 %v2503
      %v2679 = vpop.f32.mrf.mxu0
      %v2680 = vadd.f32 0.0, %v2679
      %v2681 = vpop.f32.mrf.mxu0
      %2682 = vmatprep.mubr.f32.mxu0 0.0
      %2683 = vmatmul.mubr.f32.gmra.mxu0 %v2506
      %v2684 = vpop.f32.mrf.mxu0
      %v2685 = vadd.f32 0.0, %v2684
      %v2686 = vpop.f32.mrf.mxu0
      %2687 = vmatprep.mubr.f32.mxu0 0.0
      %2688 = vmatmul.mubr.f32.gmra.mxu0 %v2509
      %v2689 = vpop.f32.mrf.mxu0
      %v2690 = vadd.f32 0.0, %v2689
      %v2691 = vpop.f32.mrf.mxu0
      %2692 = vmatprep.mubr.f32.mxu0 0.0
      %2693 = vmatmul.mubr.f32.gmra.mxu0 %v2512
      %v2694 = vpop.f32.mrf.mxu0
      %v2695 = vadd.f32 0.0, %v2694
      %v2696 = vpop.f32.mrf.mxu0
      %2697 = vmatprep.mubr.f32.mxu0 0.0
      %2698 = vmatmul.mubr.f32.gmra.mxu0 %v2515
      %v2699 = vpop.f32.mrf.mxu0
      %v2700 = vadd.f32 0.0, %v2699
      %v2701 = vpop.f32.mrf.mxu0
      %2702 = vmatprep.mubr.f32.mxu0 0.0
      %2703 = vmatmul.mubr.f32.gmra.mxu0 %v2518
      %v2704 = vpop.f32.mrf.mxu0
      %v2705 = vadd.f32 0.0, %v2704
      %v2706 = vpop.f32.mrf.mxu0
      %2707 = vmatprep.mubr.f32.mxu0 0.0
      %2708 = vmatmul.mubr.f32.gmra.mxu0 %v2521
      %v2709 = vpop.f32.mrf.mxu0
      %v2710 = vadd.f32 0.0, %v2709
      %v2711 = vpop.f32.mrf.mxu0
      %2712 = vmatprep.mubr.f32.mxu0 0.0
      %2713 = vmatmul.mubr.f32.gmra.mxu0 %v2524
      %v2714 = vpop.f32.mrf.mxu0
      %v2715 = vadd.f32 0.0, %v2714
      %v2716 = vpop.f32.mrf.mxu0
      %2717 = vmatprep.mubr.f32.mxu0 0.0
      %2718 = vmatmul.mubr.f32.gmra.mxu0 %v2527
      %v2719 = vpop.f32.mrf.mxu0
      %v2720 = vadd.f32 0.0, %v2719
      %v2721 = vpop.f32.mrf.mxu0
      %2722 = vmatprep.mubr.f32.mxu0 0.0
      %2723 = vmatmul.mubr.f32.gmra.mxu0 %v2530
      %v2724 = vpop.f32.mrf.mxu0
      %v2725 = vadd.f32 0.0, %v2724
      %v2726 = vpop.f32.mrf.mxu0
      %2727 = vmatprep.mubr.f32.mxu0 0.0
      %2728 = vmatmul.mubr.f32.gmra.mxu0 %v2533
      %v2729 = vpop.f32.mrf.mxu0
      %v2730 = vadd.f32 0.0, %v2729
      %v2731 = vpop.f32.mrf.mxu0
      %2732 = vmatprep.mubr.f32.mxu0 0.0
      %2733 = vmatmul.mubr.f32.gmra.mxu0 %v2536
      %v2734 = vpop.f32.mrf.mxu0
      %v2735 = vadd.f32 0.0, %v2734
      %v2736 = vpop.f32.mrf.mxu0
      %2737 = vmatprep.mubr.f32.mxu0 0.0
      %2738 = vmatmul.mubr.f32.gmra.mxu0 %v2539
      %v2739 = vpop.f32.mrf.mxu0
      %v2740 = vadd.f32 0.0, %v2739
      %v2741 = vpop.f32.mrf.mxu0
      %2742 = vmatprep.mubr.f32.mxu0 0.0
      %2743 = vmatmul.mubr.f32.gmra.mxu0 %v2542
      %v2744 = vpop.f32.mrf.mxu0
      %v2745 = vadd.f32 0.0, %v2744
      %v2746 = vpop.f32.mrf.mxu0
      %2747 = vmatprep.mubr.f32.mxu0 0.0
      %2748 = vmatmul.mubr.f32.gmra.mxu0 %v2545
      %v2749 = vpop.f32.mrf.mxu0
      %v2750 = vadd.f32 0.0, %v2749
      %v2751 = vpop.f32.mrf.mxu0
      %2752 = vmatprep.mubr.f32.mxu0 0.0
      %2753 = vmatmul.mubr.f32.gmra.mxu0 %v2548
      %v2754 = vpop.f32.mrf.mxu0
      %v2755 = vadd.f32 0.0, %v2754
      %v2756 = vpop.f32.mrf.mxu0
      %2757 = vmatprep.mubr.f32.mxu0 0.0
      %2758 = vmatmul.mubr.f32.gmra.mxu0 %v2551
      %v2759 = vpop.f32.mrf.mxu0
      %v2760 = vadd.f32 0.0, %v2759
      %v2761 = vpop.f32.mrf.mxu0
      %2762 = vmatprep.mubr.f32.mxu0 0.0
      %2763 = vmatmul.mubr.f32.gmra.mxu0 %v2554
      %v2764 = vpop.f32.mrf.mxu0
      %v2765 = vadd.f32 0.0, %v2764
      %v2766 = vpop.f32.mrf.mxu0
      %2767 = vmatprep.mubr.f32.mxu0 0.0
      %2768 = vmatmul.mubr.f32.gmra.mxu0 %v2557
      %v2769 = vpop.f32.mrf.mxu0
      %v2770 = vadd.f32 0.0, %v2769
      %v2771 = vpop.f32.mrf.mxu0
      %2772 = vmatprep.mubr.f32.mxu0 0.0
      %2773 = vmatmul.mubr.f32.gmra.mxu0 %v2560
      %v2774 = vpop.f32.mrf.mxu0
      %v2775 = vadd.f32 0.0, %v2774
      %v2776 = vpop.f32.mrf.mxu0
      %2777 = vmatprep.mubr.f32.mxu0 0.0
      %2778 = vmatmul.mubr.f32.gmra.mxu0 %v2563
      %v2779 = vpop.f32.mrf.mxu0
      %v2780 = vadd.f32 0.0, %v2779
      %v2781 = vpop.f32.mrf.mxu0
      %2782 = vmatprep.mubr.f32.mxu0 0.0
      %2783 = vmatmul.mubr.f32.gmra.mxu0 %v2566
      %v2784 = vpop.f32.mrf.mxu0
      %v2785 = vadd.f32 0.0, %v2784
      %v2786 = vpop.f32.mrf.mxu0
      %2787 = vmatprep.mubr.f32.mxu0 0.0
      %2788 = vmatmul.mubr.f32.gmra.mxu0 %v2569
      %v2789 = vpop.f32.mrf.mxu0
      %v2790 = vadd.f32 0.0, %v2789
      %v2791 = vpop.f32.mrf.mxu0
      %2792 = vmatprep.mubr.f32.mxu0 0.0
      %2793 = vmatmul.mubr.f32.gmra.mxu0 %v2572
      %v2794 = vpop.f32.mrf.mxu0
      %v2795 = vadd.f32 0.0, %v2794
      %v2796 = vpop.f32.mrf.mxu0
      %2797 = vmatprep.mubr.f32.mxu0 0.0
      %2798 = vmatmul.mubr.f32.gmra.mxu0 %v2575
      %v2799 = vpop.f32.mrf.mxu0
      %v2800 = vadd.f32 0.0, %v2799
      %v2801 = vpop.f32.mrf.mxu0
      %2802 = vmatprep.mubr.f32.mxu0 0.0
      %2803 = vmatmul.mubr.f32.gmra.mxu0 %v2578
      %v2804 = vpop.f32.mrf.mxu0
      %v2805 = vadd.f32 0.0, %v2804
      %v2806 = vpop.f32.mrf.mxu0
      %2807 = vdwg.mxu0
      %v2808 = vadd.f32 %v2417, %v2650
      %v2809 = vadd.f32 %v2418, %v2655
      %v2810 = vadd.f32 %v2419, %v2660
      %v2811 = vadd.f32 %v2420, %v2665
      %v2812 = vadd.f32 %v2421, %v2670
      %v2813 = vadd.f32 %v2422, %v2675
      %v2814 = vadd.f32 %v2423, %v2680
      %v2815 = vadd.f32 %v2424, %v2685
      %v2816 = vadd.f32 %v2425, %v2690
      %v2817 = vadd.f32 %v2426, %v2695
      %v2818 = vadd.f32 %v2427, %v2700
      %v2819 = vadd.f32 %v2428, %v2705
      %v2820 = vadd.f32 %v2429, %v2710
      %v2821 = vadd.f32 %v2430, %v2715
      %v2822 = vadd.f32 %v2431, %v2720
      %v2823 = vadd.f32 %v2432, %v2725
      %v2824 = vadd.f32 %v2433, %v2730
      %v2825 = vadd.f32 %v2434, %v2735
      %v2826 = vadd.f32 %v2435, %v2740
      %v2827 = vadd.f32 %v2436, %v2745
      %v2828 = vadd.f32 %v2437, %v2750
      %v2829 = vadd.f32 %v2438, %v2755
      %v2830 = vadd.f32 %v2439, %v2760
      %v2831 = vadd.f32 %v2440, %v2765
      %v2832 = vadd.f32 %v2441, %v2770
      %v2833 = vadd.f32 %v2442, %v2775
      %v2834 = vadd.f32 %v2443, %v2780
      %v2835 = vadd.f32 %v2444, %v2785
      %v2836 = vadd.f32 %v2445, %v2790
      %v2837 = vadd.f32 %v2446, %v2795
      %v2838 = vadd.f32 %v2447, %v2800
      %v2839 = vadd.f32 %v2448, %v2805
      %v2840 = vld [vmem:[%s2449 + $0x1] sm:$0xff]
      %v2841 = vld [vmem:[%s2449 + $0x9] sm:$0xff]
      %v2842 = vld [vmem:[%s2449 + $0x19] sm:$0xff]
      %v2843 = vld [vmem:[%s2449 + $0x21] sm:$0xff]
      %v2844 = vld [vmem:[%s2449 + $0x31] sm:$0xff]
      %v2845 = vld [vmem:[%s2449 + $0x39] sm:$0xff]
      %v2846 = vld [vmem:[%s2449 + $0x49] sm:$0xff]
      %v2847 = vld [vmem:[%s2449 + $0x51] sm:$0xff]
      %v2848 = vld [vmem:[%s2449 + $0x61] sm:$0xff]
      %v2849 = vld [vmem:[%s2449 + $0x69] sm:$0xff]
      %v2850 = vld [vmem:[%s2449 + $0x79] sm:$0xff]
      %v2851 = vld [vmem:[%s2449 + $0x81] sm:$0xff]
      %v2852 = vld [vmem:[%s2449 + $0x91] sm:$0xff]
      %v2853 = vld [vmem:[%s2449 + $0x99] sm:$0xff]
      %v2854 = vld [vmem:[%s2449 + $0xa9] sm:$0xff]
      %v2855 = vld [vmem:[%s2449 + $0xb1] sm:$0xff]
      %v2856 = vld [vmem:[%s2449 + $0xc1] sm:$0xff]
      %v2857 = vld [vmem:[%s2449 + $0xc9] sm:$0xff]
      %v2858 = vld [vmem:[%s2449 + $0xd9] sm:$0xff]
      %v2859 = vld [vmem:[%s2449 + $0xe1] sm:$0xff]
      %v2860 = vld [vmem:[%s2449 + $0xf1] sm:$0xff]
      %v2861 = vld [vmem:[%s2449 + $0xf9] sm:$0xff]
      %v2862 = vld [vmem:[%s2449 + $0x109] sm:$0xff]
      %v2863 = vld [vmem:[%s2449 + $0x111] sm:$0xff]
      %v2864 = vld [vmem:[%s2449 + $0x121] sm:$0xff]
      %v2865 = vld [vmem:[%s2449 + $0x129] sm:$0xff]
      %v2866 = vld [vmem:[%s2449 + $0x139] sm:$0xff]
      %v2867 = vld [vmem:[%s2449 + $0x141] sm:$0xff]
      %v2868 = vld [vmem:[%s2449 + $0x151] sm:$0xff]
      %v2869 = vld [vmem:[%s2449 + $0x159] sm:$0xff]
      %v2870 = vld [vmem:[%s2449 + $0x169] sm:$0xff]
      %v2871 = vld [vmem:[%s2449 + $0x171] sm:$0xff]
      %s2872 = scalar_lea.vmem %s1, 28
      %v2873 = vld [vmem:[%s2872] sm:$0xf]
      %v2875 = vsel %vm238, %v2840, 0
      %v2878 = vsel %vm238, %v2841, 0
      %v2881 = vsel %vm238, %v2842, 0
      %v2884 = vsel %vm238, %v2843, 0
      %v2887 = vsel %vm238, %v2844, 0
      %v2890 = vsel %vm238, %v2845, 0
      %v2893 = vsel %vm238, %v2846, 0
      %v2896 = vsel %vm238, %v2847, 0
      %v2899 = vsel %vm238, %v2848, 0
      %v2902 = vsel %vm238, %v2849, 0
      %v2905 = vsel %vm238, %v2850, 0
      %v2908 = vsel %vm238, %v2851, 0
      %v2911 = vsel %vm238, %v2852, 0
      %v2914 = vsel %vm238, %v2853, 0
      %v2917 = vsel %vm238, %v2854, 0
      %v2920 = vsel %vm238, %v2855, 0
      %v2923 = vsel %vm238, %v2856, 0
      %v2926 = vsel %vm238, %v2857, 0
      %v2929 = vsel %vm238, %v2858, 0
      %v2932 = vsel %vm238, %v2859, 0
      %v2935 = vsel %vm238, %v2860, 0
      %v2938 = vsel %vm238, %v2861, 0
      %v2941 = vsel %vm238, %v2862, 0
      %v2944 = vsel %vm238, %v2863, 0
      %v2947 = vsel %vm238, %v2864, 0
      %v2950 = vsel %vm238, %v2865, 0
      %v2953 = vsel %vm238, %v2866, 0
      %v2956 = vsel %vm238, %v2867, 0
      %v2959 = vsel %vm238, %v2868, 0
      %v2962 = vsel %vm238, %v2869, 0
      %v2965 = vsel %vm238, %v2870, 0
      %v2968 = vsel %vm238, %v2871, 0
      %v2971 = vsel %vm335, %v2873, 0
      %2973 = vmatprep.subr.mxu0 0.0
      %2974 = vmatpush1.msra.mxu0 0.0
      %2975 = vmatprep.subr.mxu0 0.0
      %2976 = vmatpush1.msra.mxu0 0.0
      %2977 = vmatprep.subr.mxu0 0.0
      %2978 = vmatpush1.msra.mxu0 0.0
      %2979 = vmatprep.subr.mxu0 0.0
      %2980 = vmatpush1.msra.mxu0 0.0
      %2981 = vmatprep.subr.mxu0 0.0
      %2982 = vmatpush1.msra.mxu0 0.0
      %2983 = vmatprep.subr.mxu0 0.0
      %2984 = vmatpush1.msra.mxu0 0.0
      %2985 = vmatprep.subr.mxu0 0.0
      %2986 = vmatpush1.msra.mxu0 0.0
      %2987 = vmatprep.subr.mxu0 0.0
      %2988 = vmatpush1.msra.mxu0 0.0
      %2989 = vmatprep.subr.mxu0 0.0
      %2990 = vmatpush1.msra.mxu0 0.0
      %2991 = vmatprep.subr.mxu0 0.0
      %2992 = vmatpush1.msra.mxu0 0.0
      %2993 = vmatprep.subr.mxu0 0.0
      %2994 = vmatpush1.msra.mxu0 0.0
      %2995 = vmatprep.subr.mxu0 0.0
      %2996 = vmatpush1.msra.mxu0 0.0
      %2997 = vmatprep.subr.mxu0 0.0
      %2998 = vmatpush1.msra.mxu0 0.0
      %2999 = vmatprep.subr.mxu0 0.0
      %3000 = vmatpush1.msra.mxu0 0.0
      %3001 = vmatprep.subr.mxu0 0.0
      %3002 = vmatpush1.msra.mxu0 0.0
      %3003 = vmatprep.subr.mxu0 0.0
      %3004 = vmatpush1.msra.mxu0 %v2971
      %3005 = vmatprep.subr.mxu0 0.0
      %3006 = vmatpush2.msra.mxu0 0.0
      %3007 = vmatprep.subr.mxu0 0.0
      %3008 = vmatpush2.msra.mxu0 0.0
      %3009 = vmatprep.subr.mxu0 0.0
      %3010 = vmatpush2.msra.mxu0 0.0
      %3011 = vmatprep.subr.mxu0 0.0
      %3012 = vmatpush2.msra.mxu0 0.0
      %3013 = vmatprep.subr.mxu0 0.0
      %3014 = vmatpush2.msra.mxu0 0.0
      %3015 = vmatprep.subr.mxu0 0.0
      %3016 = vmatpush2.msra.mxu0 0.0
      %3017 = vmatprep.subr.mxu0 0.0
      %3018 = vmatpush2.msra.mxu0 0.0
      %3019 = vmatprep.subr.mxu0 0.0
      %3020 = vmatpush2.msra.mxu0 0.0
      %3021 = vmatprep.subr.mxu0 0.0
      %3022 = vmatpush2.msra.mxu0 0.0
      %3023 = vmatprep.subr.mxu0 0.0
      %3024 = vmatpush2.msra.mxu0 0.0
      %3025 = vmatprep.subr.mxu0 0.0
      %3026 = vmatpush2.msra.mxu0 0.0
      %3027 = vmatprep.subr.mxu0 0.0
      %3028 = vmatpush2.msra.mxu0 0.0
      %3029 = vmatprep.subr.mxu0 0.0
      %3030 = vmatpush2.msra.mxu0 0.0
      %3031 = vmatprep.subr.mxu0 0.0
      %3032 = vmatpush2.msra.mxu0 0.0
      %3033 = vmatprep.subr.mxu0 0.0
      %3034 = vmatpush2.msra.mxu0 0.0
      %3035 = vmatprep.subr.mxu0 0.0
      %3036 = vmatpush2.msra.mxu0 0.0
      %3037 = vmatprep.mubr.f32.mxu0 0.0
      %3038 = vmatmul.mubr.f32.gmra.mxu0 %v2875
      %v3039 = vpop.f32.mrf.mxu0
      %v3040 = vadd.f32 0.0, %v3039
      %v3041 = vpop.f32.mrf.mxu0
      %3042 = vmatprep.mubr.f32.mxu0 0.0
      %3043 = vmatmul.mubr.f32.gmra.mxu0 %v2878
      %v3044 = vpop.f32.mrf.mxu0
      %v3045 = vadd.f32 0.0, %v3044
      %v3046 = vpop.f32.mrf.mxu0
      %3047 = vmatprep.mubr.f32.mxu0 0.0
      %3048 = vmatmul.mubr.f32.gmra.mxu0 %v2881
      %v3049 = vpop.f32.mrf.mxu0
      %v3050 = vadd.f32 0.0, %v3049
      %v3051 = vpop.f32.mrf.mxu0
      %3052 = vmatprep.mubr.f32.mxu0 0.0
      %3053 = vmatmul.mubr.f32.gmra.mxu0 %v2884
      %v3054 = vpop.f32.mrf.mxu0
      %v3055 = vadd.f32 0.0, %v3054
      %v3056 = vpop.f32.mrf.mxu0
      %3057 = vmatprep.mubr.f32.mxu0 0.0
      %3058 = vmatmul.mubr.f32.gmra.mxu0 %v2887
      %v3059 = vpop.f32.mrf.mxu0
      %v3060 = vadd.f32 0.0, %v3059
      %v3061 = vpop.f32.mrf.mxu0
      %3062 = vmatprep.mubr.f32.mxu0 0.0
      %3063 = vmatmul.mubr.f32.gmra.mxu0 %v2890
      %v3064 = vpop.f32.mrf.mxu0
      %v3065 = vadd.f32 0.0, %v3064
      %v3066 = vpop.f32.mrf.mxu0
      %3067 = vmatprep.mubr.f32.mxu0 0.0
      %3068 = vmatmul.mubr.f32.gmra.mxu0 %v2893
      %v3069 = vpop.f32.mrf.mxu0
      %v3070 = vadd.f32 0.0, %v3069
      %v3071 = vpop.f32.mrf.mxu0
      %3072 = vmatprep.mubr.f32.mxu0 0.0
      %3073 = vmatmul.mubr.f32.gmra.mxu0 %v2896
      %v3074 = vpop.f32.mrf.mxu0
      %v3075 = vadd.f32 0.0, %v3074
      %v3076 = vpop.f32.mrf.mxu0
      %3077 = vmatprep.mubr.f32.mxu0 0.0
      %3078 = vmatmul.mubr.f32.gmra.mxu0 %v2899
      %v3079 = vpop.f32.mrf.mxu0
      %v3080 = vadd.f32 0.0, %v3079
      %v3081 = vpop.f32.mrf.mxu0
      %3082 = vmatprep.mubr.f32.mxu0 0.0
      %3083 = vmatmul.mubr.f32.gmra.mxu0 %v2902
      %v3084 = vpop.f32.mrf.mxu0
      %v3085 = vadd.f32 0.0, %v3084
      %v3086 = vpop.f32.mrf.mxu0
      %3087 = vmatprep.mubr.f32.mxu0 0.0
      %3088 = vmatmul.mubr.f32.gmra.mxu0 %v2905
      %v3089 = vpop.f32.mrf.mxu0
      %v3090 = vadd.f32 0.0, %v3089
      %v3091 = vpop.f32.mrf.mxu0
      %3092 = vmatprep.mubr.f32.mxu0 0.0
      %3093 = vmatmul.mubr.f32.gmra.mxu0 %v2908
      %v3094 = vpop.f32.mrf.mxu0
      %v3095 = vadd.f32 0.0, %v3094
      %v3096 = vpop.f32.mrf.mxu0
      %3097 = vmatprep.mubr.f32.mxu0 0.0
      %3098 = vmatmul.mubr.f32.gmra.mxu0 %v2911
      %v3099 = vpop.f32.mrf.mxu0
      %v3100 = vadd.f32 0.0, %v3099
      %v3101 = vpop.f32.mrf.mxu0
      %3102 = vmatprep.mubr.f32.mxu0 0.0
      %3103 = vmatmul.mubr.f32.gmra.mxu0 %v2914
      %v3104 = vpop.f32.mrf.mxu0
      %v3105 = vadd.f32 0.0, %v3104
      %v3106 = vpop.f32.mrf.mxu0
      %3107 = vmatprep.mubr.f32.mxu0 0.0
      %3108 = vmatmul.mubr.f32.gmra.mxu0 %v2917
      %v3109 = vpop.f32.mrf.mxu0
      %v3110 = vadd.f32 0.0, %v3109
      %v3111 = vpop.f32.mrf.mxu0
      %3112 = vmatprep.mubr.f32.mxu0 0.0
      %3113 = vmatmul.mubr.f32.gmra.mxu0 %v2920
      %v3114 = vpop.f32.mrf.mxu0
      %v3115 = vadd.f32 0.0, %v3114
      %v3116 = vpop.f32.mrf.mxu0
      %3117 = vmatprep.mubr.f32.mxu0 0.0
      %3118 = vmatmul.mubr.f32.gmra.mxu0 %v2923
      %v3119 = vpop.f32.mrf.mxu0
      %v3120 = vadd.f32 0.0, %v3119
      %v3121 = vpop.f32.mrf.mxu0
      %3122 = vmatprep.mubr.f32.mxu0 0.0
      %3123 = vmatmul.mubr.f32.gmra.mxu0 %v2926
      %v3124 = vpop.f32.mrf.mxu0
      %v3125 = vadd.f32 0.0, %v3124
      %v3126 = vpop.f32.mrf.mxu0
      %3127 = vmatprep.mubr.f32.mxu0 0.0
      %3128 = vmatmul.mubr.f32.gmra.mxu0 %v2929
      %v3129 = vpop.f32.mrf.mxu0
      %v3130 = vadd.f32 0.0, %v3129
      %v3131 = vpop.f32.mrf.mxu0
      %3132 = vmatprep.mubr.f32.mxu0 0.0
      %3133 = vmatmul.mubr.f32.gmra.mxu0 %v2932
      %v3134 = vpop.f32.mrf.mxu0
      %v3135 = vadd.f32 0.0, %v3134
      %v3136 = vpop.f32.mrf.mxu0
      %3137 = vmatprep.mubr.f32.mxu0 0.0
      %3138 = vmatmul.mubr.f32.gmra.mxu0 %v2935
      %v3139 = vpop.f32.mrf.mxu0
      %v3140 = vadd.f32 0.0, %v3139
      %v3141 = vpop.f32.mrf.mxu0
      %3142 = vmatprep.mubr.f32.mxu0 0.0
      %3143 = vmatmul.mubr.f32.gmra.mxu0 %v2938
      %v3144 = vpop.f32.mrf.mxu0
      %v3145 = vadd.f32 0.0, %v3144
      %v3146 = vpop.f32.mrf.mxu0
      %3147 = vmatprep.mubr.f32.mxu0 0.0
      %3148 = vmatmul.mubr.f32.gmra.mxu0 %v2941
      %v3149 = vpop.f32.mrf.mxu0
      %v3150 = vadd.f32 0.0, %v3149
      %v3151 = vpop.f32.mrf.mxu0
      %3152 = vmatprep.mubr.f32.mxu0 0.0
      %3153 = vmatmul.mubr.f32.gmra.mxu0 %v2944
      %v3154 = vpop.f32.mrf.mxu0
      %v3155 = vadd.f32 0.0, %v3154
      %v3156 = vpop.f32.mrf.mxu0
      %3157 = vmatprep.mubr.f32.mxu0 0.0
      %3158 = vmatmul.mubr.f32.gmra.mxu0 %v2947
      %v3159 = vpop.f32.mrf.mxu0
      %v3160 = vadd.f32 0.0, %v3159
      %v3161 = vpop.f32.mrf.mxu0
      %3162 = vmatprep.mubr.f32.mxu0 0.0
      %3163 = vmatmul.mubr.f32.gmra.mxu0 %v2950
      %v3164 = vpop.f32.mrf.mxu0
      %v3165 = vadd.f32 0.0, %v3164
      %v3166 = vpop.f32.mrf.mxu0
      %3167 = vmatprep.mubr.f32.mxu0 0.0
      %3168 = vmatmul.mubr.f32.gmra.mxu0 %v2953
      %v3169 = vpop.f32.mrf.mxu0
      %v3170 = vadd.f32 0.0, %v3169
      %v3171 = vpop.f32.mrf.mxu0
      %3172 = vmatprep.mubr.f32.mxu0 0.0
      %3173 = vmatmul.mubr.f32.gmra.mxu0 %v2956
      %v3174 = vpop.f32.mrf.mxu0
      %v3175 = vadd.f32 0.0, %v3174
      %v3176 = vpop.f32.mrf.mxu0
      %3177 = vmatprep.mubr.f32.mxu0 0.0
      %3178 = vmatmul.mubr.f32.gmra.mxu0 %v2959
      %v3179 = vpop.f32.mrf.mxu0
      %v3180 = vadd.f32 0.0, %v3179
      %v3181 = vpop.f32.mrf.mxu0
      %3182 = vmatprep.mubr.f32.mxu0 0.0
      %3183 = vmatmul.mubr.f32.gmra.mxu0 %v2962
      %v3184 = vpop.f32.mrf.mxu0
      %v3185 = vadd.f32 0.0, %v3184
      %v3186 = vpop.f32.mrf.mxu0
      %3187 = vmatprep.mubr.f32.mxu0 0.0
      %3188 = vmatmul.mubr.f32.gmra.mxu0 %v2965
      %v3189 = vpop.f32.mrf.mxu0
      %v3190 = vadd.f32 0.0, %v3189
      %v3191 = vpop.f32.mrf.mxu0
      %3192 = vmatprep.mubr.f32.mxu0 0.0
      %3193 = vmatmul.mubr.f32.gmra.mxu0 %v2968
      %v3194 = vpop.f32.mrf.mxu0
      %v3195 = vadd.f32 0.0, %v3194
      %v3196 = vpop.f32.mrf.mxu0
      %3197 = vdwg.mxu0
      %v3198 = vadd.f32 %v2808, %v3040
      %v3199 = vadd.f32 %v2809, %v3045
      %v3200 = vadd.f32 %v2810, %v3050
      %v3201 = vadd.f32 %v2811, %v3055
      %v3202 = vadd.f32 %v2812, %v3060
      %v3203 = vadd.f32 %v2813, %v3065
      %v3204 = vadd.f32 %v2814, %v3070
      %v3205 = vadd.f32 %v2815, %v3075
      %v3206 = vadd.f32 %v2816, %v3080
      %v3207 = vadd.f32 %v2817, %v3085
      %v3208 = vadd.f32 %v2818, %v3090
      %v3209 = vadd.f32 %v2819, %v3095
      %v3210 = vadd.f32 %v2820, %v3100
      %v3211 = vadd.f32 %v2821, %v3105
      %v3212 = vadd.f32 %v2822, %v3110
      %v3213 = vadd.f32 %v2823, %v3115
      %v3214 = vadd.f32 %v2824, %v3120
      %v3215 = vadd.f32 %v2825, %v3125
      %v3216 = vadd.f32 %v2826, %v3130
      %v3217 = vadd.f32 %v2827, %v3135
      %v3218 = vadd.f32 %v2828, %v3140
      %v3219 = vadd.f32 %v2829, %v3145
      %v3220 = vadd.f32 %v2830, %v3150
      %v3221 = vadd.f32 %v2831, %v3155
      %v3222 = vadd.f32 %v2832, %v3160
      %v3223 = vadd.f32 %v2833, %v3165
      %v3224 = vadd.f32 %v2834, %v3170
      %v3225 = vadd.f32 %v2835, %v3175
      %v3226 = vadd.f32 %v2836, %v3180
      %v3227 = vadd.f32 %v2837, %v3185
      %v3228 = vadd.f32 %v2838, %v3190
      %v3229 = vadd.f32 %v2839, %v3195
      %v3230 = vld [vmem:[%s2449 + $0x2] sm:$0xff]
      %v3231 = vld [vmem:[%s2449 + $0xa] sm:$0xff]
      %v3232 = vld [vmem:[%s2449 + $0x1a] sm:$0xff]
      %v3233 = vld [vmem:[%s2449 + $0x22] sm:$0xff]
      %v3234 = vld [vmem:[%s2449 + $0x32] sm:$0xff]
      %v3235 = vld [vmem:[%s2449 + $0x3a] sm:$0xff]
      %v3236 = vld [vmem:[%s2449 + $0x4a] sm:$0xff]
      %v3237 = vld [vmem:[%s2449 + $0x52] sm:$0xff]
      %v3238 = vld [vmem:[%s2449 + $0x62] sm:$0xff]
      %v3239 = vld [vmem:[%s2449 + $0x6a] sm:$0xff]
      %v3240 = vld [vmem:[%s2449 + $0x7a] sm:$0xff]
      %v3241 = vld [vmem:[%s2449 + $0x82] sm:$0xff]
      %v3242 = vld [vmem:[%s2449 + $0x92] sm:$0xff]
      %v3243 = vld [vmem:[%s2449 + $0x9a] sm:$0xff]
      %v3244 = vld [vmem:[%s2449 + $0xaa] sm:$0xff]
      %v3245 = vld [vmem:[%s2449 + $0xb2] sm:$0xff]
      %v3246 = vld [vmem:[%s2449 + $0xc2] sm:$0xff]
      %v3247 = vld [vmem:[%s2449 + $0xca] sm:$0xff]
      %v3248 = vld [vmem:[%s2449 + $0xda] sm:$0xff]
      %v3249 = vld [vmem:[%s2449 + $0xe2] sm:$0xff]
      %v3250 = vld [vmem:[%s2449 + $0xf2] sm:$0xff]
      %v3251 = vld [vmem:[%s2449 + $0xfa] sm:$0xff]
      %v3252 = vld [vmem:[%s2449 + $0x10a] sm:$0xff]
      %v3253 = vld [vmem:[%s2449 + $0x112] sm:$0xff]
      %v3254 = vld [vmem:[%s2449 + $0x122] sm:$0xff]
      %v3255 = vld [vmem:[%s2449 + $0x12a] sm:$0xff]
      %v3256 = vld [vmem:[%s2449 + $0x13a] sm:$0xff]
      %v3257 = vld [vmem:[%s2449 + $0x142] sm:$0xff]
      %v3258 = vld [vmem:[%s2449 + $0x152] sm:$0xff]
      %v3259 = vld [vmem:[%s2449 + $0x15a] sm:$0xff]
      %v3260 = vld [vmem:[%s2449 + $0x16a] sm:$0xff]
      %v3261 = vld [vmem:[%s2449 + $0x172] sm:$0xff]
      %s3262 = scalar_lea.vmem %s1, 32
      %v3263 = vld [vmem:[%s3262] sm:$0xf]
      %v3265 = vsel %vm238, %v3230, 0
      %v3268 = vsel %vm238, %v3231, 0
      %v3271 = vsel %vm238, %v3232, 0
      %v3274 = vsel %vm238, %v3233, 0
      %v3277 = vsel %vm238, %v3234, 0
      %v3280 = vsel %vm238, %v3235, 0
      %v3283 = vsel %vm238, %v3236, 0
      %v3286 = vsel %vm238, %v3237, 0
      %v3289 = vsel %vm238, %v3238, 0
      %v3292 = vsel %vm238, %v3239, 0
      %v3295 = vsel %vm238, %v3240, 0
      %v3298 = vsel %vm238, %v3241, 0
      %v3301 = vsel %vm238, %v3242, 0
      %v3304 = vsel %vm238, %v3243, 0
      %v3307 = vsel %vm238, %v3244, 0
      %v3310 = vsel %vm238, %v3245, 0
      %v3313 = vsel %vm238, %v3246, 0
      %v3316 = vsel %vm238, %v3247, 0
      %v3319 = vsel %vm238, %v3248, 0
      %v3322 = vsel %vm238, %v3249, 0
      %v3325 = vsel %vm238, %v3250, 0
      %v3328 = vsel %vm238, %v3251, 0
      %v3331 = vsel %vm238, %v3252, 0
      %v3334 = vsel %vm238, %v3253, 0
      %v3337 = vsel %vm238, %v3254, 0
      %v3340 = vsel %vm238, %v3255, 0
      %v3343 = vsel %vm238, %v3256, 0
      %v3346 = vsel %vm238, %v3257, 0
      %v3349 = vsel %vm238, %v3258, 0
      %v3352 = vsel %vm238, %v3259, 0
      %v3355 = vsel %vm238, %v3260, 0
      %v3358 = vsel %vm238, %v3261, 0
      %v3361 = vsel %vm335, %v3263, 0
      %3363 = vmatprep.subr.mxu0 0.0
      %3364 = vmatpush1.msra.mxu0 0.0
      %3365 = vmatprep.subr.mxu0 0.0
      %3366 = vmatpush1.msra.mxu0 0.0
      %3367 = vmatprep.subr.mxu0 0.0
      %3368 = vmatpush1.msra.mxu0 0.0
      %3369 = vmatprep.subr.mxu0 0.0
      %3370 = vmatpush1.msra.mxu0 0.0
      %3371 = vmatprep.subr.mxu0 0.0
      %3372 = vmatpush1.msra.mxu0 0.0
      %3373 = vmatprep.subr.mxu0 0.0
      %3374 = vmatpush1.msra.mxu0 0.0
      %3375 = vmatprep.subr.mxu0 0.0
      %3376 = vmatpush1.msra.mxu0 0.0
      %3377 = vmatprep.subr.mxu0 0.0
      %3378 = vmatpush1.msra.mxu0 0.0
      %3379 = vmatprep.subr.mxu0 0.0
      %3380 = vmatpush1.msra.mxu0 0.0
      %3381 = vmatprep.subr.mxu0 0.0
      %3382 = vmatpush1.msra.mxu0 0.0
      %3383 = vmatprep.subr.mxu0 0.0
      %3384 = vmatpush1.msra.mxu0 0.0
      %3385 = vmatprep.subr.mxu0 0.0
      %3386 = vmatpush1.msra.mxu0 0.0
      %3387 = vmatprep.subr.mxu0 0.0
      %3388 = vmatpush1.msra.mxu0 0.0
      %3389 = vmatprep.subr.mxu0 0.0
      %3390 = vmatpush1.msra.mxu0 0.0
      %3391 = vmatprep.subr.mxu0 0.0
      %3392 = vmatpush1.msra.mxu0 0.0
      %3393 = vmatprep.subr.mxu0 0.0
      %3394 = vmatpush1.msra.mxu0 %v3361
      %3395 = vmatprep.subr.mxu0 0.0
      %3396 = vmatpush2.msra.mxu0 0.0
      %3397 = vmatprep.subr.mxu0 0.0
      %3398 = vmatpush2.msra.mxu0 0.0
      %3399 = vmatprep.subr.mxu0 0.0
      %3400 = vmatpush2.msra.mxu0 0.0
      %3401 = vmatprep.subr.mxu0 0.0
      %3402 = vmatpush2.msra.mxu0 0.0
      %3403 = vmatprep.subr.mxu0 0.0
      %3404 = vmatpush2.msra.mxu0 0.0
      %3405 = vmatprep.subr.mxu0 0.0
      %3406 = vmatpush2.msra.mxu0 0.0
      %3407 = vmatprep.subr.mxu0 0.0
      %3408 = vmatpush2.msra.mxu0 0.0
      %3409 = vmatprep.subr.mxu0 0.0
      %3410 = vmatpush2.msra.mxu0 0.0
      %3411 = vmatprep.subr.mxu0 0.0
      %3412 = vmatpush2.msra.mxu0 0.0
      %3413 = vmatprep.subr.mxu0 0.0
      %3414 = vmatpush2.msra.mxu0 0.0
      %3415 = vmatprep.subr.mxu0 0.0
      %3416 = vmatpush2.msra.mxu0 0.0
      %3417 = vmatprep.subr.mxu0 0.0
      %3418 = vmatpush2.msra.mxu0 0.0
      %3419 = vmatprep.subr.mxu0 0.0
      %3420 = vmatpush2.msra.mxu0 0.0
      %3421 = vmatprep.subr.mxu0 0.0
      %3422 = vmatpush2.msra.mxu0 0.0
      %3423 = vmatprep.subr.mxu0 0.0
      %3424 = vmatpush2.msra.mxu0 0.0
      %3425 = vmatprep.subr.mxu0 0.0
      %3426 = vmatpush2.msra.mxu0 0.0
      %3427 = vmatprep.mubr.f32.mxu0 0.0
      %3428 = vmatmul.mubr.f32.gmra.mxu0 %v3265
      %v3429 = vpop.f32.mrf.mxu0
      %v3430 = vadd.f32 0.0, %v3429
      %v3431 = vpop.f32.mrf.mxu0
      %3432 = vmatprep.mubr.f32.mxu0 0.0
      %3433 = vmatmul.mubr.f32.gmra.mxu0 %v3268
      %v3434 = vpop.f32.mrf.mxu0
      %v3435 = vadd.f32 0.0, %v3434
      %v3436 = vpop.f32.mrf.mxu0
      %3437 = vmatprep.mubr.f32.mxu0 0.0
      %3438 = vmatmul.mubr.f32.gmra.mxu0 %v3271
      %v3439 = vpop.f32.mrf.mxu0
      %v3440 = vadd.f32 0.0, %v3439
      %v3441 = vpop.f32.mrf.mxu0
      %3442 = vmatprep.mubr.f32.mxu0 0.0
      %3443 = vmatmul.mubr.f32.gmra.mxu0 %v3274
      %v3444 = vpop.f32.mrf.mxu0
      %v3445 = vadd.f32 0.0, %v3444
      %v3446 = vpop.f32.mrf.mxu0
      %3447 = vmatprep.mubr.f32.mxu0 0.0
      %3448 = vmatmul.mubr.f32.gmra.mxu0 %v3277
      %v3449 = vpop.f32.mrf.mxu0
      %v3450 = vadd.f32 0.0, %v3449
      %v3451 = vpop.f32.mrf.mxu0
      %3452 = vmatprep.mubr.f32.mxu0 0.0
      %3453 = vmatmul.mubr.f32.gmra.mxu0 %v3280
      %v3454 = vpop.f32.mrf.mxu0
      %v3455 = vadd.f32 0.0, %v3454
      %v3456 = vpop.f32.mrf.mxu0
      %3457 = vmatprep.mubr.f32.mxu0 0.0
      %3458 = vmatmul.mubr.f32.gmra.mxu0 %v3283
      %v3459 = vpop.f32.mrf.mxu0
      %v3460 = vadd.f32 0.0, %v3459
      %v3461 = vpop.f32.mrf.mxu0
      %3462 = vmatprep.mubr.f32.mxu0 0.0
      %3463 = vmatmul.mubr.f32.gmra.mxu0 %v3286
      %v3464 = vpop.f32.mrf.mxu0
      %v3465 = vadd.f32 0.0, %v3464
      %v3466 = vpop.f32.mrf.mxu0
      %3467 = vmatprep.mubr.f32.mxu0 0.0
      %3468 = vmatmul.mubr.f32.gmra.mxu0 %v3289
      %v3469 = vpop.f32.mrf.mxu0
      %v3470 = vadd.f32 0.0, %v3469
      %v3471 = vpop.f32.mrf.mxu0
      %3472 = vmatprep.mubr.f32.mxu0 0.0
      %3473 = vmatmul.mubr.f32.gmra.mxu0 %v3292
      %v3474 = vpop.f32.mrf.mxu0
      %v3475 = vadd.f32 0.0, %v3474
      %v3476 = vpop.f32.mrf.mxu0
      %3477 = vmatprep.mubr.f32.mxu0 0.0
      %3478 = vmatmul.mubr.f32.gmra.mxu0 %v3295
      %v3479 = vpop.f32.mrf.mxu0
      %v3480 = vadd.f32 0.0, %v3479
      %v3481 = vpop.f32.mrf.mxu0
      %3482 = vmatprep.mubr.f32.mxu0 0.0
      %3483 = vmatmul.mubr.f32.gmra.mxu0 %v3298
      %v3484 = vpop.f32.mrf.mxu0
      %v3485 = vadd.f32 0.0, %v3484
      %v3486 = vpop.f32.mrf.mxu0
      %3487 = vmatprep.mubr.f32.mxu0 0.0
      %3488 = vmatmul.mubr.f32.gmra.mxu0 %v3301
      %v3489 = vpop.f32.mrf.mxu0
      %v3490 = vadd.f32 0.0, %v3489
      %v3491 = vpop.f32.mrf.mxu0
      %3492 = vmatprep.mubr.f32.mxu0 0.0
      %3493 = vmatmul.mubr.f32.gmra.mxu0 %v3304
      %v3494 = vpop.f32.mrf.mxu0
      %v3495 = vadd.f32 0.0, %v3494
      %v3496 = vpop.f32.mrf.mxu0
      %3497 = vmatprep.mubr.f32.mxu0 0.0
      %3498 = vmatmul.mubr.f32.gmra.mxu0 %v3307
      %v3499 = vpop.f32.mrf.mxu0
      %v3500 = vadd.f32 0.0, %v3499
      %v3501 = vpop.f32.mrf.mxu0
      %3502 = vmatprep.mubr.f32.mxu0 0.0
      %3503 = vmatmul.mubr.f32.gmra.mxu0 %v3310
      %v3504 = vpop.f32.mrf.mxu0
      %v3505 = vadd.f32 0.0, %v3504
      %v3506 = vpop.f32.mrf.mxu0
      %3507 = vmatprep.mubr.f32.mxu0 0.0
      %3508 = vmatmul.mubr.f32.gmra.mxu0 %v3313
      %v3509 = vpop.f32.mrf.mxu0
      %v3510 = vadd.f32 0.0, %v3509
      %v3511 = vpop.f32.mrf.mxu0
      %3512 = vmatprep.mubr.f32.mxu0 0.0
      %3513 = vmatmul.mubr.f32.gmra.mxu0 %v3316
      %v3514 = vpop.f32.mrf.mxu0
      %v3515 = vadd.f32 0.0, %v3514
      %v3516 = vpop.f32.mrf.mxu0
      %3517 = vmatprep.mubr.f32.mxu0 0.0
      %3518 = vmatmul.mubr.f32.gmra.mxu0 %v3319
      %v3519 = vpop.f32.mrf.mxu0
      %v3520 = vadd.f32 0.0, %v3519
      %v3521 = vpop.f32.mrf.mxu0
      %3522 = vmatprep.mubr.f32.mxu0 0.0
      %3523 = vmatmul.mubr.f32.gmra.mxu0 %v3322
      %v3524 = vpop.f32.mrf.mxu0
      %v3525 = vadd.f32 0.0, %v3524
      %v3526 = vpop.f32.mrf.mxu0
      %3527 = vmatprep.mubr.f32.mxu0 0.0
      %3528 = vmatmul.mubr.f32.gmra.mxu0 %v3325
      %v3529 = vpop.f32.mrf.mxu0
      %v3530 = vadd.f32 0.0, %v3529
      %v3531 = vpop.f32.mrf.mxu0
      %3532 = vmatprep.mubr.f32.mxu0 0.0
      %3533 = vmatmul.mubr.f32.gmra.mxu0 %v3328
      %v3534 = vpop.f32.mrf.mxu0
      %v3535 = vadd.f32 0.0, %v3534
      %v3536 = vpop.f32.mrf.mxu0
      %3537 = vmatprep.mubr.f32.mxu0 0.0
      %3538 = vmatmul.mubr.f32.gmra.mxu0 %v3331
      %v3539 = vpop.f32.mrf.mxu0
      %v3540 = vadd.f32 0.0, %v3539
      %v3541 = vpop.f32.mrf.mxu0
      %3542 = vmatprep.mubr.f32.mxu0 0.0
      %3543 = vmatmul.mubr.f32.gmra.mxu0 %v3334
      %v3544 = vpop.f32.mrf.mxu0
      %v3545 = vadd.f32 0.0, %v3544
      %v3546 = vpop.f32.mrf.mxu0
      %3547 = vmatprep.mubr.f32.mxu0 0.0
      %3548 = vmatmul.mubr.f32.gmra.mxu0 %v3337
      %v3549 = vpop.f32.mrf.mxu0
      %v3550 = vadd.f32 0.0, %v3549
      %v3551 = vpop.f32.mrf.mxu0
      %3552 = vmatprep.mubr.f32.mxu0 0.0
      %3553 = vmatmul.mubr.f32.gmra.mxu0 %v3340
      %v3554 = vpop.f32.mrf.mxu0
      %v3555 = vadd.f32 0.0, %v3554
      %v3556 = vpop.f32.mrf.mxu0
      %3557 = vmatprep.mubr.f32.mxu0 0.0
      %3558 = vmatmul.mubr.f32.gmra.mxu0 %v3343
      %v3559 = vpop.f32.mrf.mxu0
      %v3560 = vadd.f32 0.0, %v3559
      %v3561 = vpop.f32.mrf.mxu0
      %3562 = vmatprep.mubr.f32.mxu0 0.0
      %3563 = vmatmul.mubr.f32.gmra.mxu0 %v3346
      %v3564 = vpop.f32.mrf.mxu0
      %v3565 = vadd.f32 0.0, %v3564
      %v3566 = vpop.f32.mrf.mxu0
      %3567 = vmatprep.mubr.f32.mxu0 0.0
      %3568 = vmatmul.mubr.f32.gmra.mxu0 %v3349
      %v3569 = vpop.f32.mrf.mxu0
      %v3570 = vadd.f32 0.0, %v3569
      %v3571 = vpop.f32.mrf.mxu0
      %3572 = vmatprep.mubr.f32.mxu0 0.0
      %3573 = vmatmul.mubr.f32.gmra.mxu0 %v3352
      %v3574 = vpop.f32.mrf.mxu0
      %v3575 = vadd.f32 0.0, %v3574
      %v3576 = vpop.f32.mrf.mxu0
      %3577 = vmatprep.mubr.f32.mxu0 0.0
      %3578 = vmatmul.mubr.f32.gmra.mxu0 %v3355
      %v3579 = vpop.f32.mrf.mxu0
      %v3580 = vadd.f32 0.0, %v3579
      %v3581 = vpop.f32.mrf.mxu0
      %3582 = vmatprep.mubr.f32.mxu0 0.0
      %3583 = vmatmul.mubr.f32.gmra.mxu0 %v3358
      %v3584 = vpop.f32.mrf.mxu0
      %v3585 = vadd.f32 0.0, %v3584
      %v3586 = vpop.f32.mrf.mxu0
      %3587 = vdwg.mxu0
      %v3588 = vadd.f32 %v3198, %v3430
      %v3589 = vadd.f32 %v3199, %v3435
      %v3590 = vadd.f32 %v3200, %v3440
      %v3591 = vadd.f32 %v3201, %v3445
      %v3592 = vadd.f32 %v3202, %v3450
      %v3593 = vadd.f32 %v3203, %v3455
      %v3594 = vadd.f32 %v3204, %v3460
      %v3595 = vadd.f32 %v3205, %v3465
      %v3596 = vadd.f32 %v3206, %v3470
      %v3597 = vadd.f32 %v3207, %v3475
      %v3598 = vadd.f32 %v3208, %v3480
      %v3599 = vadd.f32 %v3209, %v3485
      %v3600 = vadd.f32 %v3210, %v3490
      %v3601 = vadd.f32 %v3211, %v3495
      %v3602 = vadd.f32 %v3212, %v3500
      %v3603 = vadd.f32 %v3213, %v3505
      %v3604 = vadd.f32 %v3214, %v3510
      %v3605 = vadd.f32 %v3215, %v3515
      %v3606 = vadd.f32 %v3216, %v3520
      %v3607 = vadd.f32 %v3217, %v3525
      %v3608 = vadd.f32 %v3218, %v3530
      %v3609 = vadd.f32 %v3219, %v3535
      %v3610 = vadd.f32 %v3220, %v3540
      %v3611 = vadd.f32 %v3221, %v3545
      %v3612 = vadd.f32 %v3222, %v3550
      %v3613 = vadd.f32 %v3223, %v3555
      %v3614 = vadd.f32 %v3224, %v3560
      %v3615 = vadd.f32 %v3225, %v3565
      %v3616 = vadd.f32 %v3226, %v3570
      %v3617 = vadd.f32 %v3227, %v3575
      %v3618 = vadd.f32 %v3228, %v3580
      %v3619 = vadd.f32 %v3229, %v3585
      %v3620 = vld [vmem:[%s2] sm:$0x1]
      %v3622 = vlaneseq
      %v3623 = vshrl.u32 %v3622, 7
      %v3624 = vsub.s32 0, %v3623
      %v3625 = vrot.slane %v3620, %v3624
      %v3627 = vadd.f32 %v3588, %v3625
      %v3628 = vadd.f32 %v3589, %v3625
      %v3629 = vadd.f32 %v3590, %v3625
      %v3630 = vadd.f32 %v3591, %v3625
      %v3631 = vadd.f32 %v3592, %v3625
      %v3632 = vadd.f32 %v3593, %v3625
      %v3633 = vadd.f32 %v3594, %v3625
      %v3634 = vadd.f32 %v3595, %v3625
      %v3635 = vadd.f32 %v3596, %v3625
      %v3636 = vadd.f32 %v3597, %v3625
      %v3637 = vadd.f32 %v3598, %v3625
      %v3638 = vadd.f32 %v3599, %v3625
      %v3639 = vadd.f32 %v3600, %v3625
      %v3640 = vadd.f32 %v3601, %v3625
      %v3641 = vadd.f32 %v3602, %v3625
      %v3642 = vadd.f32 %v3603, %v3625
      %v3643 = vadd.f32 %v3604, %v3625
      %v3644 = vadd.f32 %v3605, %v3625
      %v3645 = vadd.f32 %v3606, %v3625
      %v3646 = vadd.f32 %v3607, %v3625
      %v3647 = vadd.f32 %v3608, %v3625
      %v3648 = vadd.f32 %v3609, %v3625
      %v3649 = vadd.f32 %v3610, %v3625
      %v3650 = vadd.f32 %v3611, %v3625
      %v3651 = vadd.f32 %v3612, %v3625
      %v3652 = vadd.f32 %v3613, %v3625
      %v3653 = vadd.f32 %v3614, %v3625
      %v3654 = vadd.f32 %v3615, %v3625
      %v3655 = vadd.f32 %v3616, %v3625
      %v3656 = vadd.f32 %v3617, %v3625
      %v3657 = vadd.f32 %v3618, %v3625
      %v3658 = vadd.f32 %v3619, %v3625
      %v3659 = vmax.f32 %v3627, 0.0
      %v3660 = vmax.f32 %v3628, 0.0
      %v3661 = vmax.f32 %v3629, 0.0
      %v3662 = vmax.f32 %v3630, 0.0
      %v3663 = vmax.f32 %v3631, 0.0
      %v3664 = vmax.f32 %v3632, 0.0
      %v3665 = vmax.f32 %v3633, 0.0
      %v3666 = vmax.f32 %v3634, 0.0
      %v3667 = vmax.f32 %v3635, 0.0
      %v3668 = vmax.f32 %v3636, 0.0
      %v3669 = vmax.f32 %v3637, 0.0
      %v3670 = vmax.f32 %v3638, 0.0
      %v3671 = vmax.f32 %v3639, 0.0
      %v3672 = vmax.f32 %v3640, 0.0
      %v3673 = vmax.f32 %v3641, 0.0
      %v3674 = vmax.f32 %v3642, 0.0
      %v3675 = vmax.f32 %v3643, 0.0
      %v3676 = vmax.f32 %v3644, 0.0
      %v3677 = vmax.f32 %v3645, 0.0
      %v3678 = vmax.f32 %v3646, 0.0
      %v3679 = vmax.f32 %v3647, 0.0
      %v3680 = vmax.f32 %v3648, 0.0
      %v3681 = vmax.f32 %v3649, 0.0
      %v3682 = vmax.f32 %v3650, 0.0
      %v3683 = vmax.f32 %v3651, 0.0
      %v3684 = vmax.f32 %v3652, 0.0
      %v3685 = vmax.f32 %v3653, 0.0
      %v3686 = vmax.f32 %v3654, 0.0
      %v3687 = vmax.f32 %v3655, 0.0
      %v3688 = vmax.f32 %v3656, 0.0
      %v3689 = vmax.f32 %v3657, 0.0
      %v3690 = vmax.f32 %v3658, 0.0
      %vm3691 = vcmask 64512
      %3692 = vst.msk [vmem:[%s170] sm:$0xff] %vm3691, %v3659
      %3693 = vst.msk [vmem:[%s170 + $0x8] sm:$0xff] %vm3691, %v3660
      %3694 = vst.msk [vmem:[%s170 + $0x10] sm:$0xff] %vm3691, %v3661
      %3695 = vst.msk [vmem:[%s170 + $0x18] sm:$0xff] %vm3691, %v3662
      %3696 = vst.msk [vmem:[%s170 + $0x20] sm:$0xff] %vm3691, %v3663
      %3697 = vst.msk [vmem:[%s170 + $0x28] sm:$0xff] %vm3691, %v3664
      %3698 = vst.msk [vmem:[%s170 + $0x30] sm:$0xff] %vm3691, %v3665
      %3699 = vst.msk [vmem:[%s170 + $0x38] sm:$0xff] %vm3691, %v3666
      %3700 = vst.msk [vmem:[%s170 + $0x40] sm:$0xff] %vm3691, %v3667
      %3701 = vst.msk [vmem:[%s170 + $0x48] sm:$0xff] %vm3691, %v3668
      %3702 = vst.msk [vmem:[%s170 + $0x50] sm:$0xff] %vm3691, %v3669
      %3703 = vst.msk [vmem:[%s170 + $0x58] sm:$0xff] %vm3691, %v3670
      %3704 = vst.msk [vmem:[%s170 + $0x60] sm:$0xff] %vm3691, %v3671
      %3705 = vst.msk [vmem:[%s170 + $0x68] sm:$0xff] %vm3691, %v3672
      %3706 = vst.msk [vmem:[%s170 + $0x70] sm:$0xff] %vm3691, %v3673
      %3707 = vst.msk [vmem:[%s170 + $0x78] sm:$0xff] %vm3691, %v3674
      %3708 = vst.msk [vmem:[%s170 + $0x80] sm:$0xff] %vm3691, %v3675
      %3709 = vst.msk [vmem:[%s170 + $0x88] sm:$0xff] %vm3691, %v3676
      %3710 = vst.msk [vmem:[%s170 + $0x90] sm:$0xff] %vm3691, %v3677
      %3711 = vst.msk [vmem:[%s170 + $0x98] sm:$0xff] %vm3691, %v3678
      %3712 = vst.msk [vmem:[%s170 + $0xa0] sm:$0xff] %vm3691, %v3679
      %3713 = vst.msk [vmem:[%s170 + $0xa8] sm:$0xff] %vm3691, %v3680
      %3714 = vst.msk [vmem:[%s170 + $0xb0] sm:$0xff] %vm3691, %v3681
      %3715 = vst.msk [vmem:[%s170 + $0xb8] sm:$0xff] %vm3691, %v3682
      %3716 = vst.msk [vmem:[%s170 + $0xc0] sm:$0xff] %vm3691, %v3683
      %3717 = vst.msk [vmem:[%s170 + $0xc8] sm:$0xff] %vm3691, %v3684
      %3718 = vst.msk [vmem:[%s170 + $0xd0] sm:$0xff] %vm3691, %v3685
      %3719 = vst.msk [vmem:[%s170 + $0xd8] sm:$0xff] %vm3691, %v3686
      %3720 = vst.msk [vmem:[%s170 + $0xe0] sm:$0xff] %vm3691, %v3687
      %3721 = vst.msk [vmem:[%s170 + $0xe8] sm:$0xff] %vm3691, %v3688
      %3722 = vst.msk [vmem:[%s170 + $0xf0] sm:$0xff] %vm3691, %v3689
      %3723 = vst.msk [vmem:[%s170 + $0xf8] sm:$0xff] %vm3691, %v3690
      %p3724 = scmp.lt.s32.totalorder %s14, 1
      %s3725 = scalar_select %p3724, %s14, 1
      %s3726 = smul.addr %s3725, 32
      %s3727 = smul.addr %s3726, 8
      %s3728 = scalar_lea.vmem %s3, %s3727
      // Predicated region
      $region33: #{tpu_custom_call.1} parent=31 // pred_check
        %p3729 = pneg %p100
      $region34: #{tpu_custom_call.1} parent=31 // pred_check_branch
        %3731 = sbr.rel (%p3729) target = $region36
      $region35: #{tpu_custom_call.1} parent=31 // pred_region
        _
      $region36: #{tpu_custom_call.1} parent=31 // pred_fallthru
        _
    $region32: #{tpu_custom_call.1} parent=5 // pred_fallthru
      _
    %p3732 = scmp.le.s32.totalorder 2, %s9
    // Predicated region
    $region37: #{tpu_custom_call.1} parent=5 // pred_check
      %p3733 = pneg %p3732
    $region38: #{tpu_custom_call.1} parent=5 // pred_check_branch
      %3735 = sbr.rel (%p3733) target = $region40
    $region39: #{tpu_custom_call.1} parent=5 // pred_region
      %s3736 = ssub.s32 %s9, 2
      // Predicated region
      $region41: #{tpu_custom_call.1} parent=39 // pred_check
        %p3737 = pneg %p106
      $region42: #{tpu_custom_call.1} parent=39 // pred_check_branch
        %3739 = sbr.rel (%p3737) target = $region44
      $region43: #{tpu_custom_call.1} parent=39 // pred_region
        %p3740 = scmp.lt.s32.totalorder %s15, 1
        %s3741 = scalar_select %p3740, %s15, 1
        %s3742 = smul.addr %s3741, 32
        %s3743 = smul.addr %s3742, 8
        %s3744 = scalar_lea.vmem %s3, %s3743
      $region44: #{tpu_custom_call.1} parent=39 // pred_fallthru
        _
    $region40: #{tpu_custom_call.1} parent=5 // pred_fallthru
      _
  $region6: #{tpu_custom_call.1} parent=0 // loop_footer
    %s13 = sadd.s32 1, %s9
  $region7: #{tpu_custom_call.1} parent=0 // loop_footer_branch
    %8 = sbr.rel target = $region3
  $region8: #{tpu_custom_call.1} parent=0 // loop_exit
    _

</llo_original>
